<compile_context>
chip_gen: v5e
topology: v5e:2x2
jax: 0.10.0
libtpu: 0.0.40
codegen_flags: <defaults>
</compile_context>

<pallas_src>
import jax
import jax.numpy as jnp
from jax.experimental import pallas as pl
from jax.experimental.pallas import tpu as pltpu


def _generator_mlp_kernel(x_ref,    # (TB, D_IN)     input rows
                          w1_ref,   # (D_IN, TH)     first-layer weight tile
                          b1_ref,   # (1, TH)        first-layer bias tile
                          w2_ref,   # (TH, D_OUT)    second-layer weight tile
                          b2_ref,   # (1, D_OUT)     second-layer bias
                          o_ref,    # (TB, D_OUT)    output rows
                          acc_ref): # (TB, D_OUT)    f32 accumulator (VMEM scratch)
    h = pl.program_id(1)

    @pl.when(h == 0)
    def _():
        acc_ref[...] = jnp.zeros_like(acc_ref)

    # Layer 1 partial: (TB, D_IN) @ (D_IN, TH) + b1, then ReLU.  Stays in VMEM.
    hidden = jnp.dot(x_ref[...], w1_ref[...], preferred_element_type=jnp.float32)
    hidden = jnp.maximum(hidden + b1_ref[...], 0.0)

    # Layer 2: accumulate (TB, TH) @ (TH, D_OUT) over the hidden (reduction) axis.
    acc_ref[...] += jnp.dot(hidden.astype(w2_ref.dtype), w2_ref[...],
                            preferred_element_type=jnp.float32)

    @pl.when(h == pl.num_programs(1) - 1)
    def _():
        o_ref[...] = (acc_ref[...] + b2_ref[...]).astype(o_ref.dtype)


def generator_forward(x, w1, b1, w2, b2, *, tb=None, th=1024):
    """x: (B, D_IN); w1: (D_IN, H); b1: (H,); w2: (H, D_OUT); b2: (D_OUT,)."""
    B, d_in = x.shape
    d_in2, H = w1.shape
    H2, d_out = w2.shape
    assert d_in == d_in2 and H == H2 and b1.shape == (H,) and b2.shape == (d_out,)

    # Batch tile: big enough to amortize grid-step overhead, multiple of 8
    # (sublane granularity), capped at 128 (one MXU pass worth of rows).
    if tb is None:
        tb = 128 if B >= 128 else max(8, ((B + 7) // 8) * 8)
    th = min(th, H)
    assert H % th == 0, "hidden dim must be divisible by the hidden tile"

    b_pad = pl.cdiv(B, tb) * tb
    if b_pad != B:
        x = jnp.pad(x, ((0, b_pad - B), (0, 0)))

    b1_2d = b1.reshape(1, H)
    b2_2d = b2.reshape(1, d_out)

    grid = (b_pad // tb, H // th)

    bytes_accessed = (
        x.size * x.dtype.itemsize
        + grid[0] * (w1.size + w2.size) * w1.dtype.itemsize   # weights re-read per batch tile
        + (b1.size + b2.size) * b1.dtype.itemsize
        + b_pad * d_out * x.dtype.itemsize
    )
    cost = pl.CostEstimate(
        flops=2 * b_pad * (d_in * H + H * d_out),
        transcendentals=0,
        bytes_accessed=bytes_accessed,
    )

    out = pl.pallas_call(
        _generator_mlp_kernel,
        out_shape=jax.ShapeDtypeStruct((b_pad, d_out), x.dtype),
        grid_spec=pltpu.PrefetchScalarGridSpec(
            num_scalar_prefetch=0,
            grid=grid,
            in_specs=[
                pl.BlockSpec((tb, d_in), lambda i, h: (i, 0)),    # x rows (h-invariant)
                pl.BlockSpec((d_in, th), lambda i, h: (0, h)),    # W1 column tile
                pl.BlockSpec((1, th), lambda i, h: (0, h)),       # b1 tile
                pl.BlockSpec((th, d_out), lambda i, h: (h, 0)),   # W2 row tile
                pl.BlockSpec((1, d_out), lambda i, h: (0, 0)),    # b2 (resident)
            ],
            out_specs=pl.BlockSpec((tb, d_out), lambda i, h: (i, 0)),
            scratch_shapes=[pltpu.VMEM((tb, d_out), jnp.float32)],
        ),
        compiler_params=pltpu.CompilerParams(
            # batch axis is embarrassingly parallel (v7x: sharded across 2 TCs);
            # hidden axis carries the accumulator -> arbitrary.
            dimension_semantics=("parallel", "arbitrary"),
        ),
        cost_estimate=cost,
    )(x, w1, b1_2d, w2, b2_2d)

    return out[:B]


def reference_forward(x, w1, b1, w2, b2):
    h = jnp.maximum(
        jnp.dot(x, w1, precision=jax.lax.Precision.HIGHEST) + b1, 0.0)
    return jnp.dot(h, w2, precision=jax.lax.Precision.HIGHEST) + b2


if __name__ == "__main__":
    # Layer sizes are fixed by the module (512 -> 4096 -> 512); small batch.
    D_IN, HIDDEN, D_OUT = 512, 4096, 512
    B = 8

    key = jax.random.PRNGKey(0)
    k_x, k_w1, k_w2, k_b1, k_b2 = jax.random.split(key, 5)

    # weights_init: weight ~ N(0, 0.02), bias -> 0.  We use tiny nonzero biases
    # here purely so the bias-add path of the kernel is exercised by the check.
    w1 = (0.02 * jax.random.normal(k_w1, (D_IN, HIDDEN))).astype(jnp.float32)
    w2 = (0.02 * jax.random.normal(k_w2, (HIDDEN, D_OUT))).astype(jnp.float32)
    b1 = (0.01 * jax.random.normal(k_b1, (HIDDEN,))).astype(jnp.float32)
    b2 = (0.01 * jax.random.normal(k_b2, (D_OUT,))).astype(jnp.float32)

    x = jax.random.normal(k_x, (B, D_IN), dtype=jnp.float32)

    out = generator_forward(x, w1, b1, w2, b2)
    out = jax.block_until_ready(out)

    expected = reference_forward(x, w1, b1, w2, b2)
    assert out.shape == (B, D_OUT), out.shape
    assert jnp.allclose(out, expected, atol=1e-3, rtol=1e-3), \
        float(jnp.max(jnp.abs(out - expected)))

    print("KERNEL_OK")
</pallas_src>

<mosaic_0001>
module attributes {stable_mosaic.version = 11 : i64} {
  func.func @_generator_mlp_kernel(%arg0: i32, %arg1: i32, %arg2: memref<8x512xf32, #tpu.memory_space<vmem>>, %arg3: memref<512x1024xf32, #tpu.memory_space<vmem>>, %arg4: memref<1x1024xf32, #tpu.memory_space<vmem>>, %arg5: memref<1024x512xf32, #tpu.memory_space<vmem>>, %arg6: memref<1x512xf32, #tpu.memory_space<vmem>>, %arg7: memref<8x512xf32, #tpu.memory_space<vmem>>, %arg8: memref<8x512xf32, #tpu.memory_space<vmem>>) attributes {dimension_semantics = [#tpu.dimension_semantics<parallel>, #tpu.dimension_semantics<arbitrary>], iteration_bounds = array<i64: 1, 4>, scalar_prefetch = 0 : i64, scratch_operands = 1 : i64, tpu.core_type = #tpu.core_type<tc>, window_params = [{transform_indices = @transform_0, window_bounds = array<i64: 8, 512>}, {transform_indices = @transform_1, window_bounds = array<i64: 512, 1024>}, {transform_indices = @transform_2, window_bounds = array<i64: 1, 1024>}, {transform_indices = @transform_3, window_bounds = array<i64: 1024, 512>}, {pipeline_mode = #tpu.pipeline_mode<synchronous>, transform_indices = @transform_4, window_bounds = array<i64: 1, 512>}, {transform_indices = @transform_5, window_bounds = array<i64: 8, 512>}]} {
    %c0_i32 = arith.constant 0 : i32
    %0 = arith.cmpi eq, %arg1, %c0_i32 : i32
    %1 = arith.extui %0 : i1 to i32
    %c0_i32_0 = arith.constant 0 : i32
    %2 = arith.cmpi ne, %1, %c0_i32_0 : i32
    scf.if %2 {
      %cst_15 = arith.constant 0.000000e+00 : f32
      %19 = vector.broadcast %cst_15 : f32 to vector<8x512xf32>
      %c0_16 = arith.constant 0 : index
      %c0_17 = arith.constant 0 : index
      %20 = vector.load %arg8[%c0_16, %c0_17] : memref<8x512xf32, #tpu.memory_space<vmem>>, vector<8x512xf32>
      tpu.vector_store %arg8[%c0_16, %c0_17], %19 {strides = array<i32>} : memref<8x512xf32, #tpu.memory_space<vmem>>, vector<8x512xf32>,
    } else {
    }
    %c0 = arith.constant 0 : index
    %c0_1 = arith.constant 0 : index
    %3 = vector.load %arg2[%c0, %c0_1] : memref<8x512xf32, #tpu.memory_space<vmem>>, vector<8x512xf32>
    %c0_2 = arith.constant 0 : index
    %c0_3 = arith.constant 0 : index
    %4 = vector.load %arg3[%c0_2, %c0_3] : memref<512x1024xf32, #tpu.memory_space<vmem>>, vector<512x1024xf32>
    %cst = arith.constant dense<0.000000e+00> : vector<8x1024xf32>
    %5 = tpu.matmul %3, %4, %cst {dimension_numbers = #tpu.dot_dimension_numbers<[1], [0], [0], [1], [0, 0, 1, 1], [], []>} : vector<8x512xf32>, vector<512x1024xf32>, vector<8x1024xf32> -> vector<8x1024xf32>
    %c0_4 = arith.constant 0 : index
    %c0_5 = arith.constant 0 : index
    %6 = vector.load %arg4[%c0_4, %c0_5] : memref<1x1024xf32, #tpu.memory_space<vmem>>, vector<1x1024xf32>
    %7 = vector.broadcast %6 : vector<1x1024xf32> to vector<8x1024xf32>
    %8 = arith.addf %5, %7 : vector<8x1024xf32>
    %cst_6 = arith.constant 0.000000e+00 : f32
    %9 = vector.broadcast %cst_6 : f32 to vector<8x1024xf32>
    %10 = arith.maximumf %8, %9 : vector<8x1024xf32>
    %c0_7 = arith.constant 0 : index
    %c0_8 = arith.constant 0 : index
    %11 = vector.load %arg8[%c0_7, %c0_8] : memref<8x512xf32, #tpu.memory_space<vmem>>, vector<8x512xf32>
    %c0_9 = arith.constant 0 : index
    %c0_10 = arith.constant 0 : index
    %12 = vector.load %arg5[%c0_9, %c0_10] : memref<1024x512xf32, #tpu.memory_space<vmem>>, vector<1024x512xf32>
    %cst_11 = arith.constant dense<0.000000e+00> : vector<8x512xf32>
    %13 = tpu.matmul %10, %12, %cst_11 {dimension_numbers = #tpu.dot_dimension_numbers<[1], [0], [0], [1], [0, 0, 1, 1], [], []>} : vector<8x1024xf32>, vector<1024x512xf32>, vector<8x512xf32> -> vector<8x512xf32>
    %14 = arith.addf %11, %13 : vector<8x512xf32>
    %c0_12 = arith.constant 0 : index
    %c0_13 = arith.constant 0 : index
    %15 = vector.load %arg8[%c0_12, %c0_13] : memref<8x512xf32, #tpu.memory_space<vmem>>, vector<8x512xf32>
    tpu.vector_store %arg8[%c0_12, %c0_13], %14 {strides = array<i32>} : memref<8x512xf32, #tpu.memory_space<vmem>>, vector<8x512xf32>,
    %c3_i32 = arith.constant 3 : i32
    %16 = arith.cmpi eq, %arg1, %c3_i32 : i32
    %17 = arith.extui %16 : i1 to i32
    %c0_i32_14 = arith.constant 0 : i32
    %18 = arith.cmpi ne, %17, %c0_i32_14 : i32
    scf.if %18 {
      %c0_15 = arith.constant 0 : index
      %c0_16 = arith.constant 0 : index
      %19 = vector.load %arg8[%c0_15, %c0_16] : memref<8x512xf32, #tpu.memory_space<vmem>>, vector<8x512xf32>
      %c0_17 = arith.constant 0 : index
      %c0_18 = arith.constant 0 : index
      %20 = vector.load %arg6[%c0_17, %c0_18] : memref<1x512xf32, #tpu.memory_space<vmem>>, vector<1x512xf32>
      %21 = vector.broadcast %20 : vector<1x512xf32> to vector<8x512xf32>
      %22 = arith.addf %19, %21 : vector<8x512xf32>
      %c0_19 = arith.constant 0 : index
      %c0_20 = arith.constant 0 : index
      %23 = vector.load %arg7[%c0_19, %c0_20] : memref<8x512xf32, #tpu.memory_space<vmem>>, vector<8x512xf32>
      tpu.vector_store %arg7[%c0_19, %c0_20], %22 {strides = array<i32>} : memref<8x512xf32, #tpu.memory_space<vmem>>, vector<8x512xf32>,
    } else {
    }
    return
  }
  func.func @transform_0(%arg0: i32, %arg1: i32) -> (i32, i32) {
    %c0_i32 = arith.constant 0 : i32
    %c0_i32_0 = arith.constant 0 : i32
    return %arg0, %c0_i32 : i32, i32
  }
  func.func @transform_1(%arg0: i32, %arg1: i32) -> (i32, i32) {
    %c0_i32 = arith.constant 0 : i32
    %c0_i32_0 = arith.constant 0 : i32
    return %c0_i32, %arg1 : i32, i32
  }
  func.func @transform_2(%arg0: i32, %arg1: i32) -> (i32, i32) {
    %c0_i32 = arith.constant 0 : i32
    %c0_i32_0 = arith.constant 0 : i32
    return %c0_i32, %arg1 : i32, i32
  }
  func.func @transform_3(%arg0: i32, %arg1: i32) -> (i32, i32) {
    %c0_i32 = arith.constant 0 : i32
    %c0_i32_0 = arith.constant 0 : i32
    return %arg1, %c0_i32 : i32, i32
  }
  func.func @transform_4(%arg0: i32, %arg1: i32) -> (i32, i32) {
    %c0_i32 = arith.constant 0 : i32
    %c0_i32_0 = arith.constant 0 : i32
    %c0_i32_1 = arith.constant 0 : i32
    return %c0_i32, %c0_i32_0 : i32, i32
  }
  func.func @transform_5(%arg0: i32, %arg1: i32) -> (i32, i32) {
    %c0_i32 = arith.constant 0 : i32
    %c0_i32_0 = arith.constant 0 : i32
    return %arg0, %c0_i32 : i32, i32
  }
}

</mosaic_0001>

<llo_original>
// kernel: tpu_custom_call.1
$region0: #{tpu_custom_call.1}
  #allocation0 [shape = 'u32[]', space=smem, size = 0x4, offset = 0x4, fixed_abs, tag = 'smem constant byte address 0x4 - core index']
  #allocation1 [shape = 'u32[72,128]{1,0:T(1,128)}', space=vmem, size = 0x9000, scoped, tag = 'internal scratch']
  #allocation2 [shape = 'f32[8,512]{1,0:T(8,128)}', space=vmem, size = 0x4000, scoped, tag = 'scratch operand']
  %s0 = inlined_call_operand.hbm [shape: f32[8,512], index: 0, kind: input, shape index: {}]
  %s1 = inlined_call_operand.hbm [shape: f32[512,4096], index: 1, kind: input, shape index: {}]
  %s2 = inlined_call_operand.hbm [shape: f32[1,4096], index: 2, kind: input, shape index: {}]
  %s3 = inlined_call_operand.hbm [shape: f32[4096,512], index: 3, kind: input, shape index: {}]
  %s4 = inlined_call_operand.hbm [shape: f32[1,512], index: 4, kind: input, shape index: {}]
  %s5 = inlined_call_operand.hbm [shape: f32[8,512], index: 5, kind: output, shape index: {}]
  %s6 = sld [smem:[#allocation0]]
  $region81: #{tpu_custom_call.1} parent=0
    _
  %s8 = ssub.s32 1, %s6
  %s9 = scalar_select 0, %s8, %s6
  $region1: #{tpu_custom_call.1} parent=0
    #allocation3 [shape = 'u8[16384]{0}', space=vmem, size = 0x4000, scoped, tag = 'input window, operand 0, single buffered']
    #allocation4 [shape = 's32[2]{0}', space=sflag, size = 0x8, scoped, tag = 'scoped memory for tpu_custom_call.1']
    #allocation5 [shape = 's32[2]{0}', space=sflag, size = 0x8, scoped, tag = 'scoped memory for tpu_custom_call.1']
    #allocation6 [shape = 'u8[4194304]{0}', space=vmem, size = 0x400000, scoped, tag = 'input window, operand 1']
    #allocation7 [shape = 's32[2]{0}', space=sflag, size = 0x8, scoped, tag = 'scoped memory for tpu_custom_call.1']
    #allocation8 [shape = 'u8[8192]{0}', space=vmem, size = 0x2000, scoped, tag = 'input window, operand 2']
    #allocation9 [shape = 'u8[4194304]{0}', space=vmem, size = 0x400000, scoped, tag = 'input window, operand 3']
    #allocation10 [shape = 's32[2]{0}', space=sflag, size = 0x8, scoped, tag = 'scoped memory for tpu_custom_call.1']
    #allocation11 [shape = 'u8[2048]{0}', space=vmem, size = 0x800, scoped, tag = 'input window, operand 4, single buffered']
    #allocation12 [shape = 'u8[16384]{0}', space=vmem, size = 0x4000, scoped, tag = 'output window, operand 0, single buffered']
    %10 = vsyncpa [#allocation4], 0
    %11 = vsyncpa [#allocation7], 0
    %s12 = scalar_lea.sflag [#allocation7], 1
    %13 = vsyncpa %s12, 0
    %14 = vsyncpa [#allocation10], 0
    %s15 = scalar_lea.sflag [#allocation10], 1
    %16 = vsyncpa %s15, 0
    %17 = vsyncpa [#allocation5], 0
    loop: start=0, step=1, limit=6
    $region2: #{tpu_custom_call.1} parent=1 // loop_pre_header
      _
    $region3: #{tpu_custom_call.1} parent=1 // loop_header
      %s19 = sphi 0, %s23
      %p20 = scmp.ge.s32.totalorder %s19, 6
      %s26 = sphi 0, %s38
      %s27 = sphi 0, %s34
      %s28 = sphi 0, %s26
      %s29 = sphi 0, %s27
      %s30 = sphi 0, %s28
      %s31 = sphi 0, %s29
      %s41 = sphi 0, %s43
      %s44 = sphi 0, %s41
      %s45 = sphi 0, %s44
      %s61 = sphi 0, %s45
      %s67 = sphi 0, %s69
      %s70 = sphi 0, %s67
      %s71 = sphi 0, %s70
      %s87 = sphi 0, %s71
      %s93 = sphi 0, %s95
      %s96 = sphi 0, %s93
      %s97 = sphi 0, %s96
      %s113 = sphi 0, %s97
      %s119 = sphi 0, %s121
      %s122 = sphi 0, %s119
      %s123 = sphi 0, %s122
      %s139 = sphi 0, %s123
      %s143 = sphi 0, %s143
      %s145 = sphi 0, %s143
      %s146 = sphi 0, %s145
      %s160 = sphi 0, %s146
      %s166 = sphi 0, %s168
      %s169 = sphi 0, %s166
      %s170 = sphi 0, %s169
      %s186 = sphi 0, %s170
    $region4: #{tpu_custom_call.1} parent=1 // loop_header_branch
      %22 = sbr.rel (%p20) target = $region8
    $region5: #{tpu_custom_call.1} parent=1 // loop_body
      %s24 = ssub.s32 %s19, 1
      %s25 = ssub.s32 %s19, 2
      %s32 = sadd.s32 1, %s27
      %p33 = scmp.ge.s32.totalorder %s32, 4
      %s34 = scalar_select %p33, 0, %s32
      %s35 = sadd.s32 1, %s26
      %s36 = scalar_select %p33, %s35, %s26
      %p37 = scmp.ge.s32.totalorder %s36, 1
      %s38 = scalar_select %p37, 0, %s36
      %s39 = ssub.s32 %s26, %s38
      %p40 = scmp.eq.s32.totalorder %s39, 0
      %s42 = sadd.s32 %s41, 1
      %s43 = scalar_select %p40, %s41, %s42
      %p46 = pneg %p40
      %p47 = scmp.eq.s32.totalorder %s19, 3
      %p48 = por %p46, %p47
      %p49 = scmp.ne.s32.totalorder %s41, %s44
      %p50 = scmp.eq.s32.totalorder %s19, 0
      %p51 = por %p49, %p50
      %p52 = scmp.ne.s32.totalorder %s41, %s44
      %p53 = scmp.eq.s32.totalorder %s24, 3
      %p54 = por %p52, %p53
      %p55 = scmp.ne.s32.totalorder %s44, %s45
      %p56 = scmp.eq.s32.totalorder %s24, 0
      %p57 = por %p55, %p56
      %p58 = scmp.ne.s32.totalorder %s44, %s45
      %p59 = scmp.eq.s32.totalorder %s25, 3
      %p60 = por %p58, %p59
      %p62 = scmp.ne.s32.totalorder %s45, %s61
      %p63 = scmp.eq.s32.totalorder %s25, 0
      %p64 = por %p62, %p63
      %s65 = ssub.s32 %s27, %s34
      %p66 = scmp.eq.s32.totalorder %s65, 0
      %s68 = sadd.s32 %s67, 1
      %s69 = scalar_select %p66, %s67, %s68
      %p72 = pneg %p66
      %p73 = scmp.eq.s32.totalorder %s19, 3
      %p74 = por %p72, %p73
      %p75 = scmp.ne.s32.totalorder %s67, %s70
      %p76 = scmp.eq.s32.totalorder %s19, 0
      %p77 = por %p75, %p76
      %p78 = scmp.ne.s32.totalorder %s67, %s70
      %p79 = scmp.eq.s32.totalorder %s24, 3
      %p80 = por %p78, %p79
      %p81 = scmp.ne.s32.totalorder %s70, %s71
      %p82 = scmp.eq.s32.totalorder %s24, 0
      %p83 = por %p81, %p82
      %p84 = scmp.ne.s32.totalorder %s70, %s71
      %p85 = scmp.eq.s32.totalorder %s25, 3
      %p86 = por %p84, %p85
      %p88 = scmp.ne.s32.totalorder %s71, %s87
      %p89 = scmp.eq.s32.totalorder %s25, 0
      %p90 = por %p88, %p89
      %s91 = ssub.s32 %s27, %s34
      %p92 = scmp.eq.s32.totalorder %s91, 0
      %s94 = sadd.s32 %s93, 1
      %s95 = scalar_select %p92, %s93, %s94
      %p98 = pneg %p92
      %p99 = scmp.eq.s32.totalorder %s19, 3
      %p100 = por %p98, %p99
      %p101 = scmp.ne.s32.totalorder %s93, %s96
      %p102 = scmp.eq.s32.totalorder %s19, 0
      %p103 = por %p101, %p102
      %p104 = scmp.ne.s32.totalorder %s93, %s96
      %p105 = scmp.eq.s32.totalorder %s24, 3
      %p106 = por %p104, %p105
      %p107 = scmp.ne.s32.totalorder %s96, %s97
      %p108 = scmp.eq.s32.totalorder %s24, 0
      %p109 = por %p107, %p108
      %p110 = scmp.ne.s32.totalorder %s96, %s97
      %p111 = scmp.eq.s32.totalorder %s25, 3
      %p112 = por %p110, %p111
      %p114 = scmp.ne.s32.totalorder %s97, %s113
      %p115 = scmp.eq.s32.totalorder %s25, 0
      %p116 = por %p114, %p115
      %s117 = ssub.s32 %s27, %s34
      %p118 = scmp.eq.s32.totalorder %s117, 0
      %s120 = sadd.s32 %s119, 1
      %s121 = scalar_select %p118, %s119, %s120
      %p124 = pneg %p118
      %p125 = scmp.eq.s32.totalorder %s19, 3
      %p126 = por %p124, %p125
      %p127 = scmp.ne.s32.totalorder %s119, %s122
      %p128 = scmp.eq.s32.totalorder %s19, 0
      %p129 = por %p127, %p128
      %p130 = scmp.ne.s32.totalorder %s119, %s122
      %p131 = scmp.eq.s32.totalorder %s24, 3
      %p132 = por %p130, %p131
      %p133 = scmp.ne.s32.totalorder %s122, %s123
      %p134 = scmp.eq.s32.totalorder %s24, 0
      %p135 = por %p133, %p134
      %p136 = scmp.ne.s32.totalorder %s122, %s123
      %p137 = scmp.eq.s32.totalorder %s25, 3
      %p138 = por %p136, %p137
      %p140 = scmp.ne.s32.totalorder %s123, %s139
      %p141 = scmp.eq.s32.totalorder %s25, 0
      %p142 = por %p140, %p141
      %s144 = sadd.s32 %s143, 1
      %p147 = scmp.eq.s32.totalorder %s19, 3
      %p148 = scmp.ne.s32.totalorder %s143, %s145
      %p149 = scmp.eq.s32.totalorder %s19, 0
      %p150 = por %p148, %p149
      %p151 = scmp.ne.s32.totalorder %s143, %s145
      %p152 = scmp.eq.s32.totalorder %s24, 3
      %p153 = por %p151, %p152
      %p154 = scmp.ne.s32.totalorder %s145, %s146
      %p155 = scmp.eq.s32.totalorder %s24, 0
      %p156 = por %p154, %p155
      %p157 = scmp.ne.s32.totalorder %s145, %s146
      %p158 = scmp.eq.s32.totalorder %s25, 3
      %p159 = por %p157, %p158
      %p161 = scmp.ne.s32.totalorder %s146, %s160
      %p162 = scmp.eq.s32.totalorder %s25, 0
      %p163 = por %p161, %p162
      %s164 = ssub.s32 %s26, %s38
      %p165 = scmp.eq.s32.totalorder %s164, 0
      %s167 = sadd.s32 %s166, 1
      %s168 = scalar_select %p165, %s166, %s167
      %p171 = pneg %p165
      %p172 = scmp.eq.s32.totalorder %s19, 3
      %p173 = por %p171, %p172
      %p174 = scmp.ne.s32.totalorder %s166, %s169
      %p175 = scmp.eq.s32.totalorder %s19, 0
      %p176 = por %p174, %p175
      %p177 = scmp.ne.s32.totalorder %s166, %s169
      %p178 = scmp.eq.s32.totalorder %s24, 3
      %p179 = por %p177, %p178
      %p180 = scmp.ne.s32.totalorder %s169, %s170
      %p181 = scmp.eq.s32.totalorder %s24, 0
      %p182 = por %p180, %p181
      %p183 = scmp.ne.s32.totalorder %s169, %s170
      %p184 = scmp.eq.s32.totalorder %s25, 3
      %p185 = por %p183, %p184
      %p187 = scmp.ne.s32.totalorder %s170, %s186
      %p188 = scmp.eq.s32.totalorder %s25, 0
      %p189 = por %p187, %p188
      %p190 = scmp.le.s32.totalorder 1, %s19
      %p191 = scmp.lt.s32.totalorder %s19, 5
      %p192 = pnand %p190, %p191
      %p193 = pneg %p192
      // Predicated region
      $region9: #{tpu_custom_call.1} parent=5 // pred_check
        _
      $region10: #{tpu_custom_call.1} parent=5 // pred_check_branch
        %195 = sbr.rel (%p192) target = $region12
      $region11: #{tpu_custom_call.1} parent=5 // pred_region
        %s196 = ssub.s32 %s19, 1
        // Predicated region
        $region13: #{tpu_custom_call.1} parent=11 // pred_check
          %p197 = pneg %p57
        $region14: #{tpu_custom_call.1} parent=11 // pred_check_branch
          %199 = sbr.rel (%p197) target = $region16
        $region15: #{tpu_custom_call.1} parent=11 // pred_region
          %201 = vsyncadd [#allocation4], 0
          %s202 = smul.addr %s28, 4
          %s203 = smul.addr %s202, 8
          %s204 = scalar_lea.hbm %s0, %s203
          %s206 = sshll.u32 %s204, 4
          %s207 = int_to_ptr.hbm [resolvable:$true] %s206
          %s208 = sshll.u32 [#allocation3], 4
          %s209 = int_to_ptr.vmem [resolvable:$true] %s208
          %211 = dma.hbm_to_vmem [thread:$0]  %s207, 512, %s209, [#allocation4]
        $region16: #{tpu_custom_call.1} parent=11 // pred_fallthru
          _
        // Predicated region
        $region17: #{tpu_custom_call.1} parent=11 // pred_check
          %p212 = pneg %p156
        $region18: #{tpu_custom_call.1} parent=11 // pred_check_branch
          %214 = sbr.rel (%p212) target = $region20
        $region19: #{tpu_custom_call.1} parent=11 // pred_region
          %216 = vsyncadd [#allocation10], 0
          %s218 = sshll.u32 %s4, 4
          %s219 = int_to_ptr.hbm [resolvable:$true] %s218
          %s220 = sshll.u32 [#allocation11], 4
          %s221 = int_to_ptr.vmem [resolvable:$true] %s220
          %223 = dma.hbm_to_vmem [thread:$0]  %s219, 64, %s221, [#allocation10]
        $region20: #{tpu_custom_call.1} parent=11 // pred_fallthru
          _
      $region12: #{tpu_custom_call.1} parent=5 // pred_fallthru
        _
      %p224 = scmp.lt.s32.totalorder %s19, 4
      // Predicated region
      $region21: #{tpu_custom_call.1} parent=5 // pred_check
        %p225 = pneg %p224
      $region22: #{tpu_custom_call.1} parent=5 // pred_check_branch
        %227 = sbr.rel (%p225) target = $region24
      $region23: #{tpu_custom_call.1} parent=5 // pred_region
        // Predicated region
        $region25: #{tpu_custom_call.1} parent=23 // pred_check
          %p228 = pneg %p77
        $region26: #{tpu_custom_call.1} parent=23 // pred_check_branch
          %230 = sbr.rel (%p228) target = $region28
        $region27: #{tpu_custom_call.1} parent=23 // pred_region
          %s231 = sand.u32 %s19, 1
          %s232 = scalar_lea.sflag [#allocation7], %s231
          %s233 = sand.u32 %s67, 1
          %s234 = smul.addr %s233, 4096
          %s235 = scalar_lea.vmem [#allocation6], %s234
          %s236 = smul.u32 8, %s27
          %238 = vsyncadd %s232, 0
          %s239 = smul.addr %s236, 8
          %s240 = scalar_lea.hbm %s1, %s239
          %s241 = sshll.u32 %s240, 4
          %s242 = int_to_ptr.hbm [resolvable:$true] %s241
          %s243 = sshll.u32 %s235, 4
          %s244 = int_to_ptr.vmem [resolvable:$true] %s243
          %249 = dma.hbm_to_vmem [thread:$0]  %s242, 65536, %s244, %s232, 4096, 1024, 64
        $region28: #{tpu_custom_call.1} parent=23 // pred_fallthru
          _
        // Predicated region
        $region29: #{tpu_custom_call.1} parent=23 // pred_check
          %p250 = pneg %p103
        $region30: #{tpu_custom_call.1} parent=23 // pred_check_branch
          %252 = sbr.rel (%p250) target = $region32
        $region31: #{tpu_custom_call.1} parent=23 // pred_region
          %s253 = sand.u32 %s19, 1
          %s254 = scalar_lea.sflag [#allocation7], %s253
          %s255 = sand.u32 %s93, 1
          %s256 = smul.addr %s255, 8
          %s257 = scalar_lea.vmem [#allocation8], %s256
          %s258 = smul.u32 8, %s27
          %260 = vsyncadd %s254, 0
          %s261 = scalar_lea.hbm %s2, %s258
          %s263 = sshll.u32 %s261, 4
          %s264 = int_to_ptr.hbm [resolvable:$true] %s263
          %s265 = sshll.u32 %s257, 4
          %s266 = int_to_ptr.vmem [resolvable:$true] %s265
          %268 = dma.hbm_to_vmem [thread:$0]  %s264, 128, %s266, %s254
        $region32: #{tpu_custom_call.1} parent=23 // pred_fallthru
          _
        // Predicated region
        $region33: #{tpu_custom_call.1} parent=23 // pred_check
          %p269 = pneg %p129
        $region34: #{tpu_custom_call.1} parent=23 // pred_check_branch
          %271 = sbr.rel (%p269) target = $region36
        $region35: #{tpu_custom_call.1} parent=23 // pred_region
          %s272 = sand.u32 %s19, 1
          %s273 = scalar_lea.sflag [#allocation10], %s272
          %s274 = sand.u32 %s119, 1
          %s275 = smul.addr %s274, 4096
          %s276 = scalar_lea.vmem [#allocation9], %s275
          %s277 = smul.u32 128, %s27
          %279 = vsyncadd %s273, 0
          %s280 = smul.addr %s277, 4
          %s281 = smul.addr %s280, 8
          %s282 = scalar_lea.hbm %s3, %s281
          %s283 = sshll.u32 %s282, 4
          %s284 = int_to_ptr.hbm [resolvable:$true] %s283
          %s285 = sshll.u32 %s276, 4
          %s286 = int_to_ptr.vmem [resolvable:$true] %s285
          %291 = dma.hbm_to_vmem [thread:$0]  %s284, 65536, %s286, %s273, 512, 512, 32
        $region36: #{tpu_custom_call.1} parent=23 // pred_fallthru
          _
      $region24: #{tpu_custom_call.1} parent=5 // pred_fallthru
        _
      %p292 = scmp.le.s32.totalorder 1, %s19
      %p293 = scmp.lt.s32.totalorder %s19, 5
      %p294 = pnand %p292, %p293
      %p295 = pneg %p294
      // Predicated region
      $region37: #{tpu_custom_call.1} parent=5 // pred_check
        _
      $region38: #{tpu_custom_call.1} parent=5 // pred_check_branch
        %297 = sbr.rel (%p294) target = $region40
      $region39: #{tpu_custom_call.1} parent=5 // pred_region
        %s298 = ssub.s32 %s19, 1
        // Predicated region
        $region41: #{tpu_custom_call.1} parent=39 // pred_check
          %p299 = pneg %p57
        $region42: #{tpu_custom_call.1} parent=39 // pred_check_branch
          %301 = sbr.rel (%p299) target = $region44
        $region43: #{tpu_custom_call.1} parent=39 // pred_region
          %303 = dma.done [#allocation4], 512
        $region44: #{tpu_custom_call.1} parent=39 // pred_fallthru
          _
        %s304 = sand.u32 %s24, 1
        %s305 = scalar_lea.sflag [#allocation7], %s304
        %s306 = sand.u32 %s70, 1
        %s307 = smul.addr %s306, 4096
        %s308 = scalar_lea.vmem [#allocation6], %s307
        // Predicated region
        $region45: #{tpu_custom_call.1} parent=39 // pred_check
          %p309 = pneg %p83
        $region46: #{tpu_custom_call.1} parent=39 // pred_check_branch
          %311 = sbr.rel (%p309) target = $region48
        $region47: #{tpu_custom_call.1} parent=39 // pred_region
          %313 = dma.done %s305, 65536
        $region48: #{tpu_custom_call.1} parent=39 // pred_fallthru
          _
        %s314 = sand.u32 %s24, 1
        %s315 = scalar_lea.sflag [#allocation7], %s314
        %s316 = sand.u32 %s96, 1
        %s317 = smul.addr %s316, 8
        %s318 = scalar_lea.vmem [#allocation8], %s317
        // Predicated region
        $region49: #{tpu_custom_call.1} parent=39 // pred_check
          %p319 = pneg %p109
        $region50: #{tpu_custom_call.1} parent=39 // pred_check_branch
          %321 = sbr.rel (%p319) target = $region52
        $region51: #{tpu_custom_call.1} parent=39 // pred_region
          %323 = dma.done %s315, 128
        $region52: #{tpu_custom_call.1} parent=39 // pred_fallthru
          _
        %s324 = sand.u32 %s24, 1
        %s325 = scalar_lea.sflag [#allocation10], %s324
        %s326 = sand.u32 %s122, 1
        %s327 = smul.addr %s326, 4096
        %s328 = scalar_lea.vmem [#allocation9], %s327
        // Predicated region
        $region53: #{tpu_custom_call.1} parent=39 // pred_check
          %p329 = pneg %p135
        $region54: #{tpu_custom_call.1} parent=39 // pred_check_branch
          %331 = sbr.rel (%p329) target = $region56
        $region55: #{tpu_custom_call.1} parent=39 // pred_region
          %333 = dma.done %s325, 65536
        $region56: #{tpu_custom_call.1} parent=39 // pred_fallthru
          _
        // Predicated region
        $region57: #{tpu_custom_call.1} parent=39 // pred_check
          %p334 = pneg %p156
        $region58: #{tpu_custom_call.1} parent=39 // pred_check_branch
          %336 = sbr.rel (%p334) target = $region60
        $region59: #{tpu_custom_call.1} parent=39 // pred_region
          %338 = dma.done [#allocation10], 64
        $region60: #{tpu_custom_call.1} parent=39 // pred_fallthru
          _
        %p339 = pneg %p57
        %p340 = pneg %p54
        %s341 = sand.u32 %s24, 1
        %s342 = scalar_lea.sflag [#allocation7], %s341
        %s343 = sand.u32 %s70, 1
        %s344 = smul.addr %s343, 4096
        %s345 = scalar_lea.vmem [#allocation6], %s344
        %p346 = pneg %p83
        %p347 = pneg %p80
        %s348 = sand.u32 %s24, 1
        %s349 = scalar_lea.sflag [#allocation7], %s348
        %s350 = sand.u32 %s96, 1
        %s351 = smul.addr %s350, 8
        %s352 = scalar_lea.vmem [#allocation8], %s351
        %p353 = pneg %p109
        %p354 = pneg %p106
        %s355 = sand.u32 %s24, 1
        %s356 = scalar_lea.sflag [#allocation10], %s355
        %s357 = sand.u32 %s122, 1
        %s358 = smul.addr %s357, 4096
        %s359 = scalar_lea.vmem [#allocation9], %s358
        %p360 = pneg %p135
        %p361 = pneg %p132
        %p362 = pneg %p156
        %p363 = pneg %p153
        %p364 = pneg %p182
        %p365 = pneg %p179
        %s366 = smul.u32 8, %s29
        %s367 = smul.u32 8, %s29
        %s368 = smul.u32 128, %s29
        %p369 = scmp.eq.s32.totalorder %s29, 0
        // Predicated region
        $region61: #{tpu_custom_call.1} parent=39 // pred_check
          %p370 = pneg %p369
        $region62: #{tpu_custom_call.1} parent=39 // pred_check_branch
          %372 = sbr.rel (%p370) target = $region64
        $region63: #{tpu_custom_call.1} parent=39 // pred_region
          %373 = vst [vmem:[#allocation2] sm:$0xff] 0.0
          %374 = vst [vmem:[#allocation2 + $0x8] sm:$0xff] 0.0
          %375 = vst [vmem:[#allocation2 + $0x10] sm:$0xff] 0.0
          %376 = vst [vmem:[#allocation2 + $0x18] sm:$0xff] 0.0
        $region64: #{tpu_custom_call.1} parent=39 // pred_fallthru
          _
        %v377 = vld [vmem:[#allocation3] sm:$0xff]
        %v378 = vld [vmem:[#allocation3 + $0x8] sm:$0xff]
        %v379 = vld [vmem:[#allocation3 + $0x10] sm:$0xff]
        %v380 = vld [vmem:[#allocation3 + $0x18] sm:$0xff]
        %v381 = vld [vmem:[%s308] sm:$0xff]
        %v382 = vld [vmem:[%s308 + $0x8] sm:$0xff]
        %v383 = vld [vmem:[%s308 + $0x10] sm:$0xff]
        %v384 = vld [vmem:[%s308 + $0x18] sm:$0xff]
        %v385 = vld [vmem:[%s308 + $0x20] sm:$0xff]
        %v386 = vld [vmem:[%s308 + $0x28] sm:$0xff]
        %v387 = vld [vmem:[%s308 + $0x30] sm:$0xff]
        %v388 = vld [vmem:[%s308 + $0x38] sm:$0xff]
        %v389 = vld [vmem:[%s308 + $0x40] sm:$0xff]
        %v390 = vld [vmem:[%s308 + $0x48] sm:$0xff]
        %v391 = vld [vmem:[%s308 + $0x50] sm:$0xff]
        %v392 = vld [vmem:[%s308 + $0x58] sm:$0xff]
        %v393 = vld [vmem:[%s308 + $0x60] sm:$0xff]
        %v394 = vld [vmem:[%s308 + $0x68] sm:$0xff]
        %v395 = vld [vmem:[%s308 + $0x70] sm:$0xff]
        %v396 = vld [vmem:[%s308 + $0x78] sm:$0xff]
        %v397 = vld [vmem:[%s308 + $0x80] sm:$0xff]
        %v398 = vld [vmem:[%s308 + $0x88] sm:$0xff]
        %v399 = vld [vmem:[%s308 + $0x90] sm:$0xff]
        %v400 = vld [vmem:[%s308 + $0x98] sm:$0xff]
        %v401 = vld [vmem:[%s308 + $0xa0] sm:$0xff]
        %v402 = vld [vmem:[%s308 + $0xa8] sm:$0xff]
        %v403 = vld [vmem:[%s308 + $0xb0] sm:$0xff]
        %v404 = vld [vmem:[%s308 + $0xb8] sm:$0xff]
        %v405 = vld [vmem:[%s308 + $0xc0] sm:$0xff]
        %v406 = vld [vmem:[%s308 + $0xc8] sm:$0xff]
        %v407 = vld [vmem:[%s308 + $0xd0] sm:$0xff]
        %v408 = vld [vmem:[%s308 + $0xd8] sm:$0xff]
        %v409 = vld [vmem:[%s308 + $0xe0] sm:$0xff]
        %v410 = vld [vmem:[%s308 + $0xe8] sm:$0xff]
        %v411 = vld [vmem:[%s308 + $0xf0] sm:$0xff]
        %v412 = vld [vmem:[%s308 + $0xf8] sm:$0xff]
        %v413 = vld [vmem:[%s308 + $0x100] sm:$0xff]
        %v414 = vld [vmem:[%s308 + $0x108] sm:$0xff]
        %v415 = vld [vmem:[%s308 + $0x110] sm:$0xff]
        %v416 = vld [vmem:[%s308 + $0x118] sm:$0xff]
        %v417 = vld [vmem:[%s308 + $0x120] sm:$0xff]
        %v418 = vld [vmem:[%s308 + $0x128] sm:$0xff]
        %v419 = vld [vmem:[%s308 + $0x130] sm:$0xff]
        %v420 = vld [vmem:[%s308 + $0x138] sm:$0xff]
        %v421 = vld [vmem:[%s308 + $0x140] sm:$0xff]
        %v422 = vld [vmem:[%s308 + $0x148] sm:$0xff]
        %v423 = vld [vmem:[%s308 + $0x150] sm:$0xff]
        %v424 = vld [vmem:[%s308 + $0x158] sm:$0xff]
        %v425 = vld [vmem:[%s308 + $0x160] sm:$0xff]
        %v426 = vld [vmem:[%s308 + $0x168] sm:$0xff]
        %v427 = vld [vmem:[%s308 + $0x170] sm:$0xff]
        %v428 = vld [vmem:[%s308 + $0x178] sm:$0xff]
        %v429 = vld [vmem:[%s308 + $0x180] sm:$0xff]
        %v430 = vld [vmem:[%s308 + $0x188] sm:$0xff]
        %v431 = vld [vmem:[%s308 + $0x190] sm:$0xff]
        %v432 = vld [vmem:[%s308 + $0x198] sm:$0xff]
        %v433 = vld [vmem:[%s308 + $0x1a0] sm:$0xff]
        %v434 = vld [vmem:[%s308 + $0x1a8] sm:$0xff]
        %v435 = vld [vmem:[%s308 + $0x1b0] sm:$0xff]
        %v436 = vld [vmem:[%s308 + $0x1b8] sm:$0xff]
        %v437 = vld [vmem:[%s308 + $0x1c0] sm:$0xff]
        %v438 = vld [vmem:[%s308 + $0x1c8] sm:$0xff]
        %v439 = vld [vmem:[%s308 + $0x1d0] sm:$0xff]
        %v440 = vld [vmem:[%s308 + $0x1d8] sm:$0xff]
        %v441 = vld [vmem:[%s308 + $0x1e0] sm:$0xff]
        %v442 = vld [vmem:[%s308 + $0x1e8] sm:$0xff]
        %v443 = vld [vmem:[%s308 + $0x1f0] sm:$0xff]
        %v444 = vld [vmem:[%s308 + $0x1f8] sm:$0xff]
        %v445 = vld [vmem:[%s308 + $0x200] sm:$0xff]
        %v446 = vld [vmem:[%s308 + $0x208] sm:$0xff]
        %v447 = vld [vmem:[%s308 + $0x210] sm:$0xff]
        %v448 = vld [vmem:[%s308 + $0x218] sm:$0xff]
        %v449 = vld [vmem:[%s308 + $0x220] sm:$0xff]
        %v450 = vld [vmem:[%s308 + $0x228] sm:$0xff]
        %v451 = vld [vmem:[%s308 + $0x230] sm:$0xff]
        %v452 = vld [vmem:[%s308 + $0x238] sm:$0xff]
        %v453 = vld [vmem:[%s308 + $0x240] sm:$0xff]
        %v454 = vld [vmem:[%s308 + $0x248] sm:$0xff]
        %v455 = vld [vmem:[%s308 + $0x250] sm:$0xff]
        %v456 = vld [vmem:[%s308 + $0x258] sm:$0xff]
        %v457 = vld [vmem:[%s308 + $0x260] sm:$0xff]
        %v458 = vld [vmem:[%s308 + $0x268] sm:$0xff]
        %v459 = vld [vmem:[%s308 + $0x270] sm:$0xff]
        %v460 = vld [vmem:[%s308 + $0x278] sm:$0xff]
        %v461 = vld [vmem:[%s308 + $0x280] sm:$0xff]
        %v462 = vld [vmem:[%s308 + $0x288] sm:$0xff]
        %v463 = vld [vmem:[%s308 + $0x290] sm:$0xff]
        %v464 = vld [vmem:[%s308 + $0x298] sm:$0xff]
        %v465 = vld [vmem:[%s308 + $0x2a0] sm:$0xff]
        %v466 = vld [vmem:[%s308 + $0x2a8] sm:$0xff]
        %v467 = vld [vmem:[%s308 + $0x2b0] sm:$0xff]
        %v468 = vld [vmem:[%s308 + $0x2b8] sm:$0xff]
        %v469 = vld [vmem:[%s308 + $0x2c0] sm:$0xff]
        %v470 = vld [vmem:[%s308 + $0x2c8] sm:$0xff]
        %v471 = vld [vmem:[%s308 + $0x2d0] sm:$0xff]
        %v472 = vld [vmem:[%s308 + $0x2d8] sm:$0xff]
        %v473 = vld [vmem:[%s308 + $0x2e0] sm:$0xff]
        %v474 = vld [vmem:[%s308 + $0x2e8] sm:$0xff]
        %v475 = vld [vmem:[%s308 + $0x2f0] sm:$0xff]
        %v476 = vld [vmem:[%s308 + $0x2f8] sm:$0xff]
        %v477 = vld [vmem:[%s308 + $0x300] sm:$0xff]
        %v478 = vld [vmem:[%s308 + $0x308] sm:$0xff]
        %v479 = vld [vmem:[%s308 + $0x310] sm:$0xff]
        %v480 = vld [vmem:[%s308 + $0x318] sm:$0xff]
        %v481 = vld [vmem:[%s308 + $0x320] sm:$0xff]
        %v482 = vld [vmem:[%s308 + $0x328] sm:$0xff]
        %v483 = vld [vmem:[%s308 + $0x330] sm:$0xff]
        %v484 = vld [vmem:[%s308 + $0x338] sm:$0xff]
        %v485 = vld [vmem:[%s308 + $0x340] sm:$0xff]
        %v486 = vld [vmem:[%s308 + $0x348] sm:$0xff]
        %v487 = vld [vmem:[%s308 + $0x350] sm:$0xff]
        %v488 = vld [vmem:[%s308 + $0x358] sm:$0xff]
        %v489 = vld [vmem:[%s308 + $0x360] sm:$0xff]
        %v490 = vld [vmem:[%s308 + $0x368] sm:$0xff]
        %v491 = vld [vmem:[%s308 + $0x370] sm:$0xff]
        %v492 = vld [vmem:[%s308 + $0x378] sm:$0xff]
        %v493 = vld [vmem:[%s308 + $0x380] sm:$0xff]
        %v494 = vld [vmem:[%s308 + $0x388] sm:$0xff]
        %v495 = vld [vmem:[%s308 + $0x390] sm:$0xff]
        %v496 = vld [vmem:[%s308 + $0x398] sm:$0xff]
        %v497 = vld [vmem:[%s308 + $0x3a0] sm:$0xff]
        %v498 = vld [vmem:[%s308 + $0x3a8] sm:$0xff]
        %v499 = vld [vmem:[%s308 + $0x3b0] sm:$0xff]
        %v500 = vld [vmem:[%s308 + $0x3b8] sm:$0xff]
        %v501 = vld [vmem:[%s308 + $0x3c0] sm:$0xff]
        %v502 = vld [vmem:[%s308 + $0x3c8] sm:$0xff]
        %v503 = vld [vmem:[%s308 + $0x3d0] sm:$0xff]
        %v504 = vld [vmem:[%s308 + $0x3d8] sm:$0xff]
        %v505 = vld [vmem:[%s308 + $0x3e0] sm:$0xff]
        %v506 = vld [vmem:[%s308 + $0x3e8] sm:$0xff]
        %v507 = vld [vmem:[%s308 + $0x3f0] sm:$0xff]
        %v508 = vld [vmem:[%s308 + $0x3f8] sm:$0xff]
        %v509 = vld [vmem:[%s308 + $0x400] sm:$0xff]
        %v510 = vld [vmem:[%s308 + $0x408] sm:$0xff]
        %v511 = vld [vmem:[%s308 + $0x410] sm:$0xff]
        %v512 = vld [vmem:[%s308 + $0x418] sm:$0xff]
        %v513 = vld [vmem:[%s308 + $0x420] sm:$0xff]
        %v514 = vld [vmem:[%s308 + $0x428] sm:$0xff]
        %v515 = vld [vmem:[%s308 + $0x430] sm:$0xff]
        %v516 = vld [vmem:[%s308 + $0x438] sm:$0xff]
        %v517 = vld [vmem:[%s308 + $0x440] sm:$0xff]
        %v518 = vld [vmem:[%s308 + $0x448] sm:$0xff]
        %v519 = vld [vmem:[%s308 + $0x450] sm:$0xff]
        %v520 = vld [vmem:[%s308 + $0x458] sm:$0xff]
        %v521 = vld [vmem:[%s308 + $0x460] sm:$0xff]
        %v522 = vld [vmem:[%s308 + $0x468] sm:$0xff]
        %v523 = vld [vmem:[%s308 + $0x470] sm:$0xff]
        %v524 = vld [vmem:[%s308 + $0x478] sm:$0xff]
        %v525 = vld [vmem:[%s308 + $0x480] sm:$0xff]
        %v526 = vld [vmem:[%s308 + $0x488] sm:$0xff]
        %v527 = vld [vmem:[%s308 + $0x490] sm:$0xff]
        %v528 = vld [vmem:[%s308 + $0x498] sm:$0xff]
        %v529 = vld [vmem:[%s308 + $0x4a0] sm:$0xff]
        %v530 = vld [vmem:[%s308 + $0x4a8] sm:$0xff]
        %v531 = vld [vmem:[%s308 + $0x4b0] sm:$0xff]
        %v532 = vld [vmem:[%s308 + $0x4b8] sm:$0xff]
        %v533 = vld [vmem:[%s308 + $0x4c0] sm:$0xff]
        %v534 = vld [vmem:[%s308 + $0x4c8] sm:$0xff]
        %v535 = vld [vmem:[%s308 + $0x4d0] sm:$0xff]
        %v536 = vld [vmem:[%s308 + $0x4d8] sm:$0xff]
        %v537 = vld [vmem:[%s308 + $0x4e0] sm:$0xff]
        %v538 = vld [vmem:[%s308 + $0x4e8] sm:$0xff]
        %v539 = vld [vmem:[%s308 + $0x4f0] sm:$0xff]
        %v540 = vld [vmem:[%s308 + $0x4f8] sm:$0xff]
        %v541 = vld [vmem:[%s308 + $0x500] sm:$0xff]
        %v542 = vld [vmem:[%s308 + $0x508] sm:$0xff]
        %v543 = vld [vmem:[%s308 + $0x510] sm:$0xff]
        %v544 = vld [vmem:[%s308 + $0x518] sm:$0xff]
        %v545 = vld [vmem:[%s308 + $0x520] sm:$0xff]
        %v546 = vld [vmem:[%s308 + $0x528] sm:$0xff]
        %v547 = vld [vmem:[%s308 + $0x530] sm:$0xff]
        %v548 = vld [vmem:[%s308 + $0x538] sm:$0xff]
        %v549 = vld [vmem:[%s308 + $0x540] sm:$0xff]
        %v550 = vld [vmem:[%s308 + $0x548] sm:$0xff]
        %v551 = vld [vmem:[%s308 + $0x550] sm:$0xff]
        %v552 = vld [vmem:[%s308 + $0x558] sm:$0xff]
        %v553 = vld [vmem:[%s308 + $0x560] sm:$0xff]
        %v554 = vld [vmem:[%s308 + $0x568] sm:$0xff]
        %v555 = vld [vmem:[%s308 + $0x570] sm:$0xff]
        %v556 = vld [vmem:[%s308 + $0x578] sm:$0xff]
        %v557 = vld [vmem:[%s308 + $0x580] sm:$0xff]
        %v558 = vld [vmem:[%s308 + $0x588] sm:$0xff]
        %v559 = vld [vmem:[%s308 + $0x590] sm:$0xff]
        %v560 = vld [vmem:[%s308 + $0x598] sm:$0xff]
        %v561 = vld [vmem:[%s308 + $0x5a0] sm:$0xff]
        %v562 = vld [vmem:[%s308 + $0x5a8] sm:$0xff]
        %v563 = vld [vmem:[%s308 + $0x5b0] sm:$0xff]
        %v564 = vld [vmem:[%s308 + $0x5b8] sm:$0xff]
        %v565 = vld [vmem:[%s308 + $0x5c0] sm:$0xff]
        %v566 = vld [vmem:[%s308 + $0x5c8] sm:$0xff]
        %v567 = vld [vmem:[%s308 + $0x5d0] sm:$0xff]
        %v568 = vld [vmem:[%s308 + $0x5d8] sm:$0xff]
        %v569 = vld [vmem:[%s308 + $0x5e0] sm:$0xff]
        %v570 = vld [vmem:[%s308 + $0x5e8] sm:$0xff]
        %v571 = vld [vmem:[%s308 + $0x5f0] sm:$0xff]
        %v572 = vld [vmem:[%s308 + $0x5f8] sm:$0xff]
        %v573 = vld [vmem:[%s308 + $0x600] sm:$0xff]
        %v574 = vld [vmem:[%s308 + $0x608] sm:$0xff]
        %v575 = vld [vmem:[%s308 + $0x610] sm:$0xff]
        %v576 = vld [vmem:[%s308 + $0x618] sm:$0xff]
        %v577 = vld [vmem:[%s308 + $0x620] sm:$0xff]
        %v578 = vld [vmem:[%s308 + $0x628] sm:$0xff]
        %v579 = vld [vmem:[%s308 + $0x630] sm:$0xff]
        %v580 = vld [vmem:[%s308 + $0x638] sm:$0xff]
        %v581 = vld [vmem:[%s308 + $0x640] sm:$0xff]
        %v582 = vld [vmem:[%s308 + $0x648] sm:$0xff]
        %v583 = vld [vmem:[%s308 + $0x650] sm:$0xff]
        %v584 = vld [vmem:[%s308 + $0x658] sm:$0xff]
        %v585 = vld [vmem:[%s308 + $0x660] sm:$0xff]
        %v586 = vld [vmem:[%s308 + $0x668] sm:$0xff]
        %v587 = vld [vmem:[%s308 + $0x670] sm:$0xff]
        %v588 = vld [vmem:[%s308 + $0x678] sm:$0xff]
        %v589 = vld [vmem:[%s308 + $0x680] sm:$0xff]
        %v590 = vld [vmem:[%s308 + $0x688] sm:$0xff]
        %v591 = vld [vmem:[%s308 + $0x690] sm:$0xff]
        %v592 = vld [vmem:[%s308 + $0x698] sm:$0xff]
        %v593 = vld [vmem:[%s308 + $0x6a0] sm:$0xff]
        %v594 = vld [vmem:[%s308 + $0x6a8] sm:$0xff]
        %v595 = vld [vmem:[%s308 + $0x6b0] sm:$0xff]
        %v596 = vld [vmem:[%s308 + $0x6b8] sm:$0xff]
        %v597 = vld [vmem:[%s308 + $0x6c0] sm:$0xff]
        %v598 = vld [vmem:[%s308 + $0x6c8] sm:$0xff]
        %v599 = vld [vmem:[%s308 + $0x6d0] sm:$0xff]
        %v600 = vld [vmem:[%s308 + $0x6d8] sm:$0xff]
        %v601 = vld [vmem:[%s308 + $0x6e0] sm:$0xff]
        %v602 = vld [vmem:[%s308 + $0x6e8] sm:$0xff]
        %v603 = vld [vmem:[%s308 + $0x6f0] sm:$0xff]
        %v604 = vld [vmem:[%s308 + $0x6f8] sm:$0xff]
        %v605 = vld [vmem:[%s308 + $0x700] sm:$0xff]
        %v606 = vld [vmem:[%s308 + $0x708] sm:$0xff]
        %v607 = vld [vmem:[%s308 + $0x710] sm:$0xff]
        %v608 = vld [vmem:[%s308 + $0x718] sm:$0xff]
        %v609 = vld [vmem:[%s308 + $0x720] sm:$0xff]
        %v610 = vld [vmem:[%s308 + $0x728] sm:$0xff]
        %v611 = vld [vmem:[%s308 + $0x730] sm:$0xff]
        %v612 = vld [vmem:[%s308 + $0x738] sm:$0xff]
        %v613 = vld [vmem:[%s308 + $0x740] sm:$0xff]
        %v614 = vld [vmem:[%s308 + $0x748] sm:$0xff]
        %v615 = vld [vmem:[%s308 + $0x750] sm:$0xff]
        %v616 = vld [vmem:[%s308 + $0x758] sm:$0xff]
        %v617 = vld [vmem:[%s308 + $0x760] sm:$0xff]
        %v618 = vld [vmem:[%s308 + $0x768] sm:$0xff]
        %v619 = vld [vmem:[%s308 + $0x770] sm:$0xff]
        %v620 = vld [vmem:[%s308 + $0x778] sm:$0xff]
        %v621 = vld [vmem:[%s308 + $0x780] sm:$0xff]
        %v622 = vld [vmem:[%s308 + $0x788] sm:$0xff]
        %v623 = vld [vmem:[%s308 + $0x790] sm:$0xff]
        %v624 = vld [vmem:[%s308 + $0x798] sm:$0xff]
        %v625 = vld [vmem:[%s308 + $0x7a0] sm:$0xff]
        %v626 = vld [vmem:[%s308 + $0x7a8] sm:$0xff]
        %v627 = vld [vmem:[%s308 + $0x7b0] sm:$0xff]
        %v628 = vld [vmem:[%s308 + $0x7b8] sm:$0xff]
        %v629 = vld [vmem:[%s308 + $0x7c0] sm:$0xff]
        %v630 = vld [vmem:[%s308 + $0x7c8] sm:$0xff]
        %v631 = vld [vmem:[%s308 + $0x7d0] sm:$0xff]
        %v632 = vld [vmem:[%s308 + $0x7d8] sm:$0xff]
        %v633 = vld [vmem:[%s308 + $0x7e0] sm:$0xff]
        %v634 = vld [vmem:[%s308 + $0x7e8] sm:$0xff]
        %v635 = vld [vmem:[%s308 + $0x7f0] sm:$0xff]
        %v636 = vld [vmem:[%s308 + $0x7f8] sm:$0xff]
        %v637 = vld [vmem:[%s308 + $0x800] sm:$0xff]
        %v638 = vld [vmem:[%s308 + $0x808] sm:$0xff]
        %v639 = vld [vmem:[%s308 + $0x810] sm:$0xff]
        %v640 = vld [vmem:[%s308 + $0x818] sm:$0xff]
        %v641 = vld [vmem:[%s308 + $0x820] sm:$0xff]
        %v642 = vld [vmem:[%s308 + $0x828] sm:$0xff]
        %v643 = vld [vmem:[%s308 + $0x830] sm:$0xff]
        %v644 = vld [vmem:[%s308 + $0x838] sm:$0xff]
        %v645 = vld [vmem:[%s308 + $0x840] sm:$0xff]
        %v646 = vld [vmem:[%s308 + $0x848] sm:$0xff]
        %v647 = vld [vmem:[%s308 + $0x850] sm:$0xff]
        %v648 = vld [vmem:[%s308 + $0x858] sm:$0xff]
        %v649 = vld [vmem:[%s308 + $0x860] sm:$0xff]
        %v650 = vld [vmem:[%s308 + $0x868] sm:$0xff]
        %v651 = vld [vmem:[%s308 + $0x870] sm:$0xff]
        %v652 = vld [vmem:[%s308 + $0x878] sm:$0xff]
        %v653 = vld [vmem:[%s308 + $0x880] sm:$0xff]
        %v654 = vld [vmem:[%s308 + $0x888] sm:$0xff]
        %v655 = vld [vmem:[%s308 + $0x890] sm:$0xff]
        %v656 = vld [vmem:[%s308 + $0x898] sm:$0xff]
        %v657 = vld [vmem:[%s308 + $0x8a0] sm:$0xff]
        %v658 = vld [vmem:[%s308 + $0x8a8] sm:$0xff]
        %v659 = vld [vmem:[%s308 + $0x8b0] sm:$0xff]
        %v660 = vld [vmem:[%s308 + $0x8b8] sm:$0xff]
        %v661 = vld [vmem:[%s308 + $0x8c0] sm:$0xff]
        %v662 = vld [vmem:[%s308 + $0x8c8] sm:$0xff]
        %v663 = vld [vmem:[%s308 + $0x8d0] sm:$0xff]
        %v664 = vld [vmem:[%s308 + $0x8d8] sm:$0xff]
        %v665 = vld [vmem:[%s308 + $0x8e0] sm:$0xff]
        %v666 = vld [vmem:[%s308 + $0x8e8] sm:$0xff]
        %v667 = vld [vmem:[%s308 + $0x8f0] sm:$0xff]
        %v668 = vld [vmem:[%s308 + $0x8f8] sm:$0xff]
        %v669 = vld [vmem:[%s308 + $0x900] sm:$0xff]
        %v670 = vld [vmem:[%s308 + $0x908] sm:$0xff]
        %v671 = vld [vmem:[%s308 + $0x910] sm:$0xff]
        %v672 = vld [vmem:[%s308 + $0x918] sm:$0xff]
        %v673 = vld [vmem:[%s308 + $0x920] sm:$0xff]
        %v674 = vld [vmem:[%s308 + $0x928] sm:$0xff]
        %v675 = vld [vmem:[%s308 + $0x930] sm:$0xff]
        %v676 = vld [vmem:[%s308 + $0x938] sm:$0xff]
        %v677 = vld [vmem:[%s308 + $0x940] sm:$0xff]
        %v678 = vld [vmem:[%s308 + $0x948] sm:$0xff]
        %v679 = vld [vmem:[%s308 + $0x950] sm:$0xff]
        %v680 = vld [vmem:[%s308 + $0x958] sm:$0xff]
        %v681 = vld [vmem:[%s308 + $0x960] sm:$0xff]
        %v682 = vld [vmem:[%s308 + $0x968] sm:$0xff]
        %v683 = vld [vmem:[%s308 + $0x970] sm:$0xff]
        %v684 = vld [vmem:[%s308 + $0x978] sm:$0xff]
        %v685 = vld [vmem:[%s308 + $0x980] sm:$0xff]
        %v686 = vld [vmem:[%s308 + $0x988] sm:$0xff]
        %v687 = vld [vmem:[%s308 + $0x990] sm:$0xff]
        %v688 = vld [vmem:[%s308 + $0x998] sm:$0xff]
        %v689 = vld [vmem:[%s308 + $0x9a0] sm:$0xff]
        %v690 = vld [vmem:[%s308 + $0x9a8] sm:$0xff]
        %v691 = vld [vmem:[%s308 + $0x9b0] sm:$0xff]
        %v692 = vld [vmem:[%s308 + $0x9b8] sm:$0xff]
        %v693 = vld [vmem:[%s308 + $0x9c0] sm:$0xff]
        %v694 = vld [vmem:[%s308 + $0x9c8] sm:$0xff]
        %v695 = vld [vmem:[%s308 + $0x9d0] sm:$0xff]
        %v696 = vld [vmem:[%s308 + $0x9d8] sm:$0xff]
        %v697 = vld [vmem:[%s308 + $0x9e0] sm:$0xff]
        %v698 = vld [vmem:[%s308 + $0x9e8] sm:$0xff]
        %v699 = vld [vmem:[%s308 + $0x9f0] sm:$0xff]
        %v700 = vld [vmem:[%s308 + $0x9f8] sm:$0xff]
        %v701 = vld [vmem:[%s308 + $0xa00] sm:$0xff]
        %v702 = vld [vmem:[%s308 + $0xa08] sm:$0xff]
        %v703 = vld [vmem:[%s308 + $0xa10] sm:$0xff]
        %v704 = vld [vmem:[%s308 + $0xa18] sm:$0xff]
        %v705 = vld [vmem:[%s308 + $0xa20] sm:$0xff]
        %v706 = vld [vmem:[%s308 + $0xa28] sm:$0xff]
        %v707 = vld [vmem:[%s308 + $0xa30] sm:$0xff]
        %v708 = vld [vmem:[%s308 + $0xa38] sm:$0xff]
        %v709 = vld [vmem:[%s308 + $0xa40] sm:$0xff]
        %v710 = vld [vmem:[%s308 + $0xa48] sm:$0xff]
        %v711 = vld [vmem:[%s308 + $0xa50] sm:$0xff]
        %v712 = vld [vmem:[%s308 + $0xa58] sm:$0xff]
        %v713 = vld [vmem:[%s308 + $0xa60] sm:$0xff]
        %v714 = vld [vmem:[%s308 + $0xa68] sm:$0xff]
        %v715 = vld [vmem:[%s308 + $0xa70] sm:$0xff]
        %v716 = vld [vmem:[%s308 + $0xa78] sm:$0xff]
        %v717 = vld [vmem:[%s308 + $0xa80] sm:$0xff]
        %v718 = vld [vmem:[%s308 + $0xa88] sm:$0xff]
        %v719 = vld [vmem:[%s308 + $0xa90] sm:$0xff]
        %v720 = vld [vmem:[%s308 + $0xa98] sm:$0xff]
        %v721 = vld [vmem:[%s308 + $0xaa0] sm:$0xff]
        %v722 = vld [vmem:[%s308 + $0xaa8] sm:$0xff]
        %v723 = vld [vmem:[%s308 + $0xab0] sm:$0xff]
        %v724 = vld [vmem:[%s308 + $0xab8] sm:$0xff]
        %v725 = vld [vmem:[%s308 + $0xac0] sm:$0xff]
        %v726 = vld [vmem:[%s308 + $0xac8] sm:$0xff]
        %v727 = vld [vmem:[%s308 + $0xad0] sm:$0xff]
        %v728 = vld [vmem:[%s308 + $0xad8] sm:$0xff]
        %v729 = vld [vmem:[%s308 + $0xae0] sm:$0xff]
        %v730 = vld [vmem:[%s308 + $0xae8] sm:$0xff]
        %v731 = vld [vmem:[%s308 + $0xaf0] sm:$0xff]
        %v732 = vld [vmem:[%s308 + $0xaf8] sm:$0xff]
        %v733 = vld [vmem:[%s308 + $0xb00] sm:$0xff]
        %v734 = vld [vmem:[%s308 + $0xb08] sm:$0xff]
        %v735 = vld [vmem:[%s308 + $0xb10] sm:$0xff]
        %v736 = vld [vmem:[%s308 + $0xb18] sm:$0xff]
        %v737 = vld [vmem:[%s308 + $0xb20] sm:$0xff]
        %v738 = vld [vmem:[%s308 + $0xb28] sm:$0xff]
        %v739 = vld [vmem:[%s308 + $0xb30] sm:$0xff]
        %v740 = vld [vmem:[%s308 + $0xb38] sm:$0xff]
        %v741 = vld [vmem:[%s308 + $0xb40] sm:$0xff]
        %v742 = vld [vmem:[%s308 + $0xb48] sm:$0xff]
        %v743 = vld [vmem:[%s308 + $0xb50] sm:$0xff]
        %v744 = vld [vmem:[%s308 + $0xb58] sm:$0xff]
        %v745 = vld [vmem:[%s308 + $0xb60] sm:$0xff]
        %v746 = vld [vmem:[%s308 + $0xb68] sm:$0xff]
        %v747 = vld [vmem:[%s308 + $0xb70] sm:$0xff]
        %v748 = vld [vmem:[%s308 + $0xb78] sm:$0xff]
        %v749 = vld [vmem:[%s308 + $0xb80] sm:$0xff]
        %v750 = vld [vmem:[%s308 + $0xb88] sm:$0xff]
        %v751 = vld [vmem:[%s308 + $0xb90] sm:$0xff]
        %v752 = vld [vmem:[%s308 + $0xb98] sm:$0xff]
        %v753 = vld [vmem:[%s308 + $0xba0] sm:$0xff]
        %v754 = vld [vmem:[%s308 + $0xba8] sm:$0xff]
        %v755 = vld [vmem:[%s308 + $0xbb0] sm:$0xff]
        %v756 = vld [vmem:[%s308 + $0xbb8] sm:$0xff]
        %v757 = vld [vmem:[%s308 + $0xbc0] sm:$0xff]
        %v758 = vld [vmem:[%s308 + $0xbc8] sm:$0xff]
        %v759 = vld [vmem:[%s308 + $0xbd0] sm:$0xff]
        %v760 = vld [vmem:[%s308 + $0xbd8] sm:$0xff]
        %v761 = vld [vmem:[%s308 + $0xbe0] sm:$0xff]
        %v762 = vld [vmem:[%s308 + $0xbe8] sm:$0xff]
        %v763 = vld [vmem:[%s308 + $0xbf0] sm:$0xff]
        %v764 = vld [vmem:[%s308 + $0xbf8] sm:$0xff]
        %v765 = vld [vmem:[%s308 + $0xc00] sm:$0xff]
        %v766 = vld [vmem:[%s308 + $0xc08] sm:$0xff]
        %v767 = vld [vmem:[%s308 + $0xc10] sm:$0xff]
        %v768 = vld [vmem:[%s308 + $0xc18] sm:$0xff]
        %v769 = vld [vmem:[%s308 + $0xc20] sm:$0xff]
        %v770 = vld [vmem:[%s308 + $0xc28] sm:$0xff]
        %v771 = vld [vmem:[%s308 + $0xc30] sm:$0xff]
        %v772 = vld [vmem:[%s308 + $0xc38] sm:$0xff]
        %v773 = vld [vmem:[%s308 + $0xc40] sm:$0xff]
        %v774 = vld [vmem:[%s308 + $0xc48] sm:$0xff]
        %v775 = vld [vmem:[%s308 + $0xc50] sm:$0xff]
        %v776 = vld [vmem:[%s308 + $0xc58] sm:$0xff]
        %v777 = vld [vmem:[%s308 + $0xc60] sm:$0xff]
        %v778 = vld [vmem:[%s308 + $0xc68] sm:$0xff]
        %v779 = vld [vmem:[%s308 + $0xc70] sm:$0xff]
        %v780 = vld [vmem:[%s308 + $0xc78] sm:$0xff]
        %v781 = vld [vmem:[%s308 + $0xc80] sm:$0xff]
        %v782 = vld [vmem:[%s308 + $0xc88] sm:$0xff]
        %v783 = vld [vmem:[%s308 + $0xc90] sm:$0xff]
        %v784 = vld [vmem:[%s308 + $0xc98] sm:$0xff]
        %v785 = vld [vmem:[%s308 + $0xca0] sm:$0xff]
        %v786 = vld [vmem:[%s308 + $0xca8] sm:$0xff]
        %v787 = vld [vmem:[%s308 + $0xcb0] sm:$0xff]
        %v788 = vld [vmem:[%s308 + $0xcb8] sm:$0xff]
        %v789 = vld [vmem:[%s308 + $0xcc0] sm:$0xff]
        %v790 = vld [vmem:[%s308 + $0xcc8] sm:$0xff]
        %v791 = vld [vmem:[%s308 + $0xcd0] sm:$0xff]
        %v792 = vld [vmem:[%s308 + $0xcd8] sm:$0xff]
        %v793 = vld [vmem:[%s308 + $0xce0] sm:$0xff]
        %v794 = vld [vmem:[%s308 + $0xce8] sm:$0xff]
        %v795 = vld [vmem:[%s308 + $0xcf0] sm:$0xff]
        %v796 = vld [vmem:[%s308 + $0xcf8] sm:$0xff]
        %v797 = vld [vmem:[%s308 + $0xd00] sm:$0xff]
        %v798 = vld [vmem:[%s308 + $0xd08] sm:$0xff]
        %v799 = vld [vmem:[%s308 + $0xd10] sm:$0xff]
        %v800 = vld [vmem:[%s308 + $0xd18] sm:$0xff]
        %v801 = vld [vmem:[%s308 + $0xd20] sm:$0xff]
        %v802 = vld [vmem:[%s308 + $0xd28] sm:$0xff]
        %v803 = vld [vmem:[%s308 + $0xd30] sm:$0xff]
        %v804 = vld [vmem:[%s308 + $0xd38] sm:$0xff]
        %v805 = vld [vmem:[%s308 + $0xd40] sm:$0xff]
        %v806 = vld [vmem:[%s308 + $0xd48] sm:$0xff]
        %v807 = vld [vmem:[%s308 + $0xd50] sm:$0xff]
        %v808 = vld [vmem:[%s308 + $0xd58] sm:$0xff]
        %v809 = vld [vmem:[%s308 + $0xd60] sm:$0xff]
        %v810 = vld [vmem:[%s308 + $0xd68] sm:$0xff]
        %v811 = vld [vmem:[%s308 + $0xd70] sm:$0xff]
        %v812 = vld [vmem:[%s308 + $0xd78] sm:$0xff]
        %v813 = vld [vmem:[%s308 + $0xd80] sm:$0xff]
        %v814 = vld [vmem:[%s308 + $0xd88] sm:$0xff]
        %v815 = vld [vmem:[%s308 + $0xd90] sm:$0xff]
        %v816 = vld [vmem:[%s308 + $0xd98] sm:$0xff]
        %v817 = vld [vmem:[%s308 + $0xda0] sm:$0xff]
        %v818 = vld [vmem:[%s308 + $0xda8] sm:$0xff]
        %v819 = vld [vmem:[%s308 + $0xdb0] sm:$0xff]
        %v820 = vld [vmem:[%s308 + $0xdb8] sm:$0xff]
        %v821 = vld [vmem:[%s308 + $0xdc0] sm:$0xff]
        %v822 = vld [vmem:[%s308 + $0xdc8] sm:$0xff]
        %v823 = vld [vmem:[%s308 + $0xdd0] sm:$0xff]
        %v824 = vld [vmem:[%s308 + $0xdd8] sm:$0xff]
        %v825 = vld [vmem:[%s308 + $0xde0] sm:$0xff]
        %v826 = vld [vmem:[%s308 + $0xde8] sm:$0xff]
        %v827 = vld [vmem:[%s308 + $0xdf0] sm:$0xff]
        %v828 = vld [vmem:[%s308 + $0xdf8] sm:$0xff]
        %v829 = vld [vmem:[%s308 + $0xe00] sm:$0xff]
        %v830 = vld [vmem:[%s308 + $0xe08] sm:$0xff]
        %v831 = vld [vmem:[%s308 + $0xe10] sm:$0xff]
        %v832 = vld [vmem:[%s308 + $0xe18] sm:$0xff]
        %v833 = vld [vmem:[%s308 + $0xe20] sm:$0xff]
        %v834 = vld [vmem:[%s308 + $0xe28] sm:$0xff]
        %v835 = vld [vmem:[%s308 + $0xe30] sm:$0xff]
        %v836 = vld [vmem:[%s308 + $0xe38] sm:$0xff]
        %v837 = vld [vmem:[%s308 + $0xe40] sm:$0xff]
        %v838 = vld [vmem:[%s308 + $0xe48] sm:$0xff]
        %v839 = vld [vmem:[%s308 + $0xe50] sm:$0xff]
        %v840 = vld [vmem:[%s308 + $0xe58] sm:$0xff]
        %v841 = vld [vmem:[%s308 + $0xe60] sm:$0xff]
        %v842 = vld [vmem:[%s308 + $0xe68] sm:$0xff]
        %v843 = vld [vmem:[%s308 + $0xe70] sm:$0xff]
        %v844 = vld [vmem:[%s308 + $0xe78] sm:$0xff]
        %v845 = vld [vmem:[%s308 + $0xe80] sm:$0xff]
        %v846 = vld [vmem:[%s308 + $0xe88] sm:$0xff]
        %v847 = vld [vmem:[%s308 + $0xe90] sm:$0xff]
        %v848 = vld [vmem:[%s308 + $0xe98] sm:$0xff]
        %v849 = vld [vmem:[%s308 + $0xea0] sm:$0xff]
        %v850 = vld [vmem:[%s308 + $0xea8] sm:$0xff]
        %v851 = vld [vmem:[%s308 + $0xeb0] sm:$0xff]
        %v852 = vld [vmem:[%s308 + $0xeb8] sm:$0xff]
        %v853 = vld [vmem:[%s308 + $0xec0] sm:$0xff]
        %v854 = vld [vmem:[%s308 + $0xec8] sm:$0xff]
        %v855 = vld [vmem:[%s308 + $0xed0] sm:$0xff]
        %v856 = vld [vmem:[%s308 + $0xed8] sm:$0xff]
        %v857 = vld [vmem:[%s308 + $0xee0] sm:$0xff]
        %v858 = vld [vmem:[%s308 + $0xee8] sm:$0xff]
        %v859 = vld [vmem:[%s308 + $0xef0] sm:$0xff]
        %v860 = vld [vmem:[%s308 + $0xef8] sm:$0xff]
        %v861 = vld [vmem:[%s308 + $0xf00] sm:$0xff]
        %v862 = vld [vmem:[%s308 + $0xf08] sm:$0xff]
        %v863 = vld [vmem:[%s308 + $0xf10] sm:$0xff]
        %v864 = vld [vmem:[%s308 + $0xf18] sm:$0xff]
        %v865 = vld [vmem:[%s308 + $0xf20] sm:$0xff]
        %v866 = vld [vmem:[%s308 + $0xf28] sm:$0xff]
        %v867 = vld [vmem:[%s308 + $0xf30] sm:$0xff]
        %v868 = vld [vmem:[%s308 + $0xf38] sm:$0xff]
        %v869 = vld [vmem:[%s308 + $0xf40] sm:$0xff]
        %v870 = vld [vmem:[%s308 + $0xf48] sm:$0xff]
        %v871 = vld [vmem:[%s308 + $0xf50] sm:$0xff]
        %v872 = vld [vmem:[%s308 + $0xf58] sm:$0xff]
        %v873 = vld [vmem:[%s308 + $0xf60] sm:$0xff]
        %v874 = vld [vmem:[%s308 + $0xf68] sm:$0xff]
        %v875 = vld [vmem:[%s308 + $0xf70] sm:$0xff]
        %v876 = vld [vmem:[%s308 + $0xf78] sm:$0xff]
        %v877 = vld [vmem:[%s308 + $0xf80] sm:$0xff]
        %v878 = vld [vmem:[%s308 + $0xf88] sm:$0xff]
        %v879 = vld [vmem:[%s308 + $0xf90] sm:$0xff]
        %v880 = vld [vmem:[%s308 + $0xf98] sm:$0xff]
        %v881 = vld [vmem:[%s308 + $0xfa0] sm:$0xff]
        %v882 = vld [vmem:[%s308 + $0xfa8] sm:$0xff]
        %v883 = vld [vmem:[%s308 + $0xfb0] sm:$0xff]
        %v884 = vld [vmem:[%s308 + $0xfb8] sm:$0xff]
        %v885 = vld [vmem:[%s308 + $0xfc0] sm:$0xff]
        %v886 = vld [vmem:[%s308 + $0xfc8] sm:$0xff]
        %v887 = vld [vmem:[%s308 + $0xfd0] sm:$0xff]
        %v888 = vld [vmem:[%s308 + $0xfd8] sm:$0xff]
        %v889 = vld [vmem:[%s308 + $0xfe0] sm:$0xff]
        %v890 = vld [vmem:[%s308 + $0xfe8] sm:$0xff]
        %v891 = vld [vmem:[%s308 + $0xff0] sm:$0xff]
        %v892 = vld [vmem:[%s308 + $0xff8] sm:$0xff]
        %v893 = vld [vmem:[%s318] sm:$0xff]
        %v895 = vperm.slane %v893, 0
        %v896 = vperm.slane %v893, 1
        %v897 = vperm.slane %v893, 2
        %v898 = vperm.slane %v893, 3
        %v899 = vperm.slane %v893, 4
        %v900 = vperm.slane %v893, 5
        %v901 = vperm.slane %v893, 6
        %v902 = vperm.slane %v893, 7
        %911 = vmatpush.msra.mxu0 %v501
        %912 = vmatpush.msra.mxu0 %v493
        %913 = vmatpush.msra.mxu0 %v485
        %914 = vmatpush.msra.mxu0 %v477
        %915 = vmatpush.msra.mxu0 %v469
        %916 = vmatpush.msra.mxu0 %v461
        %917 = vmatpush.msra.mxu0 %v453
        %918 = vmatpush.msra.mxu0 %v445
        %919 = vmatpush.msra.mxu0 %v437
        %920 = vmatpush.msra.mxu0 %v429
        %921 = vmatpush.msra.mxu0 %v421
        %922 = vmatpush.msra.mxu0 %v413
        %923 = vmatpush.msra.mxu0 %v405
        %924 = vmatpush.msra.mxu0 %v397
        %925 = vmatpush.msra.mxu0 %v389
        %926 = vmatpush.msra.mxu0 %v381
        %927 = vmatmul.f32.gmra.mxu0 %v377
        %v928 = vpop.f32.mrf.mxu0
        %v929 = vadd.f32 %v895, %v928
        %930 = vdwg.mxu0
        %931 = vmatpush.msra.mxu0 %v629
        %932 = vmatpush.msra.mxu0 %v621
        %933 = vmatpush.msra.mxu0 %v613
        %934 = vmatpush.msra.mxu0 %v605
        %935 = vmatpush.msra.mxu0 %v597
        %936 = vmatpush.msra.mxu0 %v589
        %937 = vmatpush.msra.mxu0 %v581
        %938 = vmatpush.msra.mxu0 %v573
        %939 = vmatpush.msra.mxu0 %v565
        %940 = vmatpush.msra.mxu0 %v557
        %941 = vmatpush.msra.mxu0 %v549
        %942 = vmatpush.msra.mxu0 %v541
        %943 = vmatpush.msra.mxu0 %v533
        %944 = vmatpush.msra.mxu0 %v525
        %945 = vmatpush.msra.mxu0 %v517
        %946 = vmatpush.msra.mxu0 %v509
        %947 = vmatmul.f32.gmra.mxu0 %v378
        %v948 = vpop.f32.mrf.mxu0
        %v949 = vadd.f32 %v929, %v948
        %950 = vdwg.mxu0
        %951 = vmatpush.msra.mxu0 %v757
        %952 = vmatpush.msra.mxu0 %v749
        %953 = vmatpush.msra.mxu0 %v741
        %954 = vmatpush.msra.mxu0 %v733
        %955 = vmatpush.msra.mxu0 %v725
        %956 = vmatpush.msra.mxu0 %v717
        %957 = vmatpush.msra.mxu0 %v709
        %958 = vmatpush.msra.mxu0 %v701
        %959 = vmatpush.msra.mxu0 %v693
        %960 = vmatpush.msra.mxu0 %v685
        %961 = vmatpush.msra.mxu0 %v677
        %962 = vmatpush.msra.mxu0 %v669
        %963 = vmatpush.msra.mxu0 %v661
        %964 = vmatpush.msra.mxu0 %v653
        %965 = vmatpush.msra.mxu0 %v645
        %966 = vmatpush.msra.mxu0 %v637
        %967 = vmatmul.f32.gmra.mxu0 %v379
        %v968 = vpop.f32.mrf.mxu0
        %v969 = vadd.f32 %v949, %v968
        %970 = vdwg.mxu0
        %971 = vmatpush.msra.mxu0 %v885
        %972 = vmatpush.msra.mxu0 %v877
        %973 = vmatpush.msra.mxu0 %v869
        %974 = vmatpush.msra.mxu0 %v861
        %975 = vmatpush.msra.mxu0 %v853
        %976 = vmatpush.msra.mxu0 %v845
        %977 = vmatpush.msra.mxu0 %v837
        %978 = vmatpush.msra.mxu0 %v829
        %979 = vmatpush.msra.mxu0 %v821
        %980 = vmatpush.msra.mxu0 %v813
        %981 = vmatpush.msra.mxu0 %v805
        %982 = vmatpush.msra.mxu0 %v797
        %983 = vmatpush.msra.mxu0 %v789
        %984 = vmatpush.msra.mxu0 %v781
        %985 = vmatpush.msra.mxu0 %v773
        %986 = vmatpush.msra.mxu0 %v765
        %987 = vmatmul.f32.gmra.mxu0 %v380
        %v988 = vpop.f32.mrf.mxu0
        %v989 = vadd.f32 %v969, %v988
        %990 = vdwg.mxu0
        %991 = vmatpush.msra.mxu0 %v502
        %992 = vmatpush.msra.mxu0 %v494
        %993 = vmatpush.msra.mxu0 %v486
        %994 = vmatpush.msra.mxu0 %v478
        %995 = vmatpush.msra.mxu0 %v470
        %996 = vmatpush.msra.mxu0 %v462
        %997 = vmatpush.msra.mxu0 %v454
        %998 = vmatpush.msra.mxu0 %v446
        %999 = vmatpush.msra.mxu0 %v438
        %1000 = vmatpush.msra.mxu0 %v430
        %1001 = vmatpush.msra.mxu0 %v422
        %1002 = vmatpush.msra.mxu0 %v414
        %1003 = vmatpush.msra.mxu0 %v406
        %1004 = vmatpush.msra.mxu0 %v398
        %1005 = vmatpush.msra.mxu0 %v390
        %1006 = vmatpush.msra.mxu0 %v382
        %1007 = vmatmul.f32.gmra.mxu0 %v377
        %v1008 = vpop.f32.mrf.mxu0
        %v1009 = vadd.f32 %v896, %v1008
        %1010 = vdwg.mxu0
        %1011 = vmatpush.msra.mxu0 %v630
        %1012 = vmatpush.msra.mxu0 %v622
        %1013 = vmatpush.msra.mxu0 %v614
        %1014 = vmatpush.msra.mxu0 %v606
        %1015 = vmatpush.msra.mxu0 %v598
        %1016 = vmatpush.msra.mxu0 %v590
        %1017 = vmatpush.msra.mxu0 %v582
        %1018 = vmatpush.msra.mxu0 %v574
        %1019 = vmatpush.msra.mxu0 %v566
        %1020 = vmatpush.msra.mxu0 %v558
        %1021 = vmatpush.msra.mxu0 %v550
        %1022 = vmatpush.msra.mxu0 %v542
        %1023 = vmatpush.msra.mxu0 %v534
        %1024 = vmatpush.msra.mxu0 %v526
        %1025 = vmatpush.msra.mxu0 %v518
        %1026 = vmatpush.msra.mxu0 %v510
        %1027 = vmatmul.f32.gmra.mxu0 %v378
        %v1028 = vpop.f32.mrf.mxu0
        %v1029 = vadd.f32 %v1009, %v1028
        %1030 = vdwg.mxu0
        %1031 = vmatpush.msra.mxu0 %v758
        %1032 = vmatpush.msra.mxu0 %v750
        %1033 = vmatpush.msra.mxu0 %v742
        %1034 = vmatpush.msra.mxu0 %v734
        %1035 = vmatpush.msra.mxu0 %v726
        %1036 = vmatpush.msra.mxu0 %v718
        %1037 = vmatpush.msra.mxu0 %v710
        %1038 = vmatpush.msra.mxu0 %v702
        %1039 = vmatpush.msra.mxu0 %v694
        %1040 = vmatpush.msra.mxu0 %v686
        %1041 = vmatpush.msra.mxu0 %v678
        %1042 = vmatpush.msra.mxu0 %v670
        %1043 = vmatpush.msra.mxu0 %v662
        %1044 = vmatpush.msra.mxu0 %v654
        %1045 = vmatpush.msra.mxu0 %v646
        %1046 = vmatpush.msra.mxu0 %v638
        %1047 = vmatmul.f32.gmra.mxu0 %v379
        %v1048 = vpop.f32.mrf.mxu0
        %v1049 = vadd.f32 %v1029, %v1048
        %1050 = vdwg.mxu0
        %1051 = vmatpush.msra.mxu0 %v886
        %1052 = vmatpush.msra.mxu0 %v878
        %1053 = vmatpush.msra.mxu0 %v870
        %1054 = vmatpush.msra.mxu0 %v862
        %1055 = vmatpush.msra.mxu0 %v854
        %1056 = vmatpush.msra.mxu0 %v846
        %1057 = vmatpush.msra.mxu0 %v838
        %1058 = vmatpush.msra.mxu0 %v830
        %1059 = vmatpush.msra.mxu0 %v822
        %1060 = vmatpush.msra.mxu0 %v814
        %1061 = vmatpush.msra.mxu0 %v806
        %1062 = vmatpush.msra.mxu0 %v798
        %1063 = vmatpush.msra.mxu0 %v790
        %1064 = vmatpush.msra.mxu0 %v782
        %1065 = vmatpush.msra.mxu0 %v774
        %1066 = vmatpush.msra.mxu0 %v766
        %1067 = vmatmul.f32.gmra.mxu0 %v380
        %v1068 = vpop.f32.mrf.mxu0
        %v1069 = vadd.f32 %v1049, %v1068
        %1070 = vdwg.mxu0
        %1071 = vmatpush.msra.mxu0 %v503
        %1072 = vmatpush.msra.mxu0 %v495
        %1073 = vmatpush.msra.mxu0 %v487
        %1074 = vmatpush.msra.mxu0 %v479
        %1075 = vmatpush.msra.mxu0 %v471
        %1076 = vmatpush.msra.mxu0 %v463
        %1077 = vmatpush.msra.mxu0 %v455
        %1078 = vmatpush.msra.mxu0 %v447
        %1079 = vmatpush.msra.mxu0 %v439
        %1080 = vmatpush.msra.mxu0 %v431
        %1081 = vmatpush.msra.mxu0 %v423
        %1082 = vmatpush.msra.mxu0 %v415
        %1083 = vmatpush.msra.mxu0 %v407
        %1084 = vmatpush.msra.mxu0 %v399
        %1085 = vmatpush.msra.mxu0 %v391
        %1086 = vmatpush.msra.mxu0 %v383
        %1087 = vmatmul.f32.gmra.mxu0 %v377
        %v1088 = vpop.f32.mrf.mxu0
        %v1089 = vadd.f32 %v897, %v1088
        %1090 = vdwg.mxu0
        %1091 = vmatpush.msra.mxu0 %v631
        %1092 = vmatpush.msra.mxu0 %v623
        %1093 = vmatpush.msra.mxu0 %v615
        %1094 = vmatpush.msra.mxu0 %v607
        %1095 = vmatpush.msra.mxu0 %v599
        %1096 = vmatpush.msra.mxu0 %v591
        %1097 = vmatpush.msra.mxu0 %v583
        %1098 = vmatpush.msra.mxu0 %v575
        %1099 = vmatpush.msra.mxu0 %v567
        %1100 = vmatpush.msra.mxu0 %v559
        %1101 = vmatpush.msra.mxu0 %v551
        %1102 = vmatpush.msra.mxu0 %v543
        %1103 = vmatpush.msra.mxu0 %v535
        %1104 = vmatpush.msra.mxu0 %v527
        %1105 = vmatpush.msra.mxu0 %v519
        %1106 = vmatpush.msra.mxu0 %v511
        %1107 = vmatmul.f32.gmra.mxu0 %v378
        %v1108 = vpop.f32.mrf.mxu0
        %v1109 = vadd.f32 %v1089, %v1108
        %1110 = vdwg.mxu0
        %1111 = vmatpush.msra.mxu0 %v759
        %1112 = vmatpush.msra.mxu0 %v751
        %1113 = vmatpush.msra.mxu0 %v743
        %1114 = vmatpush.msra.mxu0 %v735
        %1115 = vmatpush.msra.mxu0 %v727
        %1116 = vmatpush.msra.mxu0 %v719
        %1117 = vmatpush.msra.mxu0 %v711
        %1118 = vmatpush.msra.mxu0 %v703
        %1119 = vmatpush.msra.mxu0 %v695
        %1120 = vmatpush.msra.mxu0 %v687
        %1121 = vmatpush.msra.mxu0 %v679
        %1122 = vmatpush.msra.mxu0 %v671
        %1123 = vmatpush.msra.mxu0 %v663
        %1124 = vmatpush.msra.mxu0 %v655
        %1125 = vmatpush.msra.mxu0 %v647
        %1126 = vmatpush.msra.mxu0 %v639
        %1127 = vmatmul.f32.gmra.mxu0 %v379
        %v1128 = vpop.f32.mrf.mxu0
        %v1129 = vadd.f32 %v1109, %v1128
        %1130 = vdwg.mxu0
        %1131 = vmatpush.msra.mxu0 %v887
        %1132 = vmatpush.msra.mxu0 %v879
        %1133 = vmatpush.msra.mxu0 %v871
        %1134 = vmatpush.msra.mxu0 %v863
        %1135 = vmatpush.msra.mxu0 %v855
        %1136 = vmatpush.msra.mxu0 %v847
        %1137 = vmatpush.msra.mxu0 %v839
        %1138 = vmatpush.msra.mxu0 %v831
        %1139 = vmatpush.msra.mxu0 %v823
        %1140 = vmatpush.msra.mxu0 %v815
        %1141 = vmatpush.msra.mxu0 %v807
        %1142 = vmatpush.msra.mxu0 %v799
        %1143 = vmatpush.msra.mxu0 %v791
        %1144 = vmatpush.msra.mxu0 %v783
        %1145 = vmatpush.msra.mxu0 %v775
        %1146 = vmatpush.msra.mxu0 %v767
        %1147 = vmatmul.f32.gmra.mxu0 %v380
        %v1148 = vpop.f32.mrf.mxu0
        %v1149 = vadd.f32 %v1129, %v1148
        %1150 = vdwg.mxu0
        %1151 = vmatpush.msra.mxu0 %v504
        %1152 = vmatpush.msra.mxu0 %v496
        %1153 = vmatpush.msra.mxu0 %v488
        %1154 = vmatpush.msra.mxu0 %v480
        %1155 = vmatpush.msra.mxu0 %v472
        %1156 = vmatpush.msra.mxu0 %v464
        %1157 = vmatpush.msra.mxu0 %v456
        %1158 = vmatpush.msra.mxu0 %v448
        %1159 = vmatpush.msra.mxu0 %v440
        %1160 = vmatpush.msra.mxu0 %v432
        %1161 = vmatpush.msra.mxu0 %v424
        %1162 = vmatpush.msra.mxu0 %v416
        %1163 = vmatpush.msra.mxu0 %v408
        %1164 = vmatpush.msra.mxu0 %v400
        %1165 = vmatpush.msra.mxu0 %v392
        %1166 = vmatpush.msra.mxu0 %v384
        %1167 = vmatmul.f32.gmra.mxu0 %v377
        %v1168 = vpop.f32.mrf.mxu0
        %v1169 = vadd.f32 %v898, %v1168
        %1170 = vdwg.mxu0
        %1171 = vmatpush.msra.mxu0 %v632
        %1172 = vmatpush.msra.mxu0 %v624
        %1173 = vmatpush.msra.mxu0 %v616
        %1174 = vmatpush.msra.mxu0 %v608
        %1175 = vmatpush.msra.mxu0 %v600
        %1176 = vmatpush.msra.mxu0 %v592
        %1177 = vmatpush.msra.mxu0 %v584
        %1178 = vmatpush.msra.mxu0 %v576
        %1179 = vmatpush.msra.mxu0 %v568
        %1180 = vmatpush.msra.mxu0 %v560
        %1181 = vmatpush.msra.mxu0 %v552
        %1182 = vmatpush.msra.mxu0 %v544
        %1183 = vmatpush.msra.mxu0 %v536
        %1184 = vmatpush.msra.mxu0 %v528
        %1185 = vmatpush.msra.mxu0 %v520
        %1186 = vmatpush.msra.mxu0 %v512
        %1187 = vmatmul.f32.gmra.mxu0 %v378
        %v1188 = vpop.f32.mrf.mxu0
        %v1189 = vadd.f32 %v1169, %v1188
        %1190 = vdwg.mxu0
        %1191 = vmatpush.msra.mxu0 %v760
        %1192 = vmatpush.msra.mxu0 %v752
        %1193 = vmatpush.msra.mxu0 %v744
        %1194 = vmatpush.msra.mxu0 %v736
        %1195 = vmatpush.msra.mxu0 %v728
        %1196 = vmatpush.msra.mxu0 %v720
        %1197 = vmatpush.msra.mxu0 %v712
        %1198 = vmatpush.msra.mxu0 %v704
        %1199 = vmatpush.msra.mxu0 %v696
        %1200 = vmatpush.msra.mxu0 %v688
        %1201 = vmatpush.msra.mxu0 %v680
        %1202 = vmatpush.msra.mxu0 %v672
        %1203 = vmatpush.msra.mxu0 %v664
        %1204 = vmatpush.msra.mxu0 %v656
        %1205 = vmatpush.msra.mxu0 %v648
        %1206 = vmatpush.msra.mxu0 %v640
        %1207 = vmatmul.f32.gmra.mxu0 %v379
        %v1208 = vpop.f32.mrf.mxu0
        %v1209 = vadd.f32 %v1189, %v1208
        %1210 = vdwg.mxu0
        %1211 = vmatpush.msra.mxu0 %v888
        %1212 = vmatpush.msra.mxu0 %v880
        %1213 = vmatpush.msra.mxu0 %v872
        %1214 = vmatpush.msra.mxu0 %v864
        %1215 = vmatpush.msra.mxu0 %v856
        %1216 = vmatpush.msra.mxu0 %v848
        %1217 = vmatpush.msra.mxu0 %v840
        %1218 = vmatpush.msra.mxu0 %v832
        %1219 = vmatpush.msra.mxu0 %v824
        %1220 = vmatpush.msra.mxu0 %v816
        %1221 = vmatpush.msra.mxu0 %v808
        %1222 = vmatpush.msra.mxu0 %v800
        %1223 = vmatpush.msra.mxu0 %v792
        %1224 = vmatpush.msra.mxu0 %v784
        %1225 = vmatpush.msra.mxu0 %v776
        %1226 = vmatpush.msra.mxu0 %v768
        %1227 = vmatmul.f32.gmra.mxu0 %v380
        %v1228 = vpop.f32.mrf.mxu0
        %v1229 = vadd.f32 %v1209, %v1228
        %1230 = vdwg.mxu0
        %1231 = vmatpush.msra.mxu0 %v505
        %1232 = vmatpush.msra.mxu0 %v497
        %1233 = vmatpush.msra.mxu0 %v489
        %1234 = vmatpush.msra.mxu0 %v481
        %1235 = vmatpush.msra.mxu0 %v473
        %1236 = vmatpush.msra.mxu0 %v465
        %1237 = vmatpush.msra.mxu0 %v457
        %1238 = vmatpush.msra.mxu0 %v449
        %1239 = vmatpush.msra.mxu0 %v441
        %1240 = vmatpush.msra.mxu0 %v433
        %1241 = vmatpush.msra.mxu0 %v425
        %1242 = vmatpush.msra.mxu0 %v417
        %1243 = vmatpush.msra.mxu0 %v409
        %1244 = vmatpush.msra.mxu0 %v401
        %1245 = vmatpush.msra.mxu0 %v393
        %1246 = vmatpush.msra.mxu0 %v385
        %1247 = vmatmul.f32.gmra.mxu0 %v377
        %v1248 = vpop.f32.mrf.mxu0
        %v1249 = vadd.f32 %v899, %v1248
        %1250 = vdwg.mxu0
        %1251 = vmatpush.msra.mxu0 %v633
        %1252 = vmatpush.msra.mxu0 %v625
        %1253 = vmatpush.msra.mxu0 %v617
        %1254 = vmatpush.msra.mxu0 %v609
        %1255 = vmatpush.msra.mxu0 %v601
        %1256 = vmatpush.msra.mxu0 %v593
        %1257 = vmatpush.msra.mxu0 %v585
        %1258 = vmatpush.msra.mxu0 %v577
        %1259 = vmatpush.msra.mxu0 %v569
        %1260 = vmatpush.msra.mxu0 %v561
        %1261 = vmatpush.msra.mxu0 %v553
        %1262 = vmatpush.msra.mxu0 %v545
        %1263 = vmatpush.msra.mxu0 %v537
        %1264 = vmatpush.msra.mxu0 %v529
        %1265 = vmatpush.msra.mxu0 %v521
        %1266 = vmatpush.msra.mxu0 %v513
        %1267 = vmatmul.f32.gmra.mxu0 %v378
        %v1268 = vpop.f32.mrf.mxu0
        %v1269 = vadd.f32 %v1249, %v1268
        %1270 = vdwg.mxu0
        %1271 = vmatpush.msra.mxu0 %v761
        %1272 = vmatpush.msra.mxu0 %v753
        %1273 = vmatpush.msra.mxu0 %v745
        %1274 = vmatpush.msra.mxu0 %v737
        %1275 = vmatpush.msra.mxu0 %v729
        %1276 = vmatpush.msra.mxu0 %v721
        %1277 = vmatpush.msra.mxu0 %v713
        %1278 = vmatpush.msra.mxu0 %v705
        %1279 = vmatpush.msra.mxu0 %v697
        %1280 = vmatpush.msra.mxu0 %v689
        %1281 = vmatpush.msra.mxu0 %v681
        %1282 = vmatpush.msra.mxu0 %v673
        %1283 = vmatpush.msra.mxu0 %v665
        %1284 = vmatpush.msra.mxu0 %v657
        %1285 = vmatpush.msra.mxu0 %v649
        %1286 = vmatpush.msra.mxu0 %v641
        %1287 = vmatmul.f32.gmra.mxu0 %v379
        %v1288 = vpop.f32.mrf.mxu0
        %v1289 = vadd.f32 %v1269, %v1288
        %1290 = vdwg.mxu0
        %1291 = vmatpush.msra.mxu0 %v889
        %1292 = vmatpush.msra.mxu0 %v881
        %1293 = vmatpush.msra.mxu0 %v873
        %1294 = vmatpush.msra.mxu0 %v865
        %1295 = vmatpush.msra.mxu0 %v857
        %1296 = vmatpush.msra.mxu0 %v849
        %1297 = vmatpush.msra.mxu0 %v841
        %1298 = vmatpush.msra.mxu0 %v833
        %1299 = vmatpush.msra.mxu0 %v825
        %1300 = vmatpush.msra.mxu0 %v817
        %1301 = vmatpush.msra.mxu0 %v809
        %1302 = vmatpush.msra.mxu0 %v801
        %1303 = vmatpush.msra.mxu0 %v793
        %1304 = vmatpush.msra.mxu0 %v785
        %1305 = vmatpush.msra.mxu0 %v777
        %1306 = vmatpush.msra.mxu0 %v769
        %1307 = vmatmul.f32.gmra.mxu0 %v380
        %v1308 = vpop.f32.mrf.mxu0
        %v1309 = vadd.f32 %v1289, %v1308
        %1310 = vdwg.mxu0
        %1311 = vmatpush.msra.mxu0 %v506
        %1312 = vmatpush.msra.mxu0 %v498
        %1313 = vmatpush.msra.mxu0 %v490
        %1314 = vmatpush.msra.mxu0 %v482
        %1315 = vmatpush.msra.mxu0 %v474
        %1316 = vmatpush.msra.mxu0 %v466
        %1317 = vmatpush.msra.mxu0 %v458
        %1318 = vmatpush.msra.mxu0 %v450
        %1319 = vmatpush.msra.mxu0 %v442
        %1320 = vmatpush.msra.mxu0 %v434
        %1321 = vmatpush.msra.mxu0 %v426
        %1322 = vmatpush.msra.mxu0 %v418
        %1323 = vmatpush.msra.mxu0 %v410
        %1324 = vmatpush.msra.mxu0 %v402
        %1325 = vmatpush.msra.mxu0 %v394
        %1326 = vmatpush.msra.mxu0 %v386
        %1327 = vmatmul.f32.gmra.mxu0 %v377
        %v1328 = vpop.f32.mrf.mxu0
        %v1329 = vadd.f32 %v900, %v1328
        %1330 = vdwg.mxu0
        %1331 = vmatpush.msra.mxu0 %v634
        %1332 = vmatpush.msra.mxu0 %v626
        %1333 = vmatpush.msra.mxu0 %v618
        %1334 = vmatpush.msra.mxu0 %v610
        %1335 = vmatpush.msra.mxu0 %v602
        %1336 = vmatpush.msra.mxu0 %v594
        %1337 = vmatpush.msra.mxu0 %v586
        %1338 = vmatpush.msra.mxu0 %v578
        %1339 = vmatpush.msra.mxu0 %v570
        %1340 = vmatpush.msra.mxu0 %v562
        %1341 = vmatpush.msra.mxu0 %v554
        %1342 = vmatpush.msra.mxu0 %v546
        %1343 = vmatpush.msra.mxu0 %v538
        %1344 = vmatpush.msra.mxu0 %v530
        %1345 = vmatpush.msra.mxu0 %v522
        %1346 = vmatpush.msra.mxu0 %v514
        %1347 = vmatmul.f32.gmra.mxu0 %v378
        %v1348 = vpop.f32.mrf.mxu0
        %v1349 = vadd.f32 %v1329, %v1348
        %1350 = vdwg.mxu0
        %1351 = vmatpush.msra.mxu0 %v762
        %1352 = vmatpush.msra.mxu0 %v754
        %1353 = vmatpush.msra.mxu0 %v746
        %1354 = vmatpush.msra.mxu0 %v738
        %1355 = vmatpush.msra.mxu0 %v730
        %1356 = vmatpush.msra.mxu0 %v722
        %1357 = vmatpush.msra.mxu0 %v714
        %1358 = vmatpush.msra.mxu0 %v706
        %1359 = vmatpush.msra.mxu0 %v698
        %1360 = vmatpush.msra.mxu0 %v690
        %1361 = vmatpush.msra.mxu0 %v682
        %1362 = vmatpush.msra.mxu0 %v674
        %1363 = vmatpush.msra.mxu0 %v666
        %1364 = vmatpush.msra.mxu0 %v658
        %1365 = vmatpush.msra.mxu0 %v650
        %1366 = vmatpush.msra.mxu0 %v642
        %1367 = vmatmul.f32.gmra.mxu0 %v379
        %v1368 = vpop.f32.mrf.mxu0
        %v1369 = vadd.f32 %v1349, %v1368
        %1370 = vdwg.mxu0
        %1371 = vmatpush.msra.mxu0 %v890
        %1372 = vmatpush.msra.mxu0 %v882
        %1373 = vmatpush.msra.mxu0 %v874
        %1374 = vmatpush.msra.mxu0 %v866
        %1375 = vmatpush.msra.mxu0 %v858
        %1376 = vmatpush.msra.mxu0 %v850
        %1377 = vmatpush.msra.mxu0 %v842
        %1378 = vmatpush.msra.mxu0 %v834
        %1379 = vmatpush.msra.mxu0 %v826
        %1380 = vmatpush.msra.mxu0 %v818
        %1381 = vmatpush.msra.mxu0 %v810
        %1382 = vmatpush.msra.mxu0 %v802
        %1383 = vmatpush.msra.mxu0 %v794
        %1384 = vmatpush.msra.mxu0 %v786
        %1385 = vmatpush.msra.mxu0 %v778
        %1386 = vmatpush.msra.mxu0 %v770
        %1387 = vmatmul.f32.gmra.mxu0 %v380
        %v1388 = vpop.f32.mrf.mxu0
        %v1389 = vadd.f32 %v1369, %v1388
        %1390 = vdwg.mxu0
        %1391 = vmatpush.msra.mxu0 %v507
        %1392 = vmatpush.msra.mxu0 %v499
        %1393 = vmatpush.msra.mxu0 %v491
        %1394 = vmatpush.msra.mxu0 %v483
        %1395 = vmatpush.msra.mxu0 %v475
        %1396 = vmatpush.msra.mxu0 %v467
        %1397 = vmatpush.msra.mxu0 %v459
        %1398 = vmatpush.msra.mxu0 %v451
        %1399 = vmatpush.msra.mxu0 %v443
        %1400 = vmatpush.msra.mxu0 %v435
        %1401 = vmatpush.msra.mxu0 %v427
        %1402 = vmatpush.msra.mxu0 %v419
        %1403 = vmatpush.msra.mxu0 %v411
        %1404 = vmatpush.msra.mxu0 %v403
        %1405 = vmatpush.msra.mxu0 %v395
        %1406 = vmatpush.msra.mxu0 %v387
        %1407 = vmatmul.f32.gmra.mxu0 %v377
        %v1408 = vpop.f32.mrf.mxu0
        %v1409 = vadd.f32 %v901, %v1408
        %1410 = vdwg.mxu0
        %1411 = vmatpush.msra.mxu0 %v635
        %1412 = vmatpush.msra.mxu0 %v627
        %1413 = vmatpush.msra.mxu0 %v619
        %1414 = vmatpush.msra.mxu0 %v611
        %1415 = vmatpush.msra.mxu0 %v603
        %1416 = vmatpush.msra.mxu0 %v595
        %1417 = vmatpush.msra.mxu0 %v587
        %1418 = vmatpush.msra.mxu0 %v579
        %1419 = vmatpush.msra.mxu0 %v571
        %1420 = vmatpush.msra.mxu0 %v563
        %1421 = vmatpush.msra.mxu0 %v555
        %1422 = vmatpush.msra.mxu0 %v547
        %1423 = vmatpush.msra.mxu0 %v539
        %1424 = vmatpush.msra.mxu0 %v531
        %1425 = vmatpush.msra.mxu0 %v523
        %1426 = vmatpush.msra.mxu0 %v515
        %1427 = vmatmul.f32.gmra.mxu0 %v378
        %v1428 = vpop.f32.mrf.mxu0
        %v1429 = vadd.f32 %v1409, %v1428
        %1430 = vdwg.mxu0
        %1431 = vmatpush.msra.mxu0 %v763
        %1432 = vmatpush.msra.mxu0 %v755
        %1433 = vmatpush.msra.mxu0 %v747
        %1434 = vmatpush.msra.mxu0 %v739
        %1435 = vmatpush.msra.mxu0 %v731
        %1436 = vmatpush.msra.mxu0 %v723
        %1437 = vmatpush.msra.mxu0 %v715
        %1438 = vmatpush.msra.mxu0 %v707
        %1439 = vmatpush.msra.mxu0 %v699
        %1440 = vmatpush.msra.mxu0 %v691
        %1441 = vmatpush.msra.mxu0 %v683
        %1442 = vmatpush.msra.mxu0 %v675
        %1443 = vmatpush.msra.mxu0 %v667
        %1444 = vmatpush.msra.mxu0 %v659
        %1445 = vmatpush.msra.mxu0 %v651
        %1446 = vmatpush.msra.mxu0 %v643
        %1447 = vmatmul.f32.gmra.mxu0 %v379
        %v1448 = vpop.f32.mrf.mxu0
        %v1449 = vadd.f32 %v1429, %v1448
        %1450 = vdwg.mxu0
        %1451 = vmatpush.msra.mxu0 %v891
        %1452 = vmatpush.msra.mxu0 %v883
        %1453 = vmatpush.msra.mxu0 %v875
        %1454 = vmatpush.msra.mxu0 %v867
        %1455 = vmatpush.msra.mxu0 %v859
        %1456 = vmatpush.msra.mxu0 %v851
        %1457 = vmatpush.msra.mxu0 %v843
        %1458 = vmatpush.msra.mxu0 %v835
        %1459 = vmatpush.msra.mxu0 %v827
        %1460 = vmatpush.msra.mxu0 %v819
        %1461 = vmatpush.msra.mxu0 %v811
        %1462 = vmatpush.msra.mxu0 %v803
        %1463 = vmatpush.msra.mxu0 %v795
        %1464 = vmatpush.msra.mxu0 %v787
        %1465 = vmatpush.msra.mxu0 %v779
        %1466 = vmatpush.msra.mxu0 %v771
        %1467 = vmatmul.f32.gmra.mxu0 %v380
        %v1468 = vpop.f32.mrf.mxu0
        %v1469 = vadd.f32 %v1449, %v1468
        %1470 = vdwg.mxu0
        %1471 = vmatpush.msra.mxu0 %v508
        %1472 = vmatpush.msra.mxu0 %v500
        %1473 = vmatpush.msra.mxu0 %v492
        %1474 = vmatpush.msra.mxu0 %v484
        %1475 = vmatpush.msra.mxu0 %v476
        %1476 = vmatpush.msra.mxu0 %v468
        %1477 = vmatpush.msra.mxu0 %v460
        %1478 = vmatpush.msra.mxu0 %v452
        %1479 = vmatpush.msra.mxu0 %v444
        %1480 = vmatpush.msra.mxu0 %v436
        %1481 = vmatpush.msra.mxu0 %v428
        %1482 = vmatpush.msra.mxu0 %v420
        %1483 = vmatpush.msra.mxu0 %v412
        %1484 = vmatpush.msra.mxu0 %v404
        %1485 = vmatpush.msra.mxu0 %v396
        %1486 = vmatpush.msra.mxu0 %v388
        %1487 = vmatmul.f32.gmra.mxu0 %v377
        %v1488 = vpop.f32.mrf.mxu0
        %v1489 = vadd.f32 %v902, %v1488
        %1490 = vdwg.mxu0
        %1491 = vmatpush.msra.mxu0 %v636
        %1492 = vmatpush.msra.mxu0 %v628
        %1493 = vmatpush.msra.mxu0 %v620
        %1494 = vmatpush.msra.mxu0 %v612
        %1495 = vmatpush.msra.mxu0 %v604
        %1496 = vmatpush.msra.mxu0 %v596
        %1497 = vmatpush.msra.mxu0 %v588
        %1498 = vmatpush.msra.mxu0 %v580
        %1499 = vmatpush.msra.mxu0 %v572
        %1500 = vmatpush.msra.mxu0 %v564
        %1501 = vmatpush.msra.mxu0 %v556
        %1502 = vmatpush.msra.mxu0 %v548
        %1503 = vmatpush.msra.mxu0 %v540
        %1504 = vmatpush.msra.mxu0 %v532
        %1505 = vmatpush.msra.mxu0 %v524
        %1506 = vmatpush.msra.mxu0 %v516
        %1507 = vmatmul.f32.gmra.mxu0 %v378
        %v1508 = vpop.f32.mrf.mxu0
        %v1509 = vadd.f32 %v1489, %v1508
        %1510 = vdwg.mxu0
        %1511 = vmatpush.msra.mxu0 %v764
        %1512 = vmatpush.msra.mxu0 %v756
        %1513 = vmatpush.msra.mxu0 %v748
        %1514 = vmatpush.msra.mxu0 %v740
        %1515 = vmatpush.msra.mxu0 %v732
        %1516 = vmatpush.msra.mxu0 %v724
        %1517 = vmatpush.msra.mxu0 %v716
        %1518 = vmatpush.msra.mxu0 %v708
        %1519 = vmatpush.msra.mxu0 %v700
        %1520 = vmatpush.msra.mxu0 %v692
        %1521 = vmatpush.msra.mxu0 %v684
        %1522 = vmatpush.msra.mxu0 %v676
        %1523 = vmatpush.msra.mxu0 %v668
        %1524 = vmatpush.msra.mxu0 %v660
        %1525 = vmatpush.msra.mxu0 %v652
        %1526 = vmatpush.msra.mxu0 %v644
        %1527 = vmatmul.f32.gmra.mxu0 %v379
        %v1528 = vpop.f32.mrf.mxu0
        %v1529 = vadd.f32 %v1509, %v1528
        %1530 = vdwg.mxu0
        %1531 = vmatpush.msra.mxu0 %v892
        %1532 = vmatpush.msra.mxu0 %v884
        %1533 = vmatpush.msra.mxu0 %v876
        %1534 = vmatpush.msra.mxu0 %v868
        %1535 = vmatpush.msra.mxu0 %v860
        %1536 = vmatpush.msra.mxu0 %v852
        %1537 = vmatpush.msra.mxu0 %v844
        %1538 = vmatpush.msra.mxu0 %v836
        %1539 = vmatpush.msra.mxu0 %v828
        %1540 = vmatpush.msra.mxu0 %v820
        %1541 = vmatpush.msra.mxu0 %v812
        %1542 = vmatpush.msra.mxu0 %v804
        %1543 = vmatpush.msra.mxu0 %v796
        %1544 = vmatpush.msra.mxu0 %v788
        %1545 = vmatpush.msra.mxu0 %v780
        %1546 = vmatpush.msra.mxu0 %v772
        %1547 = vmatmul.f32.gmra.mxu0 %v380
        %v1548 = vpop.f32.mrf.mxu0
        %v1549 = vadd.f32 %v1529, %v1548
        %1550 = vdwg.mxu0
        %v1551 = vmax.f32 %v989, 0.0
        %v1552 = vmax.f32 %v1069, 0.0
        %v1553 = vmax.f32 %v1149, 0.0
        %v1554 = vmax.f32 %v1229, 0.0
        %v1555 = vmax.f32 %v1309, 0.0
        %v1556 = vmax.f32 %v1389, 0.0
        %v1557 = vmax.f32 %v1469, 0.0
        %v1558 = vmax.f32 %v1549, 0.0
        %v1559 = vld [vmem:[#allocation2] sm:$0xff]
        %v1560 = vld [vmem:[#allocation2 + $0x8] sm:$0xff]
        %v1561 = vld [vmem:[#allocation2 + $0x10] sm:$0xff]
        %v1562 = vld [vmem:[#allocation2 + $0x18] sm:$0xff]
        %v1563 = vld [vmem:[%s328] sm:$0xff]
        %v1564 = vld [vmem:[%s328 + $0x8] sm:$0xff]
        %v1565 = vld [vmem:[%s328 + $0x10] sm:$0xff]
        %v1566 = vld [vmem:[%s328 + $0x18] sm:$0xff]
        %v1567 = vld [vmem:[%s328 + $0x20] sm:$0xff]
        %v1568 = vld [vmem:[%s328 + $0x28] sm:$0xff]
        %v1569 = vld [vmem:[%s328 + $0x30] sm:$0xff]
        %v1570 = vld [vmem:[%s328 + $0x38] sm:$0xff]
        %v1571 = vld [vmem:[%s328 + $0x40] sm:$0xff]
        %v1572 = vld [vmem:[%s328 + $0x48] sm:$0xff]
        %v1573 = vld [vmem:[%s328 + $0x50] sm:$0xff]
        %v1574 = vld [vmem:[%s328 + $0x58] sm:$0xff]
        %v1575 = vld [vmem:[%s328 + $0x60] sm:$0xff]
        %v1576 = vld [vmem:[%s328 + $0x68] sm:$0xff]
        %v1577 = vld [vmem:[%s328 + $0x70] sm:$0xff]
        %v1578 = vld [vmem:[%s328 + $0x78] sm:$0xff]
        %v1579 = vld [vmem:[%s328 + $0x80] sm:$0xff]
        %v1580 = vld [vmem:[%s328 + $0x88] sm:$0xff]
        %v1581 = vld [vmem:[%s328 + $0x90] sm:$0xff]
        %v1582 = vld [vmem:[%s328 + $0x98] sm:$0xff]
        %v1583 = vld [vmem:[%s328 + $0xa0] sm:$0xff]
        %v1584 = vld [vmem:[%s328 + $0xa8] sm:$0xff]
        %v1585 = vld [vmem:[%s328 + $0xb0] sm:$0xff]
        %v1586 = vld [vmem:[%s328 + $0xb8] sm:$0xff]
        %v1587 = vld [vmem:[%s328 + $0xc0] sm:$0xff]
        %v1588 = vld [vmem:[%s328 + $0xc8] sm:$0xff]
        %v1589 = vld [vmem:[%s328 + $0xd0] sm:$0xff]
        %v1590 = vld [vmem:[%s328 + $0xd8] sm:$0xff]
        %v1591 = vld [vmem:[%s328 + $0xe0] sm:$0xff]
        %v1592 = vld [vmem:[%s328 + $0xe8] sm:$0xff]
        %v1593 = vld [vmem:[%s328 + $0xf0] sm:$0xff]
        %v1594 = vld [vmem:[%s328 + $0xf8] sm:$0xff]
        %v1595 = vld [vmem:[%s328 + $0x100] sm:$0xff]
        %v1596 = vld [vmem:[%s328 + $0x108] sm:$0xff]
        %v1597 = vld [vmem:[%s328 + $0x110] sm:$0xff]
        %v1598 = vld [vmem:[%s328 + $0x118] sm:$0xff]
        %v1599 = vld [vmem:[%s328 + $0x120] sm:$0xff]
        %v1600 = vld [vmem:[%s328 + $0x128] sm:$0xff]
        %v1601 = vld [vmem:[%s328 + $0x130] sm:$0xff]
        %v1602 = vld [vmem:[%s328 + $0x138] sm:$0xff]
        %v1603 = vld [vmem:[%s328 + $0x140] sm:$0xff]
        %v1604 = vld [vmem:[%s328 + $0x148] sm:$0xff]
        %v1605 = vld [vmem:[%s328 + $0x150] sm:$0xff]
        %v1606 = vld [vmem:[%s328 + $0x158] sm:$0xff]
        %v1607 = vld [vmem:[%s328 + $0x160] sm:$0xff]
        %v1608 = vld [vmem:[%s328 + $0x168] sm:$0xff]
        %v1609 = vld [vmem:[%s328 + $0x170] sm:$0xff]
        %v1610 = vld [vmem:[%s328 + $0x178] sm:$0xff]
        %v1611 = vld [vmem:[%s328 + $0x180] sm:$0xff]
        %v1612 = vld [vmem:[%s328 + $0x188] sm:$0xff]
        %v1613 = vld [vmem:[%s328 + $0x190] sm:$0xff]
        %v1614 = vld [vmem:[%s328 + $0x198] sm:$0xff]
        %v1615 = vld [vmem:[%s328 + $0x1a0] sm:$0xff]
        %v1616 = vld [vmem:[%s328 + $0x1a8] sm:$0xff]
        %v1617 = vld [vmem:[%s328 + $0x1b0] sm:$0xff]
        %v1618 = vld [vmem:[%s328 + $0x1b8] sm:$0xff]
        %v1619 = vld [vmem:[%s328 + $0x1c0] sm:$0xff]
        %v1620 = vld [vmem:[%s328 + $0x1c8] sm:$0xff]
        %v1621 = vld [vmem:[%s328 + $0x1d0] sm:$0xff]
        %v1622 = vld [vmem:[%s328 + $0x1d8] sm:$0xff]
        %v1623 = vld [vmem:[%s328 + $0x1e0] sm:$0xff]
        %v1624 = vld [vmem:[%s328 + $0x1e8] sm:$0xff]
        %v1625 = vld [vmem:[%s328 + $0x1f0] sm:$0xff]
        %v1626 = vld [vmem:[%s328 + $0x1f8] sm:$0xff]
        %v1627 = vld [vmem:[%s328 + $0x200] sm:$0xff]
        %v1628 = vld [vmem:[%s328 + $0x208] sm:$0xff]
        %v1629 = vld [vmem:[%s328 + $0x210] sm:$0xff]
        %v1630 = vld [vmem:[%s328 + $0x218] sm:$0xff]
        %v1631 = vld [vmem:[%s328 + $0x220] sm:$0xff]
        %v1632 = vld [vmem:[%s328 + $0x228] sm:$0xff]
        %v1633 = vld [vmem:[%s328 + $0x230] sm:$0xff]
        %v1634 = vld [vmem:[%s328 + $0x238] sm:$0xff]
        %v1635 = vld [vmem:[%s328 + $0x240] sm:$0xff]
        %v1636 = vld [vmem:[%s328 + $0x248] sm:$0xff]
        %v1637 = vld [vmem:[%s328 + $0x250] sm:$0xff]
        %v1638 = vld [vmem:[%s328 + $0x258] sm:$0xff]
        %v1639 = vld [vmem:[%s328 + $0x260] sm:$0xff]
        %v1640 = vld [vmem:[%s328 + $0x268] sm:$0xff]
        %v1641 = vld [vmem:[%s328 + $0x270] sm:$0xff]
        %v1642 = vld [vmem:[%s328 + $0x278] sm:$0xff]
        %v1643 = vld [vmem:[%s328 + $0x280] sm:$0xff]
        %v1644 = vld [vmem:[%s328 + $0x288] sm:$0xff]
        %v1645 = vld [vmem:[%s328 + $0x290] sm:$0xff]
        %v1646 = vld [vmem:[%s328 + $0x298] sm:$0xff]
        %v1647 = vld [vmem:[%s328 + $0x2a0] sm:$0xff]
        %v1648 = vld [vmem:[%s328 + $0x2a8] sm:$0xff]
        %v1649 = vld [vmem:[%s328 + $0x2b0] sm:$0xff]
        %v1650 = vld [vmem:[%s328 + $0x2b8] sm:$0xff]
        %v1651 = vld [vmem:[%s328 + $0x2c0] sm:$0xff]
        %v1652 = vld [vmem:[%s328 + $0x2c8] sm:$0xff]
        %v1653 = vld [vmem:[%s328 + $0x2d0] sm:$0xff]
        %v1654 = vld [vmem:[%s328 + $0x2d8] sm:$0xff]
        %v1655 = vld [vmem:[%s328 + $0x2e0] sm:$0xff]
        %v1656 = vld [vmem:[%s328 + $0x2e8] sm:$0xff]
        %v1657 = vld [vmem:[%s328 + $0x2f0] sm:$0xff]
        %v1658 = vld [vmem:[%s328 + $0x2f8] sm:$0xff]
        %v1659 = vld [vmem:[%s328 + $0x300] sm:$0xff]
        %v1660 = vld [vmem:[%s328 + $0x308] sm:$0xff]
        %v1661 = vld [vmem:[%s328 + $0x310] sm:$0xff]
        %v1662 = vld [vmem:[%s328 + $0x318] sm:$0xff]
        %v1663 = vld [vmem:[%s328 + $0x320] sm:$0xff]
        %v1664 = vld [vmem:[%s328 + $0x328] sm:$0xff]
        %v1665 = vld [vmem:[%s328 + $0x330] sm:$0xff]
        %v1666 = vld [vmem:[%s328 + $0x338] sm:$0xff]
        %v1667 = vld [vmem:[%s328 + $0x340] sm:$0xff]
        %v1668 = vld [vmem:[%s328 + $0x348] sm:$0xff]
        %v1669 = vld [vmem:[%s328 + $0x350] sm:$0xff]
        %v1670 = vld [vmem:[%s328 + $0x358] sm:$0xff]
        %v1671 = vld [vmem:[%s328 + $0x360] sm:$0xff]
        %v1672 = vld [vmem:[%s328 + $0x368] sm:$0xff]
        %v1673 = vld [vmem:[%s328 + $0x370] sm:$0xff]
        %v1674 = vld [vmem:[%s328 + $0x378] sm:$0xff]
        %v1675 = vld [vmem:[%s328 + $0x380] sm:$0xff]
        %v1676 = vld [vmem:[%s328 + $0x388] sm:$0xff]
        %v1677 = vld [vmem:[%s328 + $0x390] sm:$0xff]
        %v1678 = vld [vmem:[%s328 + $0x398] sm:$0xff]
        %v1679 = vld [vmem:[%s328 + $0x3a0] sm:$0xff]
        %v1680 = vld [vmem:[%s328 + $0x3a8] sm:$0xff]
        %v1681 = vld [vmem:[%s328 + $0x3b0] sm:$0xff]
        %v1682 = vld [vmem:[%s328 + $0x3b8] sm:$0xff]
        %v1683 = vld [vmem:[%s328 + $0x3c0] sm:$0xff]
        %v1684 = vld [vmem:[%s328 + $0x3c8] sm:$0xff]
        %v1685 = vld [vmem:[%s328 + $0x3d0] sm:$0xff]
        %v1686 = vld [vmem:[%s328 + $0x3d8] sm:$0xff]
        %v1687 = vld [vmem:[%s328 + $0x3e0] sm:$0xff]
        %v1688 = vld [vmem:[%s328 + $0x3e8] sm:$0xff]
        %v1689 = vld [vmem:[%s328 + $0x3f0] sm:$0xff]
        %v1690 = vld [vmem:[%s328 + $0x3f8] sm:$0xff]
        %v1691 = vld [vmem:[%s328 + $0x400] sm:$0xff]
        %v1692 = vld [vmem:[%s328 + $0x408] sm:$0xff]
        %v1693 = vld [vmem:[%s328 + $0x410] sm:$0xff]
        %v1694 = vld [vmem:[%s328 + $0x418] sm:$0xff]
        %v1695 = vld [vmem:[%s328 + $0x420] sm:$0xff]
        %v1696 = vld [vmem:[%s328 + $0x428] sm:$0xff]
        %v1697 = vld [vmem:[%s328 + $0x430] sm:$0xff]
        %v1698 = vld [vmem:[%s328 + $0x438] sm:$0xff]
        %v1699 = vld [vmem:[%s328 + $0x440] sm:$0xff]
        %v1700 = vld [vmem:[%s328 + $0x448] sm:$0xff]
        %v1701 = vld [vmem:[%s328 + $0x450] sm:$0xff]
        %v1702 = vld [vmem:[%s328 + $0x458] sm:$0xff]
        %v1703 = vld [vmem:[%s328 + $0x460] sm:$0xff]
        %v1704 = vld [vmem:[%s328 + $0x468] sm:$0xff]
        %v1705 = vld [vmem:[%s328 + $0x470] sm:$0xff]
        %v1706 = vld [vmem:[%s328 + $0x478] sm:$0xff]
        %v1707 = vld [vmem:[%s328 + $0x480] sm:$0xff]
        %v1708 = vld [vmem:[%s328 + $0x488] sm:$0xff]
        %v1709 = vld [vmem:[%s328 + $0x490] sm:$0xff]
        %v1710 = vld [vmem:[%s328 + $0x498] sm:$0xff]
        %v1711 = vld [vmem:[%s328 + $0x4a0] sm:$0xff]
        %v1712 = vld [vmem:[%s328 + $0x4a8] sm:$0xff]
        %v1713 = vld [vmem:[%s328 + $0x4b0] sm:$0xff]
        %v1714 = vld [vmem:[%s328 + $0x4b8] sm:$0xff]
        %v1715 = vld [vmem:[%s328 + $0x4c0] sm:$0xff]
        %v1716 = vld [vmem:[%s328 + $0x4c8] sm:$0xff]
        %v1717 = vld [vmem:[%s328 + $0x4d0] sm:$0xff]
        %v1718 = vld [vmem:[%s328 + $0x4d8] sm:$0xff]
        %v1719 = vld [vmem:[%s328 + $0x4e0] sm:$0xff]
        %v1720 = vld [vmem:[%s328 + $0x4e8] sm:$0xff]
        %v1721 = vld [vmem:[%s328 + $0x4f0] sm:$0xff]
        %v1722 = vld [vmem:[%s328 + $0x4f8] sm:$0xff]
        %v1723 = vld [vmem:[%s328 + $0x500] sm:$0xff]
        %v1724 = vld [vmem:[%s328 + $0x508] sm:$0xff]
        %v1725 = vld [vmem:[%s328 + $0x510] sm:$0xff]
        %v1726 = vld [vmem:[%s328 + $0x518] sm:$0xff]
        %v1727 = vld [vmem:[%s328 + $0x520] sm:$0xff]
        %v1728 = vld [vmem:[%s328 + $0x528] sm:$0xff]
        %v1729 = vld [vmem:[%s328 + $0x530] sm:$0xff]
        %v1730 = vld [vmem:[%s328 + $0x538] sm:$0xff]
        %v1731 = vld [vmem:[%s328 + $0x540] sm:$0xff]
        %v1732 = vld [vmem:[%s328 + $0x548] sm:$0xff]
        %v1733 = vld [vmem:[%s328 + $0x550] sm:$0xff]
        %v1734 = vld [vmem:[%s328 + $0x558] sm:$0xff]
        %v1735 = vld [vmem:[%s328 + $0x560] sm:$0xff]
        %v1736 = vld [vmem:[%s328 + $0x568] sm:$0xff]
        %v1737 = vld [vmem:[%s328 + $0x570] sm:$0xff]
        %v1738 = vld [vmem:[%s328 + $0x578] sm:$0xff]
        %v1739 = vld [vmem:[%s328 + $0x580] sm:$0xff]
        %v1740 = vld [vmem:[%s328 + $0x588] sm:$0xff]
        %v1741 = vld [vmem:[%s328 + $0x590] sm:$0xff]
        %v1742 = vld [vmem:[%s328 + $0x598] sm:$0xff]
        %v1743 = vld [vmem:[%s328 + $0x5a0] sm:$0xff]
        %v1744 = vld [vmem:[%s328 + $0x5a8] sm:$0xff]
        %v1745 = vld [vmem:[%s328 + $0x5b0] sm:$0xff]
        %v1746 = vld [vmem:[%s328 + $0x5b8] sm:$0xff]
        %v1747 = vld [vmem:[%s328 + $0x5c0] sm:$0xff]
        %v1748 = vld [vmem:[%s328 + $0x5c8] sm:$0xff]
        %v1749 = vld [vmem:[%s328 + $0x5d0] sm:$0xff]
        %v1750 = vld [vmem:[%s328 + $0x5d8] sm:$0xff]
        %v1751 = vld [vmem:[%s328 + $0x5e0] sm:$0xff]
        %v1752 = vld [vmem:[%s328 + $0x5e8] sm:$0xff]
        %v1753 = vld [vmem:[%s328 + $0x5f0] sm:$0xff]
        %v1754 = vld [vmem:[%s328 + $0x5f8] sm:$0xff]
        %v1755 = vld [vmem:[%s328 + $0x600] sm:$0xff]
        %v1756 = vld [vmem:[%s328 + $0x608] sm:$0xff]
        %v1757 = vld [vmem:[%s328 + $0x610] sm:$0xff]
        %v1758 = vld [vmem:[%s328 + $0x618] sm:$0xff]
        %v1759 = vld [vmem:[%s328 + $0x620] sm:$0xff]
        %v1760 = vld [vmem:[%s328 + $0x628] sm:$0xff]
        %v1761 = vld [vmem:[%s328 + $0x630] sm:$0xff]
        %v1762 = vld [vmem:[%s328 + $0x638] sm:$0xff]
        %v1763 = vld [vmem:[%s328 + $0x640] sm:$0xff]
        %v1764 = vld [vmem:[%s328 + $0x648] sm:$0xff]
        %v1765 = vld [vmem:[%s328 + $0x650] sm:$0xff]
        %v1766 = vld [vmem:[%s328 + $0x658] sm:$0xff]
        %v1767 = vld [vmem:[%s328 + $0x660] sm:$0xff]
        %v1768 = vld [vmem:[%s328 + $0x668] sm:$0xff]
        %v1769 = vld [vmem:[%s328 + $0x670] sm:$0xff]
        %v1770 = vld [vmem:[%s328 + $0x678] sm:$0xff]
        %v1771 = vld [vmem:[%s328 + $0x680] sm:$0xff]
        %v1772 = vld [vmem:[%s328 + $0x688] sm:$0xff]
        %v1773 = vld [vmem:[%s328 + $0x690] sm:$0xff]
        %v1774 = vld [vmem:[%s328 + $0x698] sm:$0xff]
        %v1775 = vld [vmem:[%s328 + $0x6a0] sm:$0xff]
        %v1776 = vld [vmem:[%s328 + $0x6a8] sm:$0xff]
        %v1777 = vld [vmem:[%s328 + $0x6b0] sm:$0xff]
        %v1778 = vld [vmem:[%s328 + $0x6b8] sm:$0xff]
        %v1779 = vld [vmem:[%s328 + $0x6c0] sm:$0xff]
        %v1780 = vld [vmem:[%s328 + $0x6c8] sm:$0xff]
        %v1781 = vld [vmem:[%s328 + $0x6d0] sm:$0xff]
        %v1782 = vld [vmem:[%s328 + $0x6d8] sm:$0xff]
        %v1783 = vld [vmem:[%s328 + $0x6e0] sm:$0xff]
        %v1784 = vld [vmem:[%s328 + $0x6e8] sm:$0xff]
        %v1785 = vld [vmem:[%s328 + $0x6f0] sm:$0xff]
        %v1786 = vld [vmem:[%s328 + $0x6f8] sm:$0xff]
        %v1787 = vld [vmem:[%s328 + $0x700] sm:$0xff]
        %v1788 = vld [vmem:[%s328 + $0x708] sm:$0xff]
        %v1789 = vld [vmem:[%s328 + $0x710] sm:$0xff]
        %v1790 = vld [vmem:[%s328 + $0x718] sm:$0xff]
        %v1791 = vld [vmem:[%s328 + $0x720] sm:$0xff]
        %v1792 = vld [vmem:[%s328 + $0x728] sm:$0xff]
        %v1793 = vld [vmem:[%s328 + $0x730] sm:$0xff]
        %v1794 = vld [vmem:[%s328 + $0x738] sm:$0xff]
        %v1795 = vld [vmem:[%s328 + $0x740] sm:$0xff]
        %v1796 = vld [vmem:[%s328 + $0x748] sm:$0xff]
        %v1797 = vld [vmem:[%s328 + $0x750] sm:$0xff]
        %v1798 = vld [vmem:[%s328 + $0x758] sm:$0xff]
        %v1799 = vld [vmem:[%s328 + $0x760] sm:$0xff]
        %v1800 = vld [vmem:[%s328 + $0x768] sm:$0xff]
        %v1801 = vld [vmem:[%s328 + $0x770] sm:$0xff]
        %v1802 = vld [vmem:[%s328 + $0x778] sm:$0xff]
        %v1803 = vld [vmem:[%s328 + $0x780] sm:$0xff]
        %v1804 = vld [vmem:[%s328 + $0x788] sm:$0xff]
        %v1805 = vld [vmem:[%s328 + $0x790] sm:$0xff]
        %v1806 = vld [vmem:[%s328 + $0x798] sm:$0xff]
        %v1807 = vld [vmem:[%s328 + $0x7a0] sm:$0xff]
        %v1808 = vld [vmem:[%s328 + $0x7a8] sm:$0xff]
        %v1809 = vld [vmem:[%s328 + $0x7b0] sm:$0xff]
        %v1810 = vld [vmem:[%s328 + $0x7b8] sm:$0xff]
        %v1811 = vld [vmem:[%s328 + $0x7c0] sm:$0xff]
        %v1812 = vld [vmem:[%s328 + $0x7c8] sm:$0xff]
        %v1813 = vld [vmem:[%s328 + $0x7d0] sm:$0xff]
        %v1814 = vld [vmem:[%s328 + $0x7d8] sm:$0xff]
        %v1815 = vld [vmem:[%s328 + $0x7e0] sm:$0xff]
        %v1816 = vld [vmem:[%s328 + $0x7e8] sm:$0xff]
        %v1817 = vld [vmem:[%s328 + $0x7f0] sm:$0xff]
        %v1818 = vld [vmem:[%s328 + $0x7f8] sm:$0xff]
        %v1819 = vld [vmem:[%s328 + $0x800] sm:$0xff]
        %v1820 = vld [vmem:[%s328 + $0x808] sm:$0xff]
        %v1821 = vld [vmem:[%s328 + $0x810] sm:$0xff]
        %v1822 = vld [vmem:[%s328 + $0x818] sm:$0xff]
        %v1823 = vld [vmem:[%s328 + $0x820] sm:$0xff]
        %v1824 = vld [vmem:[%s328 + $0x828] sm:$0xff]
        %v1825 = vld [vmem:[%s328 + $0x830] sm:$0xff]
        %v1826 = vld [vmem:[%s328 + $0x838] sm:$0xff]
        %v1827 = vld [vmem:[%s328 + $0x840] sm:$0xff]
        %v1828 = vld [vmem:[%s328 + $0x848] sm:$0xff]
        %v1829 = vld [vmem:[%s328 + $0x850] sm:$0xff]
        %v1830 = vld [vmem:[%s328 + $0x858] sm:$0xff]
        %v1831 = vld [vmem:[%s328 + $0x860] sm:$0xff]
        %v1832 = vld [vmem:[%s328 + $0x868] sm:$0xff]
        %v1833 = vld [vmem:[%s328 + $0x870] sm:$0xff]
        %v1834 = vld [vmem:[%s328 + $0x878] sm:$0xff]
        %v1835 = vld [vmem:[%s328 + $0x880] sm:$0xff]
        %v1836 = vld [vmem:[%s328 + $0x888] sm:$0xff]
        %v1837 = vld [vmem:[%s328 + $0x890] sm:$0xff]
        %v1838 = vld [vmem:[%s328 + $0x898] sm:$0xff]
        %v1839 = vld [vmem:[%s328 + $0x8a0] sm:$0xff]
        %v1840 = vld [vmem:[%s328 + $0x8a8] sm:$0xff]
        %v1841 = vld [vmem:[%s328 + $0x8b0] sm:$0xff]
        %v1842 = vld [vmem:[%s328 + $0x8b8] sm:$0xff]
        %v1843 = vld [vmem:[%s328 + $0x8c0] sm:$0xff]
        %v1844 = vld [vmem:[%s328 + $0x8c8] sm:$0xff]
        %v1845 = vld [vmem:[%s328 + $0x8d0] sm:$0xff]
        %v1846 = vld [vmem:[%s328 + $0x8d8] sm:$0xff]
        %v1847 = vld [vmem:[%s328 + $0x8e0] sm:$0xff]
        %v1848 = vld [vmem:[%s328 + $0x8e8] sm:$0xff]
        %v1849 = vld [vmem:[%s328 + $0x8f0] sm:$0xff]
        %v1850 = vld [vmem:[%s328 + $0x8f8] sm:$0xff]
        %v1851 = vld [vmem:[%s328 + $0x900] sm:$0xff]
        %v1852 = vld [vmem:[%s328 + $0x908] sm:$0xff]
        %v1853 = vld [vmem:[%s328 + $0x910] sm:$0xff]
        %v1854 = vld [vmem:[%s328 + $0x918] sm:$0xff]
        %v1855 = vld [vmem:[%s328 + $0x920] sm:$0xff]
        %v1856 = vld [vmem:[%s328 + $0x928] sm:$0xff]
        %v1857 = vld [vmem:[%s328 + $0x930] sm:$0xff]
        %v1858 = vld [vmem:[%s328 + $0x938] sm:$0xff]
        %v1859 = vld [vmem:[%s328 + $0x940] sm:$0xff]
        %v1860 = vld [vmem:[%s328 + $0x948] sm:$0xff]
        %v1861 = vld [vmem:[%s328 + $0x950] sm:$0xff]
        %v1862 = vld [vmem:[%s328 + $0x958] sm:$0xff]
        %v1863 = vld [vmem:[%s328 + $0x960] sm:$0xff]
        %v1864 = vld [vmem:[%s328 + $0x968] sm:$0xff]
        %v1865 = vld [vmem:[%s328 + $0x970] sm:$0xff]
        %v1866 = vld [vmem:[%s328 + $0x978] sm:$0xff]
        %v1867 = vld [vmem:[%s328 + $0x980] sm:$0xff]
        %v1868 = vld [vmem:[%s328 + $0x988] sm:$0xff]
        %v1869 = vld [vmem:[%s328 + $0x990] sm:$0xff]
        %v1870 = vld [vmem:[%s328 + $0x998] sm:$0xff]
        %v1871 = vld [vmem:[%s328 + $0x9a0] sm:$0xff]
        %v1872 = vld [vmem:[%s328 + $0x9a8] sm:$0xff]
        %v1873 = vld [vmem:[%s328 + $0x9b0] sm:$0xff]
        %v1874 = vld [vmem:[%s328 + $0x9b8] sm:$0xff]
        %v1875 = vld [vmem:[%s328 + $0x9c0] sm:$0xff]
        %v1876 = vld [vmem:[%s328 + $0x9c8] sm:$0xff]
        %v1877 = vld [vmem:[%s328 + $0x9d0] sm:$0xff]
        %v1878 = vld [vmem:[%s328 + $0x9d8] sm:$0xff]
        %v1879 = vld [vmem:[%s328 + $0x9e0] sm:$0xff]
        %v1880 = vld [vmem:[%s328 + $0x9e8] sm:$0xff]
        %v1881 = vld [vmem:[%s328 + $0x9f0] sm:$0xff]
        %v1882 = vld [vmem:[%s328 + $0x9f8] sm:$0xff]
        %v1883 = vld [vmem:[%s328 + $0xa00] sm:$0xff]
        %v1884 = vld [vmem:[%s328 + $0xa08] sm:$0xff]
        %v1885 = vld [vmem:[%s328 + $0xa10] sm:$0xff]
        %v1886 = vld [vmem:[%s328 + $0xa18] sm:$0xff]
        %v1887 = vld [vmem:[%s328 + $0xa20] sm:$0xff]
        %v1888 = vld [vmem:[%s328 + $0xa28] sm:$0xff]
        %v1889 = vld [vmem:[%s328 + $0xa30] sm:$0xff]
        %v1890 = vld [vmem:[%s328 + $0xa38] sm:$0xff]
        %v1891 = vld [vmem:[%s328 + $0xa40] sm:$0xff]
        %v1892 = vld [vmem:[%s328 + $0xa48] sm:$0xff]
        %v1893 = vld [vmem:[%s328 + $0xa50] sm:$0xff]
        %v1894 = vld [vmem:[%s328 + $0xa58] sm:$0xff]
        %v1895 = vld [vmem:[%s328 + $0xa60] sm:$0xff]
        %v1896 = vld [vmem:[%s328 + $0xa68] sm:$0xff]
        %v1897 = vld [vmem:[%s328 + $0xa70] sm:$0xff]
        %v1898 = vld [vmem:[%s328 + $0xa78] sm:$0xff]
        %v1899 = vld [vmem:[%s328 + $0xa80] sm:$0xff]
        %v1900 = vld [vmem:[%s328 + $0xa88] sm:$0xff]
        %v1901 = vld [vmem:[%s328 + $0xa90] sm:$0xff]
        %v1902 = vld [vmem:[%s328 + $0xa98] sm:$0xff]
        %v1903 = vld [vmem:[%s328 + $0xaa0] sm:$0xff]
        %v1904 = vld [vmem:[%s328 + $0xaa8] sm:$0xff]
        %v1905 = vld [vmem:[%s328 + $0xab0] sm:$0xff]
        %v1906 = vld [vmem:[%s328 + $0xab8] sm:$0xff]
        %v1907 = vld [vmem:[%s328 + $0xac0] sm:$0xff]
        %v1908 = vld [vmem:[%s328 + $0xac8] sm:$0xff]
        %v1909 = vld [vmem:[%s328 + $0xad0] sm:$0xff]
        %v1910 = vld [vmem:[%s328 + $0xad8] sm:$0xff]
        %v1911 = vld [vmem:[%s328 + $0xae0] sm:$0xff]
        %v1912 = vld [vmem:[%s328 + $0xae8] sm:$0xff]
        %v1913 = vld [vmem:[%s328 + $0xaf0] sm:$0xff]
        %v1914 = vld [vmem:[%s328 + $0xaf8] sm:$0xff]
        %v1915 = vld [vmem:[%s328 + $0xb00] sm:$0xff]
        %v1916 = vld [vmem:[%s328 + $0xb08] sm:$0xff]
        %v1917 = vld [vmem:[%s328 + $0xb10] sm:$0xff]
        %v1918 = vld [vmem:[%s328 + $0xb18] sm:$0xff]
        %v1919 = vld [vmem:[%s328 + $0xb20] sm:$0xff]
        %v1920 = vld [vmem:[%s328 + $0xb28] sm:$0xff]
        %v1921 = vld [vmem:[%s328 + $0xb30] sm:$0xff]
        %v1922 = vld [vmem:[%s328 + $0xb38] sm:$0xff]
        %v1923 = vld [vmem:[%s328 + $0xb40] sm:$0xff]
        %v1924 = vld [vmem:[%s328 + $0xb48] sm:$0xff]
        %v1925 = vld [vmem:[%s328 + $0xb50] sm:$0xff]
        %v1926 = vld [vmem:[%s328 + $0xb58] sm:$0xff]
        %v1927 = vld [vmem:[%s328 + $0xb60] sm:$0xff]
        %v1928 = vld [vmem:[%s328 + $0xb68] sm:$0xff]
        %v1929 = vld [vmem:[%s328 + $0xb70] sm:$0xff]
        %v1930 = vld [vmem:[%s328 + $0xb78] sm:$0xff]
        %v1931 = vld [vmem:[%s328 + $0xb80] sm:$0xff]
        %v1932 = vld [vmem:[%s328 + $0xb88] sm:$0xff]
        %v1933 = vld [vmem:[%s328 + $0xb90] sm:$0xff]
        %v1934 = vld [vmem:[%s328 + $0xb98] sm:$0xff]
        %v1935 = vld [vmem:[%s328 + $0xba0] sm:$0xff]
        %v1936 = vld [vmem:[%s328 + $0xba8] sm:$0xff]
        %v1937 = vld [vmem:[%s328 + $0xbb0] sm:$0xff]
        %v1938 = vld [vmem:[%s328 + $0xbb8] sm:$0xff]
        %v1939 = vld [vmem:[%s328 + $0xbc0] sm:$0xff]
        %v1940 = vld [vmem:[%s328 + $0xbc8] sm:$0xff]
        %v1941 = vld [vmem:[%s328 + $0xbd0] sm:$0xff]
        %v1942 = vld [vmem:[%s328 + $0xbd8] sm:$0xff]
        %v1943 = vld [vmem:[%s328 + $0xbe0] sm:$0xff]
        %v1944 = vld [vmem:[%s328 + $0xbe8] sm:$0xff]
        %v1945 = vld [vmem:[%s328 + $0xbf0] sm:$0xff]
        %v1946 = vld [vmem:[%s328 + $0xbf8] sm:$0xff]
        %v1947 = vld [vmem:[%s328 + $0xc00] sm:$0xff]
        %v1948 = vld [vmem:[%s328 + $0xc08] sm:$0xff]
        %v1949 = vld [vmem:[%s328 + $0xc10] sm:$0xff]
        %v1950 = vld [vmem:[%s328 + $0xc18] sm:$0xff]
        %v1951 = vld [vmem:[%s328 + $0xc20] sm:$0xff]
        %v1952 = vld [vmem:[%s328 + $0xc28] sm:$0xff]
        %v1953 = vld [vmem:[%s328 + $0xc30] sm:$0xff]
        %v1954 = vld [vmem:[%s328 + $0xc38] sm:$0xff]
        %v1955 = vld [vmem:[%s328 + $0xc40] sm:$0xff]
        %v1956 = vld [vmem:[%s328 + $0xc48] sm:$0xff]
        %v1957 = vld [vmem:[%s328 + $0xc50] sm:$0xff]
        %v1958 = vld [vmem:[%s328 + $0xc58] sm:$0xff]
        %v1959 = vld [vmem:[%s328 + $0xc60] sm:$0xff]
        %v1960 = vld [vmem:[%s328 + $0xc68] sm:$0xff]
        %v1961 = vld [vmem:[%s328 + $0xc70] sm:$0xff]
        %v1962 = vld [vmem:[%s328 + $0xc78] sm:$0xff]
        %v1963 = vld [vmem:[%s328 + $0xc80] sm:$0xff]
        %v1964 = vld [vmem:[%s328 + $0xc88] sm:$0xff]
        %v1965 = vld [vmem:[%s328 + $0xc90] sm:$0xff]
        %v1966 = vld [vmem:[%s328 + $0xc98] sm:$0xff]
        %v1967 = vld [vmem:[%s328 + $0xca0] sm:$0xff]
        %v1968 = vld [vmem:[%s328 + $0xca8] sm:$0xff]
        %v1969 = vld [vmem:[%s328 + $0xcb0] sm:$0xff]
        %v1970 = vld [vmem:[%s328 + $0xcb8] sm:$0xff]
        %v1971 = vld [vmem:[%s328 + $0xcc0] sm:$0xff]
        %v1972 = vld [vmem:[%s328 + $0xcc8] sm:$0xff]
        %v1973 = vld [vmem:[%s328 + $0xcd0] sm:$0xff]
        %v1974 = vld [vmem:[%s328 + $0xcd8] sm:$0xff]
        %v1975 = vld [vmem:[%s328 + $0xce0] sm:$0xff]
        %v1976 = vld [vmem:[%s328 + $0xce8] sm:$0xff]
        %v1977 = vld [vmem:[%s328 + $0xcf0] sm:$0xff]
        %v1978 = vld [vmem:[%s328 + $0xcf8] sm:$0xff]
        %v1979 = vld [vmem:[%s328 + $0xd00] sm:$0xff]
        %v1980 = vld [vmem:[%s328 + $0xd08] sm:$0xff]
        %v1981 = vld [vmem:[%s328 + $0xd10] sm:$0xff]
        %v1982 = vld [vmem:[%s328 + $0xd18] sm:$0xff]
        %v1983 = vld [vmem:[%s328 + $0xd20] sm:$0xff]
        %v1984 = vld [vmem:[%s328 + $0xd28] sm:$0xff]
        %v1985 = vld [vmem:[%s328 + $0xd30] sm:$0xff]
        %v1986 = vld [vmem:[%s328 + $0xd38] sm:$0xff]
        %v1987 = vld [vmem:[%s328 + $0xd40] sm:$0xff]
        %v1988 = vld [vmem:[%s328 + $0xd48] sm:$0xff]
        %v1989 = vld [vmem:[%s328 + $0xd50] sm:$0xff]
        %v1990 = vld [vmem:[%s328 + $0xd58] sm:$0xff]
        %v1991 = vld [vmem:[%s328 + $0xd60] sm:$0xff]
        %v1992 = vld [vmem:[%s328 + $0xd68] sm:$0xff]
        %v1993 = vld [vmem:[%s328 + $0xd70] sm:$0xff]
        %v1994 = vld [vmem:[%s328 + $0xd78] sm:$0xff]
        %v1995 = vld [vmem:[%s328 + $0xd80] sm:$0xff]
        %v1996 = vld [vmem:[%s328 + $0xd88] sm:$0xff]
        %v1997 = vld [vmem:[%s328 + $0xd90] sm:$0xff]
        %v1998 = vld [vmem:[%s328 + $0xd98] sm:$0xff]
        %v1999 = vld [vmem:[%s328 + $0xda0] sm:$0xff]
        %v2000 = vld [vmem:[%s328 + $0xda8] sm:$0xff]
        %v2001 = vld [vmem:[%s328 + $0xdb0] sm:$0xff]
        %v2002 = vld [vmem:[%s328 + $0xdb8] sm:$0xff]
        %v2003 = vld [vmem:[%s328 + $0xdc0] sm:$0xff]
        %v2004 = vld [vmem:[%s328 + $0xdc8] sm:$0xff]
        %v2005 = vld [vmem:[%s328 + $0xdd0] sm:$0xff]
        %v2006 = vld [vmem:[%s328 + $0xdd8] sm:$0xff]
        %v2007 = vld [vmem:[%s328 + $0xde0] sm:$0xff]
        %v2008 = vld [vmem:[%s328 + $0xde8] sm:$0xff]
        %v2009 = vld [vmem:[%s328 + $0xdf0] sm:$0xff]
        %v2010 = vld [vmem:[%s328 + $0xdf8] sm:$0xff]
        %v2011 = vld [vmem:[%s328 + $0xe00] sm:$0xff]
        %v2012 = vld [vmem:[%s328 + $0xe08] sm:$0xff]
        %v2013 = vld [vmem:[%s328 + $0xe10] sm:$0xff]
        %v2014 = vld [vmem:[%s328 + $0xe18] sm:$0xff]
        %v2015 = vld [vmem:[%s328 + $0xe20] sm:$0xff]
        %v2016 = vld [vmem:[%s328 + $0xe28] sm:$0xff]
        %v2017 = vld [vmem:[%s328 + $0xe30] sm:$0xff]
        %v2018 = vld [vmem:[%s328 + $0xe38] sm:$0xff]
        %v2019 = vld [vmem:[%s328 + $0xe40] sm:$0xff]
        %v2020 = vld [vmem:[%s328 + $0xe48] sm:$0xff]
        %v2021 = vld [vmem:[%s328 + $0xe50] sm:$0xff]
        %v2022 = vld [vmem:[%s328 + $0xe58] sm:$0xff]
        %v2023 = vld [vmem:[%s328 + $0xe60] sm:$0xff]
        %v2024 = vld [vmem:[%s328 + $0xe68] sm:$0xff]
        %v2025 = vld [vmem:[%s328 + $0xe70] sm:$0xff]
        %v2026 = vld [vmem:[%s328 + $0xe78] sm:$0xff]
        %v2027 = vld [vmem:[%s328 + $0xe80] sm:$0xff]
        %v2028 = vld [vmem:[%s328 + $0xe88] sm:$0xff]
        %v2029 = vld [vmem:[%s328 + $0xe90] sm:$0xff]
        %v2030 = vld [vmem:[%s328 + $0xe98] sm:$0xff]
        %v2031 = vld [vmem:[%s328 + $0xea0] sm:$0xff]
        %v2032 = vld [vmem:[%s328 + $0xea8] sm:$0xff]
        %v2033 = vld [vmem:[%s328 + $0xeb0] sm:$0xff]
        %v2034 = vld [vmem:[%s328 + $0xeb8] sm:$0xff]
        %v2035 = vld [vmem:[%s328 + $0xec0] sm:$0xff]
        %v2036 = vld [vmem:[%s328 + $0xec8] sm:$0xff]
        %v2037 = vld [vmem:[%s328 + $0xed0] sm:$0xff]
        %v2038 = vld [vmem:[%s328 + $0xed8] sm:$0xff]
        %v2039 = vld [vmem:[%s328 + $0xee0] sm:$0xff]
        %v2040 = vld [vmem:[%s328 + $0xee8] sm:$0xff]
        %v2041 = vld [vmem:[%s328 + $0xef0] sm:$0xff]
        %v2042 = vld [vmem:[%s328 + $0xef8] sm:$0xff]
        %v2043 = vld [vmem:[%s328 + $0xf00] sm:$0xff]
        %v2044 = vld [vmem:[%s328 + $0xf08] sm:$0xff]
        %v2045 = vld [vmem:[%s328 + $0xf10] sm:$0xff]
        %v2046 = vld [vmem:[%s328 + $0xf18] sm:$0xff]
        %v2047 = vld [vmem:[%s328 + $0xf20] sm:$0xff]
        %v2048 = vld [vmem:[%s328 + $0xf28] sm:$0xff]
        %v2049 = vld [vmem:[%s328 + $0xf30] sm:$0xff]
        %v2050 = vld [vmem:[%s328 + $0xf38] sm:$0xff]
        %v2051 = vld [vmem:[%s328 + $0xf40] sm:$0xff]
        %v2052 = vld [vmem:[%s328 + $0xf48] sm:$0xff]
        %v2053 = vld [vmem:[%s328 + $0xf50] sm:$0xff]
        %v2054 = vld [vmem:[%s328 + $0xf58] sm:$0xff]
        %v2055 = vld [vmem:[%s328 + $0xf60] sm:$0xff]
        %v2056 = vld [vmem:[%s328 + $0xf68] sm:$0xff]
        %v2057 = vld [vmem:[%s328 + $0xf70] sm:$0xff]
        %v2058 = vld [vmem:[%s328 + $0xf78] sm:$0xff]
        %v2059 = vld [vmem:[%s328 + $0xf80] sm:$0xff]
        %v2060 = vld [vmem:[%s328 + $0xf88] sm:$0xff]
        %v2061 = vld [vmem:[%s328 + $0xf90] sm:$0xff]
        %v2062 = vld [vmem:[%s328 + $0xf98] sm:$0xff]
        %v2063 = vld [vmem:[%s328 + $0xfa0] sm:$0xff]
        %v2064 = vld [vmem:[%s328 + $0xfa8] sm:$0xff]
        %v2065 = vld [vmem:[%s328 + $0xfb0] sm:$0xff]
        %v2066 = vld [vmem:[%s328 + $0xfb8] sm:$0xff]
        %v2067 = vld [vmem:[%s328 + $0xfc0] sm:$0xff]
        %v2068 = vld [vmem:[%s328 + $0xfc8] sm:$0xff]
        %v2069 = vld [vmem:[%s328 + $0xfd0] sm:$0xff]
        %v2070 = vld [vmem:[%s328 + $0xfd8] sm:$0xff]
        %v2071 = vld [vmem:[%s328 + $0xfe0] sm:$0xff]
        %v2072 = vld [vmem:[%s328 + $0xfe8] sm:$0xff]
        %v2073 = vld [vmem:[%s328 + $0xff0] sm:$0xff]
        %v2074 = vld [vmem:[%s328 + $0xff8] sm:$0xff]
        %2075 = vmatpush.msra.mxu0 %v1623
        %2076 = vmatpush.msra.mxu0 %v1619
        %2077 = vmatpush.msra.mxu0 %v1615
        %2078 = vmatpush.msra.mxu0 %v1611
        %2079 = vmatpush.msra.mxu0 %v1607
        %2080 = vmatpush.msra.mxu0 %v1603
        %2081 = vmatpush.msra.mxu0 %v1599
        %2082 = vmatpush.msra.mxu0 %v1595
        %2083 = vmatpush.msra.mxu0 %v1591
        %2084 = vmatpush.msra.mxu0 %v1587
        %2085 = vmatpush.msra.mxu0 %v1583
        %2086 = vmatpush.msra.mxu0 %v1579
        %2087 = vmatpush.msra.mxu0 %v1575
        %2088 = vmatpush.msra.mxu0 %v1571
        %2089 = vmatpush.msra.mxu0 %v1567
        %2090 = vmatpush.msra.mxu0 %v1563
        %2091 = vmatmul.f32.gmra.mxu0 %v1551
        %v2092 = vpop.f32.mrf.mxu0
        %v2093 = vadd.f32 0.0, %v2092
        %2094 = vdwg.mxu0
        %2095 = vmatpush.msra.mxu0 %v1687
        %2096 = vmatpush.msra.mxu0 %v1683
        %2097 = vmatpush.msra.mxu0 %v1679
        %2098 = vmatpush.msra.mxu0 %v1675
        %2099 = vmatpush.msra.mxu0 %v1671
        %2100 = vmatpush.msra.mxu0 %v1667
        %2101 = vmatpush.msra.mxu0 %v1663
        %2102 = vmatpush.msra.mxu0 %v1659
        %2103 = vmatpush.msra.mxu0 %v1655
        %2104 = vmatpush.msra.mxu0 %v1651
        %2105 = vmatpush.msra.mxu0 %v1647
        %2106 = vmatpush.msra.mxu0 %v1643
        %2107 = vmatpush.msra.mxu0 %v1639
        %2108 = vmatpush.msra.mxu0 %v1635
        %2109 = vmatpush.msra.mxu0 %v1631
        %2110 = vmatpush.msra.mxu0 %v1627
        %2111 = vmatmul.f32.gmra.mxu0 %v1552
        %v2112 = vpop.f32.mrf.mxu0
        %v2113 = vadd.f32 %v2093, %v2112
        %2114 = vdwg.mxu0
        %2115 = vmatpush.msra.mxu0 %v1751
        %2116 = vmatpush.msra.mxu0 %v1747
        %2117 = vmatpush.msra.mxu0 %v1743
        %2118 = vmatpush.msra.mxu0 %v1739
        %2119 = vmatpush.msra.mxu0 %v1735
        %2120 = vmatpush.msra.mxu0 %v1731
        %2121 = vmatpush.msra.mxu0 %v1727
        %2122 = vmatpush.msra.mxu0 %v1723
        %2123 = vmatpush.msra.mxu0 %v1719
        %2124 = vmatpush.msra.mxu0 %v1715
        %2125 = vmatpush.msra.mxu0 %v1711
        %2126 = vmatpush.msra.mxu0 %v1707
        %2127 = vmatpush.msra.mxu0 %v1703
        %2128 = vmatpush.msra.mxu0 %v1699
        %2129 = vmatpush.msra.mxu0 %v1695
        %2130 = vmatpush.msra.mxu0 %v1691
        %2131 = vmatmul.f32.gmra.mxu0 %v1553
        %v2132 = vpop.f32.mrf.mxu0
        %v2133 = vadd.f32 %v2113, %v2132
        %2134 = vdwg.mxu0
        %2135 = vmatpush.msra.mxu0 %v1815
        %2136 = vmatpush.msra.mxu0 %v1811
        %2137 = vmatpush.msra.mxu0 %v1807
        %2138 = vmatpush.msra.mxu0 %v1803
        %2139 = vmatpush.msra.mxu0 %v1799
        %2140 = vmatpush.msra.mxu0 %v1795
        %2141 = vmatpush.msra.mxu0 %v1791
        %2142 = vmatpush.msra.mxu0 %v1787
        %2143 = vmatpush.msra.mxu0 %v1783
        %2144 = vmatpush.msra.mxu0 %v1779
        %2145 = vmatpush.msra.mxu0 %v1775
        %2146 = vmatpush.msra.mxu0 %v1771
        %2147 = vmatpush.msra.mxu0 %v1767
        %2148 = vmatpush.msra.mxu0 %v1763
        %2149 = vmatpush.msra.mxu0 %v1759
        %2150 = vmatpush.msra.mxu0 %v1755
        %2151 = vmatmul.f32.gmra.mxu0 %v1554
        %v2152 = vpop.f32.mrf.mxu0
        %v2153 = vadd.f32 %v2133, %v2152
        %2154 = vdwg.mxu0
        %2155 = vmatpush.msra.mxu0 %v1879
        %2156 = vmatpush.msra.mxu0 %v1875
        %2157 = vmatpush.msra.mxu0 %v1871
        %2158 = vmatpush.msra.mxu0 %v1867
        %2159 = vmatpush.msra.mxu0 %v1863
        %2160 = vmatpush.msra.mxu0 %v1859
        %2161 = vmatpush.msra.mxu0 %v1855
        %2162 = vmatpush.msra.mxu0 %v1851
        %2163 = vmatpush.msra.mxu0 %v1847
        %2164 = vmatpush.msra.mxu0 %v1843
        %2165 = vmatpush.msra.mxu0 %v1839
        %2166 = vmatpush.msra.mxu0 %v1835
        %2167 = vmatpush.msra.mxu0 %v1831
        %2168 = vmatpush.msra.mxu0 %v1827
        %2169 = vmatpush.msra.mxu0 %v1823
        %2170 = vmatpush.msra.mxu0 %v1819
        %2171 = vmatmul.f32.gmra.mxu0 %v1555
        %v2172 = vpop.f32.mrf.mxu0
        %v2173 = vadd.f32 %v2153, %v2172
        %2174 = vdwg.mxu0
        %2175 = vmatpush.msra.mxu0 %v1943
        %2176 = vmatpush.msra.mxu0 %v1939
        %2177 = vmatpush.msra.mxu0 %v1935
        %2178 = vmatpush.msra.mxu0 %v1931
        %2179 = vmatpush.msra.mxu0 %v1927
        %2180 = vmatpush.msra.mxu0 %v1923
        %2181 = vmatpush.msra.mxu0 %v1919
        %2182 = vmatpush.msra.mxu0 %v1915
        %2183 = vmatpush.msra.mxu0 %v1911
        %2184 = vmatpush.msra.mxu0 %v1907
        %2185 = vmatpush.msra.mxu0 %v1903
        %2186 = vmatpush.msra.mxu0 %v1899
        %2187 = vmatpush.msra.mxu0 %v1895
        %2188 = vmatpush.msra.mxu0 %v1891
        %2189 = vmatpush.msra.mxu0 %v1887
        %2190 = vmatpush.msra.mxu0 %v1883
        %2191 = vmatmul.f32.gmra.mxu0 %v1556
        %v2192 = vpop.f32.mrf.mxu0
        %v2193 = vadd.f32 %v2173, %v2192
        %2194 = vdwg.mxu0
        %2195 = vmatpush.msra.mxu0 %v2007
        %2196 = vmatpush.msra.mxu0 %v2003
        %2197 = vmatpush.msra.mxu0 %v1999
        %2198 = vmatpush.msra.mxu0 %v1995
        %2199 = vmatpush.msra.mxu0 %v1991
        %2200 = vmatpush.msra.mxu0 %v1987
        %2201 = vmatpush.msra.mxu0 %v1983
        %2202 = vmatpush.msra.mxu0 %v1979
        %2203 = vmatpush.msra.mxu0 %v1975
        %2204 = vmatpush.msra.mxu0 %v1971
        %2205 = vmatpush.msra.mxu0 %v1967
        %2206 = vmatpush.msra.mxu0 %v1963
        %2207 = vmatpush.msra.mxu0 %v1959
        %2208 = vmatpush.msra.mxu0 %v1955
        %2209 = vmatpush.msra.mxu0 %v1951
        %2210 = vmatpush.msra.mxu0 %v1947
        %2211 = vmatmul.f32.gmra.mxu0 %v1557
        %v2212 = vpop.f32.mrf.mxu0
        %v2213 = vadd.f32 %v2193, %v2212
        %2214 = vdwg.mxu0
        %2215 = vmatpush.msra.mxu0 %v2071
        %2216 = vmatpush.msra.mxu0 %v2067
        %2217 = vmatpush.msra.mxu0 %v2063
        %2218 = vmatpush.msra.mxu0 %v2059
        %2219 = vmatpush.msra.mxu0 %v2055
        %2220 = vmatpush.msra.mxu0 %v2051
        %2221 = vmatpush.msra.mxu0 %v2047
        %2222 = vmatpush.msra.mxu0 %v2043
        %2223 = vmatpush.msra.mxu0 %v2039
        %2224 = vmatpush.msra.mxu0 %v2035
        %2225 = vmatpush.msra.mxu0 %v2031
        %2226 = vmatpush.msra.mxu0 %v2027
        %2227 = vmatpush.msra.mxu0 %v2023
        %2228 = vmatpush.msra.mxu0 %v2019
        %2229 = vmatpush.msra.mxu0 %v2015
        %2230 = vmatpush.msra.mxu0 %v2011
        %2231 = vmatmul.f32.gmra.mxu0 %v1558
        %v2232 = vpop.f32.mrf.mxu0
        %v2233 = vadd.f32 %v2213, %v2232
        %2234 = vdwg.mxu0
        %2235 = vmatpush.msra.mxu0 %v1624
        %2236 = vmatpush.msra.mxu0 %v1620
        %2237 = vmatpush.msra.mxu0 %v1616
        %2238 = vmatpush.msra.mxu0 %v1612
        %2239 = vmatpush.msra.mxu0 %v1608
        %2240 = vmatpush.msra.mxu0 %v1604
        %2241 = vmatpush.msra.mxu0 %v1600
        %2242 = vmatpush.msra.mxu0 %v1596
        %2243 = vmatpush.msra.mxu0 %v1592
        %2244 = vmatpush.msra.mxu0 %v1588
        %2245 = vmatpush.msra.mxu0 %v1584
        %2246 = vmatpush.msra.mxu0 %v1580
        %2247 = vmatpush.msra.mxu0 %v1576
        %2248 = vmatpush.msra.mxu0 %v1572
        %2249 = vmatpush.msra.mxu0 %v1568
        %2250 = vmatpush.msra.mxu0 %v1564
        %2251 = vmatmul.f32.gmra.mxu0 %v1551
        %v2252 = vpop.f32.mrf.mxu0
        %v2253 = vadd.f32 0.0, %v2252
        %2254 = vdwg.mxu0
        %2255 = vmatpush.msra.mxu0 %v1688
        %2256 = vmatpush.msra.mxu0 %v1684
        %2257 = vmatpush.msra.mxu0 %v1680
        %2258 = vmatpush.msra.mxu0 %v1676
        %2259 = vmatpush.msra.mxu0 %v1672
        %2260 = vmatpush.msra.mxu0 %v1668
        %2261 = vmatpush.msra.mxu0 %v1664
        %2262 = vmatpush.msra.mxu0 %v1660
        %2263 = vmatpush.msra.mxu0 %v1656
        %2264 = vmatpush.msra.mxu0 %v1652
        %2265 = vmatpush.msra.mxu0 %v1648
        %2266 = vmatpush.msra.mxu0 %v1644
        %2267 = vmatpush.msra.mxu0 %v1640
        %2268 = vmatpush.msra.mxu0 %v1636
        %2269 = vmatpush.msra.mxu0 %v1632
        %2270 = vmatpush.msra.mxu0 %v1628
        %2271 = vmatmul.f32.gmra.mxu0 %v1552
        %v2272 = vpop.f32.mrf.mxu0
        %v2273 = vadd.f32 %v2253, %v2272
        %2274 = vdwg.mxu0
        %2275 = vmatpush.msra.mxu0 %v1752
        %2276 = vmatpush.msra.mxu0 %v1748
        %2277 = vmatpush.msra.mxu0 %v1744
        %2278 = vmatpush.msra.mxu0 %v1740
        %2279 = vmatpush.msra.mxu0 %v1736
        %2280 = vmatpush.msra.mxu0 %v1732
        %2281 = vmatpush.msra.mxu0 %v1728
        %2282 = vmatpush.msra.mxu0 %v1724
        %2283 = vmatpush.msra.mxu0 %v1720
        %2284 = vmatpush.msra.mxu0 %v1716
        %2285 = vmatpush.msra.mxu0 %v1712
        %2286 = vmatpush.msra.mxu0 %v1708
        %2287 = vmatpush.msra.mxu0 %v1704
        %2288 = vmatpush.msra.mxu0 %v1700
        %2289 = vmatpush.msra.mxu0 %v1696
        %2290 = vmatpush.msra.mxu0 %v1692
        %2291 = vmatmul.f32.gmra.mxu0 %v1553
        %v2292 = vpop.f32.mrf.mxu0
        %v2293 = vadd.f32 %v2273, %v2292
        %2294 = vdwg.mxu0
        %2295 = vmatpush.msra.mxu0 %v1816
        %2296 = vmatpush.msra.mxu0 %v1812
        %2297 = vmatpush.msra.mxu0 %v1808
        %2298 = vmatpush.msra.mxu0 %v1804
        %2299 = vmatpush.msra.mxu0 %v1800
        %2300 = vmatpush.msra.mxu0 %v1796
        %2301 = vmatpush.msra.mxu0 %v1792
        %2302 = vmatpush.msra.mxu0 %v1788
        %2303 = vmatpush.msra.mxu0 %v1784
        %2304 = vmatpush.msra.mxu0 %v1780
        %2305 = vmatpush.msra.mxu0 %v1776
        %2306 = vmatpush.msra.mxu0 %v1772
        %2307 = vmatpush.msra.mxu0 %v1768
        %2308 = vmatpush.msra.mxu0 %v1764
        %2309 = vmatpush.msra.mxu0 %v1760
        %2310 = vmatpush.msra.mxu0 %v1756
        %2311 = vmatmul.f32.gmra.mxu0 %v1554
        %v2312 = vpop.f32.mrf.mxu0
        %v2313 = vadd.f32 %v2293, %v2312
        %2314 = vdwg.mxu0
        %2315 = vmatpush.msra.mxu0 %v1880
        %2316 = vmatpush.msra.mxu0 %v1876
        %2317 = vmatpush.msra.mxu0 %v1872
        %2318 = vmatpush.msra.mxu0 %v1868
        %2319 = vmatpush.msra.mxu0 %v1864
        %2320 = vmatpush.msra.mxu0 %v1860
        %2321 = vmatpush.msra.mxu0 %v1856
        %2322 = vmatpush.msra.mxu0 %v1852
        %2323 = vmatpush.msra.mxu0 %v1848
        %2324 = vmatpush.msra.mxu0 %v1844
        %2325 = vmatpush.msra.mxu0 %v1840
        %2326 = vmatpush.msra.mxu0 %v1836
        %2327 = vmatpush.msra.mxu0 %v1832
        %2328 = vmatpush.msra.mxu0 %v1828
        %2329 = vmatpush.msra.mxu0 %v1824
        %2330 = vmatpush.msra.mxu0 %v1820
        %2331 = vmatmul.f32.gmra.mxu0 %v1555
        %v2332 = vpop.f32.mrf.mxu0
        %v2333 = vadd.f32 %v2313, %v2332
        %2334 = vdwg.mxu0
        %2335 = vmatpush.msra.mxu0 %v1944
        %2336 = vmatpush.msra.mxu0 %v1940
        %2337 = vmatpush.msra.mxu0 %v1936
        %2338 = vmatpush.msra.mxu0 %v1932
        %2339 = vmatpush.msra.mxu0 %v1928
        %2340 = vmatpush.msra.mxu0 %v1924
        %2341 = vmatpush.msra.mxu0 %v1920
        %2342 = vmatpush.msra.mxu0 %v1916
        %2343 = vmatpush.msra.mxu0 %v1912
        %2344 = vmatpush.msra.mxu0 %v1908
        %2345 = vmatpush.msra.mxu0 %v1904
        %2346 = vmatpush.msra.mxu0 %v1900
        %2347 = vmatpush.msra.mxu0 %v1896
        %2348 = vmatpush.msra.mxu0 %v1892
        %2349 = vmatpush.msra.mxu0 %v1888
        %2350 = vmatpush.msra.mxu0 %v1884
        %2351 = vmatmul.f32.gmra.mxu0 %v1556
        %v2352 = vpop.f32.mrf.mxu0
        %v2353 = vadd.f32 %v2333, %v2352
        %2354 = vdwg.mxu0
        %2355 = vmatpush.msra.mxu0 %v2008
        %2356 = vmatpush.msra.mxu0 %v2004
        %2357 = vmatpush.msra.mxu0 %v2000
        %2358 = vmatpush.msra.mxu0 %v1996
        %2359 = vmatpush.msra.mxu0 %v1992
        %2360 = vmatpush.msra.mxu0 %v1988
        %2361 = vmatpush.msra.mxu0 %v1984
        %2362 = vmatpush.msra.mxu0 %v1980
        %2363 = vmatpush.msra.mxu0 %v1976
        %2364 = vmatpush.msra.mxu0 %v1972
        %2365 = vmatpush.msra.mxu0 %v1968
        %2366 = vmatpush.msra.mxu0 %v1964
        %2367 = vmatpush.msra.mxu0 %v1960
        %2368 = vmatpush.msra.mxu0 %v1956
        %2369 = vmatpush.msra.mxu0 %v1952
        %2370 = vmatpush.msra.mxu0 %v1948
        %2371 = vmatmul.f32.gmra.mxu0 %v1557
        %v2372 = vpop.f32.mrf.mxu0
        %v2373 = vadd.f32 %v2353, %v2372
        %2374 = vdwg.mxu0
        %2375 = vmatpush.msra.mxu0 %v2072
        %2376 = vmatpush.msra.mxu0 %v2068
        %2377 = vmatpush.msra.mxu0 %v2064
        %2378 = vmatpush.msra.mxu0 %v2060
        %2379 = vmatpush.msra.mxu0 %v2056
        %2380 = vmatpush.msra.mxu0 %v2052
        %2381 = vmatpush.msra.mxu0 %v2048
        %2382 = vmatpush.msra.mxu0 %v2044
        %2383 = vmatpush.msra.mxu0 %v2040
        %2384 = vmatpush.msra.mxu0 %v2036
        %2385 = vmatpush.msra.mxu0 %v2032
        %2386 = vmatpush.msra.mxu0 %v2028
        %2387 = vmatpush.msra.mxu0 %v2024
        %2388 = vmatpush.msra.mxu0 %v2020
        %2389 = vmatpush.msra.mxu0 %v2016
        %2390 = vmatpush.msra.mxu0 %v2012
        %2391 = vmatmul.f32.gmra.mxu0 %v1558
        %v2392 = vpop.f32.mrf.mxu0
        %v2393 = vadd.f32 %v2373, %v2392
        %2394 = vdwg.mxu0
        %2395 = vmatpush.msra.mxu0 %v1625
        %2396 = vmatpush.msra.mxu0 %v1621
        %2397 = vmatpush.msra.mxu0 %v1617
        %2398 = vmatpush.msra.mxu0 %v1613
        %2399 = vmatpush.msra.mxu0 %v1609
        %2400 = vmatpush.msra.mxu0 %v1605
        %2401 = vmatpush.msra.mxu0 %v1601
        %2402 = vmatpush.msra.mxu0 %v1597
        %2403 = vmatpush.msra.mxu0 %v1593
        %2404 = vmatpush.msra.mxu0 %v1589
        %2405 = vmatpush.msra.mxu0 %v1585
        %2406 = vmatpush.msra.mxu0 %v1581
        %2407 = vmatpush.msra.mxu0 %v1577
        %2408 = vmatpush.msra.mxu0 %v1573
        %2409 = vmatpush.msra.mxu0 %v1569
        %2410 = vmatpush.msra.mxu0 %v1565
        %2411 = vmatmul.f32.gmra.mxu0 %v1551
        %v2412 = vpop.f32.mrf.mxu0
        %v2413 = vadd.f32 0.0, %v2412
        %2414 = vdwg.mxu0
        %2415 = vmatpush.msra.mxu0 %v1689
        %2416 = vmatpush.msra.mxu0 %v1685
        %2417 = vmatpush.msra.mxu0 %v1681
        %2418 = vmatpush.msra.mxu0 %v1677
        %2419 = vmatpush.msra.mxu0 %v1673
        %2420 = vmatpush.msra.mxu0 %v1669
        %2421 = vmatpush.msra.mxu0 %v1665
        %2422 = vmatpush.msra.mxu0 %v1661
        %2423 = vmatpush.msra.mxu0 %v1657
        %2424 = vmatpush.msra.mxu0 %v1653
        %2425 = vmatpush.msra.mxu0 %v1649
        %2426 = vmatpush.msra.mxu0 %v1645
        %2427 = vmatpush.msra.mxu0 %v1641
        %2428 = vmatpush.msra.mxu0 %v1637
        %2429 = vmatpush.msra.mxu0 %v1633
        %2430 = vmatpush.msra.mxu0 %v1629
        %2431 = vmatmul.f32.gmra.mxu0 %v1552
        %v2432 = vpop.f32.mrf.mxu0
        %v2433 = vadd.f32 %v2413, %v2432
        %2434 = vdwg.mxu0
        %2435 = vmatpush.msra.mxu0 %v1753
        %2436 = vmatpush.msra.mxu0 %v1749
        %2437 = vmatpush.msra.mxu0 %v1745
        %2438 = vmatpush.msra.mxu0 %v1741
        %2439 = vmatpush.msra.mxu0 %v1737
        %2440 = vmatpush.msra.mxu0 %v1733
        %2441 = vmatpush.msra.mxu0 %v1729
        %2442 = vmatpush.msra.mxu0 %v1725
        %2443 = vmatpush.msra.mxu0 %v1721
        %2444 = vmatpush.msra.mxu0 %v1717
        %2445 = vmatpush.msra.mxu0 %v1713
        %2446 = vmatpush.msra.mxu0 %v1709
        %2447 = vmatpush.msra.mxu0 %v1705
        %2448 = vmatpush.msra.mxu0 %v1701
        %2449 = vmatpush.msra.mxu0 %v1697
        %2450 = vmatpush.msra.mxu0 %v1693
        %2451 = vmatmul.f32.gmra.mxu0 %v1553
        %v2452 = vpop.f32.mrf.mxu0
        %v2453 = vadd.f32 %v2433, %v2452
        %2454 = vdwg.mxu0
        %2455 = vmatpush.msra.mxu0 %v1817
        %2456 = vmatpush.msra.mxu0 %v1813
        %2457 = vmatpush.msra.mxu0 %v1809
        %2458 = vmatpush.msra.mxu0 %v1805
        %2459 = vmatpush.msra.mxu0 %v1801
        %2460 = vmatpush.msra.mxu0 %v1797
        %2461 = vmatpush.msra.mxu0 %v1793
        %2462 = vmatpush.msra.mxu0 %v1789
        %2463 = vmatpush.msra.mxu0 %v1785
        %2464 = vmatpush.msra.mxu0 %v1781
        %2465 = vmatpush.msra.mxu0 %v1777
        %2466 = vmatpush.msra.mxu0 %v1773
        %2467 = vmatpush.msra.mxu0 %v1769
        %2468 = vmatpush.msra.mxu0 %v1765
        %2469 = vmatpush.msra.mxu0 %v1761
        %2470 = vmatpush.msra.mxu0 %v1757
        %2471 = vmatmul.f32.gmra.mxu0 %v1554
        %v2472 = vpop.f32.mrf.mxu0
        %v2473 = vadd.f32 %v2453, %v2472
        %2474 = vdwg.mxu0
        %2475 = vmatpush.msra.mxu0 %v1881
        %2476 = vmatpush.msra.mxu0 %v1877
        %2477 = vmatpush.msra.mxu0 %v1873
        %2478 = vmatpush.msra.mxu0 %v1869
        %2479 = vmatpush.msra.mxu0 %v1865
        %2480 = vmatpush.msra.mxu0 %v1861
        %2481 = vmatpush.msra.mxu0 %v1857
        %2482 = vmatpush.msra.mxu0 %v1853
        %2483 = vmatpush.msra.mxu0 %v1849
        %2484 = vmatpush.msra.mxu0 %v1845
        %2485 = vmatpush.msra.mxu0 %v1841
        %2486 = vmatpush.msra.mxu0 %v1837
        %2487 = vmatpush.msra.mxu0 %v1833
        %2488 = vmatpush.msra.mxu0 %v1829
        %2489 = vmatpush.msra.mxu0 %v1825
        %2490 = vmatpush.msra.mxu0 %v1821
        %2491 = vmatmul.f32.gmra.mxu0 %v1555
        %v2492 = vpop.f32.mrf.mxu0
        %v2493 = vadd.f32 %v2473, %v2492
        %2494 = vdwg.mxu0
        %2495 = vmatpush.msra.mxu0 %v1945
        %2496 = vmatpush.msra.mxu0 %v1941
        %2497 = vmatpush.msra.mxu0 %v1937
        %2498 = vmatpush.msra.mxu0 %v1933
        %2499 = vmatpush.msra.mxu0 %v1929
        %2500 = vmatpush.msra.mxu0 %v1925
        %2501 = vmatpush.msra.mxu0 %v1921
        %2502 = vmatpush.msra.mxu0 %v1917
        %2503 = vmatpush.msra.mxu0 %v1913
        %2504 = vmatpush.msra.mxu0 %v1909
        %2505 = vmatpush.msra.mxu0 %v1905
        %2506 = vmatpush.msra.mxu0 %v1901
        %2507 = vmatpush.msra.mxu0 %v1897
        %2508 = vmatpush.msra.mxu0 %v1893
        %2509 = vmatpush.msra.mxu0 %v1889
        %2510 = vmatpush.msra.mxu0 %v1885
        %2511 = vmatmul.f32.gmra.mxu0 %v1556
        %v2512 = vpop.f32.mrf.mxu0
        %v2513 = vadd.f32 %v2493, %v2512
        %2514 = vdwg.mxu0
        %2515 = vmatpush.msra.mxu0 %v2009
        %2516 = vmatpush.msra.mxu0 %v2005
        %2517 = vmatpush.msra.mxu0 %v2001
        %2518 = vmatpush.msra.mxu0 %v1997
        %2519 = vmatpush.msra.mxu0 %v1993
        %2520 = vmatpush.msra.mxu0 %v1989
        %2521 = vmatpush.msra.mxu0 %v1985
        %2522 = vmatpush.msra.mxu0 %v1981
        %2523 = vmatpush.msra.mxu0 %v1977
        %2524 = vmatpush.msra.mxu0 %v1973
        %2525 = vmatpush.msra.mxu0 %v1969
        %2526 = vmatpush.msra.mxu0 %v1965
        %2527 = vmatpush.msra.mxu0 %v1961
        %2528 = vmatpush.msra.mxu0 %v1957
        %2529 = vmatpush.msra.mxu0 %v1953
        %2530 = vmatpush.msra.mxu0 %v1949
        %2531 = vmatmul.f32.gmra.mxu0 %v1557
        %v2532 = vpop.f32.mrf.mxu0
        %v2533 = vadd.f32 %v2513, %v2532
        %2534 = vdwg.mxu0
        %2535 = vmatpush.msra.mxu0 %v2073
        %2536 = vmatpush.msra.mxu0 %v2069
        %2537 = vmatpush.msra.mxu0 %v2065
        %2538 = vmatpush.msra.mxu0 %v2061
        %2539 = vmatpush.msra.mxu0 %v2057
        %2540 = vmatpush.msra.mxu0 %v2053
        %2541 = vmatpush.msra.mxu0 %v2049
        %2542 = vmatpush.msra.mxu0 %v2045
        %2543 = vmatpush.msra.mxu0 %v2041
        %2544 = vmatpush.msra.mxu0 %v2037
        %2545 = vmatpush.msra.mxu0 %v2033
        %2546 = vmatpush.msra.mxu0 %v2029
        %2547 = vmatpush.msra.mxu0 %v2025
        %2548 = vmatpush.msra.mxu0 %v2021
        %2549 = vmatpush.msra.mxu0 %v2017
        %2550 = vmatpush.msra.mxu0 %v2013
        %2551 = vmatmul.f32.gmra.mxu0 %v1558
        %v2552 = vpop.f32.mrf.mxu0
        %v2553 = vadd.f32 %v2533, %v2552
        %2554 = vdwg.mxu0
        %2555 = vmatpush.msra.mxu0 %v1626
        %2556 = vmatpush.msra.mxu0 %v1622
        %2557 = vmatpush.msra.mxu0 %v1618
        %2558 = vmatpush.msra.mxu0 %v1614
        %2559 = vmatpush.msra.mxu0 %v1610
        %2560 = vmatpush.msra.mxu0 %v1606
        %2561 = vmatpush.msra.mxu0 %v1602
        %2562 = vmatpush.msra.mxu0 %v1598
        %2563 = vmatpush.msra.mxu0 %v1594
        %2564 = vmatpush.msra.mxu0 %v1590
        %2565 = vmatpush.msra.mxu0 %v1586
        %2566 = vmatpush.msra.mxu0 %v1582
        %2567 = vmatpush.msra.mxu0 %v1578
        %2568 = vmatpush.msra.mxu0 %v1574
        %2569 = vmatpush.msra.mxu0 %v1570
        %2570 = vmatpush.msra.mxu0 %v1566
        %2571 = vmatmul.f32.gmra.mxu0 %v1551
        %v2572 = vpop.f32.mrf.mxu0
        %v2573 = vadd.f32 0.0, %v2572
        %2574 = vdwg.mxu0
        %2575 = vmatpush.msra.mxu0 %v1690
        %2576 = vmatpush.msra.mxu0 %v1686
        %2577 = vmatpush.msra.mxu0 %v1682
        %2578 = vmatpush.msra.mxu0 %v1678
        %2579 = vmatpush.msra.mxu0 %v1674
        %2580 = vmatpush.msra.mxu0 %v1670
        %2581 = vmatpush.msra.mxu0 %v1666
        %2582 = vmatpush.msra.mxu0 %v1662
        %2583 = vmatpush.msra.mxu0 %v1658
        %2584 = vmatpush.msra.mxu0 %v1654
        %2585 = vmatpush.msra.mxu0 %v1650
        %2586 = vmatpush.msra.mxu0 %v1646
        %2587 = vmatpush.msra.mxu0 %v1642
        %2588 = vmatpush.msra.mxu0 %v1638
        %2589 = vmatpush.msra.mxu0 %v1634
        %2590 = vmatpush.msra.mxu0 %v1630
        %2591 = vmatmul.f32.gmra.mxu0 %v1552
        %v2592 = vpop.f32.mrf.mxu0
        %v2593 = vadd.f32 %v2573, %v2592
        %2594 = vdwg.mxu0
        %2595 = vmatpush.msra.mxu0 %v1754
        %2596 = vmatpush.msra.mxu0 %v1750
        %2597 = vmatpush.msra.mxu0 %v1746
        %2598 = vmatpush.msra.mxu0 %v1742
        %2599 = vmatpush.msra.mxu0 %v1738
        %2600 = vmatpush.msra.mxu0 %v1734
        %2601 = vmatpush.msra.mxu0 %v1730
        %2602 = vmatpush.msra.mxu0 %v1726
        %2603 = vmatpush.msra.mxu0 %v1722
        %2604 = vmatpush.msra.mxu0 %v1718
        %2605 = vmatpush.msra.mxu0 %v1714
        %2606 = vmatpush.msra.mxu0 %v1710
        %2607 = vmatpush.msra.mxu0 %v1706
        %2608 = vmatpush.msra.mxu0 %v1702
        %2609 = vmatpush.msra.mxu0 %v1698
        %2610 = vmatpush.msra.mxu0 %v1694
        %2611 = vmatmul.f32.gmra.mxu0 %v1553
        %v2612 = vpop.f32.mrf.mxu0
        %v2613 = vadd.f32 %v2593, %v2612
        %2614 = vdwg.mxu0
        %2615 = vmatpush.msra.mxu0 %v1818
        %2616 = vmatpush.msra.mxu0 %v1814
        %2617 = vmatpush.msra.mxu0 %v1810
        %2618 = vmatpush.msra.mxu0 %v1806
        %2619 = vmatpush.msra.mxu0 %v1802
        %2620 = vmatpush.msra.mxu0 %v1798
        %2621 = vmatpush.msra.mxu0 %v1794
        %2622 = vmatpush.msra.mxu0 %v1790
        %2623 = vmatpush.msra.mxu0 %v1786
        %2624 = vmatpush.msra.mxu0 %v1782
        %2625 = vmatpush.msra.mxu0 %v1778
        %2626 = vmatpush.msra.mxu0 %v1774
        %2627 = vmatpush.msra.mxu0 %v1770
        %2628 = vmatpush.msra.mxu0 %v1766
        %2629 = vmatpush.msra.mxu0 %v1762
        %2630 = vmatpush.msra.mxu0 %v1758
        %2631 = vmatmul.f32.gmra.mxu0 %v1554
        %v2632 = vpop.f32.mrf.mxu0
        %v2633 = vadd.f32 %v2613, %v2632
        %2634 = vdwg.mxu0
        %2635 = vmatpush.msra.mxu0 %v1882
        %2636 = vmatpush.msra.mxu0 %v1878
        %2637 = vmatpush.msra.mxu0 %v1874
        %2638 = vmatpush.msra.mxu0 %v1870
        %2639 = vmatpush.msra.mxu0 %v1866
        %2640 = vmatpush.msra.mxu0 %v1862
        %2641 = vmatpush.msra.mxu0 %v1858
        %2642 = vmatpush.msra.mxu0 %v1854
        %2643 = vmatpush.msra.mxu0 %v1850
        %2644 = vmatpush.msra.mxu0 %v1846
        %2645 = vmatpush.msra.mxu0 %v1842
        %2646 = vmatpush.msra.mxu0 %v1838
        %2647 = vmatpush.msra.mxu0 %v1834
        %2648 = vmatpush.msra.mxu0 %v1830
        %2649 = vmatpush.msra.mxu0 %v1826
        %2650 = vmatpush.msra.mxu0 %v1822
        %2651 = vmatmul.f32.gmra.mxu0 %v1555
        %v2652 = vpop.f32.mrf.mxu0
        %v2653 = vadd.f32 %v2633, %v2652
        %2654 = vdwg.mxu0
        %2655 = vmatpush.msra.mxu0 %v1946
        %2656 = vmatpush.msra.mxu0 %v1942
        %2657 = vmatpush.msra.mxu0 %v1938
        %2658 = vmatpush.msra.mxu0 %v1934
        %2659 = vmatpush.msra.mxu0 %v1930
        %2660 = vmatpush.msra.mxu0 %v1926
        %2661 = vmatpush.msra.mxu0 %v1922
        %2662 = vmatpush.msra.mxu0 %v1918
        %2663 = vmatpush.msra.mxu0 %v1914
        %2664 = vmatpush.msra.mxu0 %v1910
        %2665 = vmatpush.msra.mxu0 %v1906
        %2666 = vmatpush.msra.mxu0 %v1902
        %2667 = vmatpush.msra.mxu0 %v1898
        %2668 = vmatpush.msra.mxu0 %v1894
        %2669 = vmatpush.msra.mxu0 %v1890
        %2670 = vmatpush.msra.mxu0 %v1886
        %2671 = vmatmul.f32.gmra.mxu0 %v1556
        %v2672 = vpop.f32.mrf.mxu0
        %v2673 = vadd.f32 %v2653, %v2672
        %2674 = vdwg.mxu0
        %2675 = vmatpush.msra.mxu0 %v2010
        %2676 = vmatpush.msra.mxu0 %v2006
        %2677 = vmatpush.msra.mxu0 %v2002
        %2678 = vmatpush.msra.mxu0 %v1998
        %2679 = vmatpush.msra.mxu0 %v1994
        %2680 = vmatpush.msra.mxu0 %v1990
        %2681 = vmatpush.msra.mxu0 %v1986
        %2682 = vmatpush.msra.mxu0 %v1982
        %2683 = vmatpush.msra.mxu0 %v1978
        %2684 = vmatpush.msra.mxu0 %v1974
        %2685 = vmatpush.msra.mxu0 %v1970
        %2686 = vmatpush.msra.mxu0 %v1966
        %2687 = vmatpush.msra.mxu0 %v1962
        %2688 = vmatpush.msra.mxu0 %v1958
        %2689 = vmatpush.msra.mxu0 %v1954
        %2690 = vmatpush.msra.mxu0 %v1950
        %2691 = vmatmul.f32.gmra.mxu0 %v1557
        %v2692 = vpop.f32.mrf.mxu0
        %v2693 = vadd.f32 %v2673, %v2692
        %2694 = vdwg.mxu0
        %2695 = vmatpush.msra.mxu0 %v2074
        %2696 = vmatpush.msra.mxu0 %v2070
        %2697 = vmatpush.msra.mxu0 %v2066
        %2698 = vmatpush.msra.mxu0 %v2062
        %2699 = vmatpush.msra.mxu0 %v2058
        %2700 = vmatpush.msra.mxu0 %v2054
        %2701 = vmatpush.msra.mxu0 %v2050
        %2702 = vmatpush.msra.mxu0 %v2046
        %2703 = vmatpush.msra.mxu0 %v2042
        %2704 = vmatpush.msra.mxu0 %v2038
        %2705 = vmatpush.msra.mxu0 %v2034
        %2706 = vmatpush.msra.mxu0 %v2030
        %2707 = vmatpush.msra.mxu0 %v2026
        %2708 = vmatpush.msra.mxu0 %v2022
        %2709 = vmatpush.msra.mxu0 %v2018
        %2710 = vmatpush.msra.mxu0 %v2014
        %2711 = vmatmul.f32.gmra.mxu0 %v1558
        %v2712 = vpop.f32.mrf.mxu0
        %v2713 = vadd.f32 %v2693, %v2712
        %2714 = vdwg.mxu0
        %v2715 = vadd.f32 %v1559, %v2233
        %v2716 = vadd.f32 %v1560, %v2393
        %v2717 = vadd.f32 %v1561, %v2553
        %v2718 = vadd.f32 %v1562, %v2713
        %2719 = vst [vmem:[#allocation2] sm:$0xff] %v2715
        %2720 = vst [vmem:[#allocation2 + $0x8] sm:$0xff] %v2716
        %2721 = vst [vmem:[#allocation2 + $0x10] sm:$0xff] %v2717
        %2722 = vst [vmem:[#allocation2 + $0x18] sm:$0xff] %v2718
        %p2723 = scmp.eq.s32.totalorder %s29, 3
        // Predicated region
        $region65: #{tpu_custom_call.1} parent=39 // pred_check
          %p2724 = pneg %p2723
        $region66: #{tpu_custom_call.1} parent=39 // pred_check_branch
          %2726 = sbr.rel (%p2724) target = $region68
        $region67: #{tpu_custom_call.1} parent=39 // pred_region
          %v2727 = vld [vmem:[#allocation2] sm:$0xff]
          %v2728 = vld [vmem:[#allocation2 + $0x8] sm:$0xff]
          %v2729 = vld [vmem:[#allocation2 + $0x10] sm:$0xff]
          %v2730 = vld [vmem:[#allocation2 + $0x18] sm:$0xff]
          %v2731 = vld [vmem:[#allocation11] sm:$0xf]
          %v2733 = vperm.slane %v2731, 0
          %v2734 = vperm.slane %v2731, 1
          %v2735 = vperm.slane %v2731, 2
          %v2736 = vperm.slane %v2731, 3
          %v2741 = vadd.f32 %v2727, %v2733
          %v2742 = vadd.f32 %v2728, %v2734
          %v2743 = vadd.f32 %v2729, %v2735
          %v2744 = vadd.f32 %v2730, %v2736
          %2745 = vst [vmem:[#allocation12] sm:$0xff] %v2741
          %2746 = vst [vmem:[#allocation12 + $0x8] sm:$0xff] %v2742
          %2747 = vst [vmem:[#allocation12 + $0x10] sm:$0xff] %v2743
          %2748 = vst [vmem:[#allocation12 + $0x18] sm:$0xff] %v2744
        $region68: #{tpu_custom_call.1} parent=39 // pred_fallthru
          _
        // Predicated region
        $region69: #{tpu_custom_call.1} parent=39 // pred_check
          %p2749 = pneg %p179
        $region70: #{tpu_custom_call.1} parent=39 // pred_check_branch
          %2751 = sbr.rel (%p2749) target = $region72
        $region71: #{tpu_custom_call.1} parent=39 // pred_region
          %2753 = vsyncadd [#allocation5], 0
          %s2754 = smul.addr %s28, 4
          %s2755 = smul.addr %s2754, 8
          %s2756 = scalar_lea.hbm %s5, %s2755
          %s2758 = sshll.u32 [#allocation12], 4
          %s2759 = int_to_ptr.vmem [resolvable:$true] %s2758
          %s2760 = sshll.u32 %s2756, 4
          %s2761 = int_to_ptr.hbm [resolvable:$true] %s2760
          %2763 = dma.vmem_to_hbm [thread:$0]  %s2759, 512, %s2761, [#allocation5]
        $region72: #{tpu_custom_call.1} parent=39 // pred_fallthru
          _
        // Predicated region
        $region73: #{tpu_custom_call.1} parent=39 // pred_check
          %p2764 = pneg %p179
        $region74: #{tpu_custom_call.1} parent=39 // pred_check_branch
          %2766 = sbr.rel (%p2764) target = $region76
        $region75: #{tpu_custom_call.1} parent=39 // pred_region
          %2768 = dma.done [#allocation5], 512
        $region76: #{tpu_custom_call.1} parent=39 // pred_fallthru
          _
      $region40: #{tpu_custom_call.1} parent=5 // pred_fallthru
        _
      %p2769 = scmp.le.s32.totalorder 2, %s19
      // Predicated region
      $region77: #{tpu_custom_call.1} parent=5 // pred_check
        %p2770 = pneg %p2769
      $region78: #{tpu_custom_call.1} parent=5 // pred_check_branch
        %2772 = sbr.rel (%p2770) target = $region80
      $region79: #{tpu_custom_call.1} parent=5 // pred_region
        %s2773 = ssub.s32 %s19, 2
      $region80: #{tpu_custom_call.1} parent=5 // pred_fallthru
        _
    $region6: #{tpu_custom_call.1} parent=1 // loop_footer
      %s23 = sadd.s32 1, %s19
    $region7: #{tpu_custom_call.1} parent=1 // loop_footer_branch
      %18 = sbr.rel target = $region3
    $region8: #{tpu_custom_call.1} parent=1 // loop_exit
      _
    %2774 = vsyncpa [#allocation4], 1
    %s2775 = scalar_lea.sflag [#allocation4], 1
    %2776 = vsyncpa %s2775, 1
    %2777 = vsyncpa [#allocation7], 1
    %s2778 = scalar_lea.sflag [#allocation7], 1
    %2779 = vsyncpa %s2778, 1
    %2780 = vsyncpa [#allocation10], 1
    %s2781 = scalar_lea.sflag [#allocation10], 1
    %2782 = vsyncpa %s2781, 1
    %2783 = vsyncpa [#allocation5], 1
    %s2784 = scalar_lea.sflag [#allocation5], 1
    %2785 = vsyncpa %s2784, 1

</llo_original>
